<compile_context>
chip_gen: v7x
topology: tpu7x:2x2x1
jax: 0.10.0
libtpu: 0.0.40
codegen_flags: <defaults>
</compile_context>

<pallas_src>
import functools

import numpy as np
import jax
import jax.numpy as jnp
from jax.experimental import pallas as pl
from jax.experimental.pallas import tpu as pltpu


# ----------------------------------------------------------------------------
# Kernel: grid = (row_tile [parallel], pred_step [arbitrary/accumulated])
# ----------------------------------------------------------------------------
def _infonce_kernel(c_ref, w_ref, tgt_ref, out_ref, *,
                    wb, n_max, tile_rows, neg_samples, pred_steps):
    """
    c_ref   : (tile_rows, C)             bf16  context rows of this row tile
    w_ref   : (1, C, C)                  bf16  W_k (conv weight, (out, in))
    tgt_ref : (1, 1+neg, tile_rows, C)   f32   class 0 = positive z rows,
                                               classes 1.. = gathered negatives
    out_ref : (1, 8, 128)                f32   per-tile partial loss
                                               (broadcast accumulator block)
    """
    t = pl.program_id(0)              # row tile   (parallel)
    k = pl.program_id(1)              # pred step  (arbitrary, accumulated)

    @pl.when(k == 0)
    def _():
        out_ref[...] = jnp.zeros_like(out_ref)

    # Valid rows for this step / this tile (later steps use fewer rows).
    n_valid = n_max - k * wb                      # rows valid for step k
    local_valid = n_valid - t * tile_rows         # ... inside this row tile

    # 1x1 conv folded onto the context side: c.(W_k z) == (c @ W_k).z
    # One small MXU matmul, bf16 operands, f32 accumulation.
    cw = jnp.dot(c_ref[...], w_ref[0],
                 preferred_element_type=jnp.float32)          # (tile, C) f32

    # Per-row logits: class 0 = positive, 1..neg = negatives (VPU dots).
    scores = [jnp.sum(cw * tgt_ref[0, i], axis=-1, keepdims=True)
              for i in range(1 + neg_samples)]                # each (tile, 1)

    # Stable softmax prob of class 0 without a lane-sparse concat / axis-1
    # reduce: maximum tree + running sum of exp, EUP reciprocal.
    m = scores[0]
    for s in scores[1:]:
        m = jnp.maximum(m, s)
    exps = [jnp.exp(s - m) for s in scores]
    denom = exps[0]
    for e in exps[1:]:
        denom = denom + e
    p0 = exps[0] * pl.reciprocal(denom, approx=True)
    logp = jnp.log(p0 + 1e-11)                                # ExpNLLLoss eps

    # Mask padded / out-of-step rows, accumulate -mean(logp) / pred_steps.
    rix = jax.lax.broadcasted_iota(jnp.int32, logp.shape, 0)
    tile_sum = jnp.sum(jnp.where(rix < local_valid, logp, 0.0))
    norm = (n_valid * pred_steps).astype(jnp.float32)
    out_ref[...] += -tile_sum / norm


# ----------------------------------------------------------------------------
# Wrapper: full InfoNCE_Loss.forward in one pallas_call
# ----------------------------------------------------------------------------
def infonce_loss_forward(z, c, w_list, rand_idx_list, neg_samples, skip_step=1):
    """z, c: (B, C, H, W) float32; w_list[k]: (C, C) conv weight (out, in);
    rand_idx_list[k]: (neg_samples, n_k) int32 negative row indices for step k."""
    B, C, H, W = z.shape
    pred_steps = len(w_list)
    wb = W * B
    R = H * wb
    n_max = (H - 1 - skip_step) * wb              # row count of the largest step

    # One hoisted layout change: NCHW -> (h, w, b) rows x C
    # (matches .permute(2, 3, 0, 1).contiguous().view(-1, C)).
    z_t = jnp.transpose(z, (2, 3, 0, 1)).reshape(R, C)
    c_t = jnp.transpose(c[:, :, :H - 1 - skip_step, :], (2, 3, 0, 1)).reshape(n_max, C)

    # Per-step target rows: class 0 = positive z row, classes 1.. = gathered
    # negative z rows (cheap XLA gather in the wrapper -> no dynamic in-kernel
    # gather needed; gathering z before the conv is exact since the conv is
    # per-row linear).  Zero-padded to n_max rows; padded rows are masked.
    tgt_steps = []
    for kk in range(pred_steps):
        off = (kk + 1 + skip_step) * wb
        n_k = R - off
        z_win = z_t[off:off + n_k]                            # (n_k, C)
        z_neg = z_win[rand_idx_list[kk]]                      # (neg, n_k, C)
        t_k = jnp.concatenate([z_win[None], z_neg], axis=0)   # (1+neg, n_k, C)
        tgt_steps.append(jnp.pad(t_k, ((0, 0), (0, n_max - n_k), (0, 0))))
    tgt = jnp.stack(tgt_steps, axis=0)                        # (steps, 1+neg, n_max, C)

    # MXU operands in bf16 (f32 accumulation inside the kernel).
    cb = c_t.astype(jnp.bfloat16)
    w_all = jnp.stack(w_list, axis=0).astype(jnp.bfloat16)    # (steps, C, C)

    # Row tiles -> leading "parallel" grid axis (second TensorCore on v7x).
    num_tiles = 2 if (n_max % 2 == 0 and (n_max // 2) % 8 == 0) else 1
    tile_rows = n_max // num_tiles

    kernel = functools.partial(
        _infonce_kernel, wb=wb, n_max=n_max, tile_rows=tile_rows,
        neg_samples=neg_samples, pred_steps=pred_steps)

    partial = pl.pallas_call(
        kernel,
        out_shape=jax.ShapeDtypeStruct((num_tiles, 8, 128), jnp.float32),
        grid_spec=pltpu.PrefetchScalarGridSpec(
            num_scalar_prefetch=0,
            grid=(num_tiles, pred_steps),
            in_specs=[
                pl.BlockSpec((tile_rows, C), lambda t, k: (t, 0)),        # context rows
                pl.BlockSpec((1, C, C), lambda t, k: (k, 0, 0)),          # W_k
                pl.BlockSpec((1, 1 + neg_samples, tile_rows, C),
                             lambda t, k: (k, 0, t, 0)),                  # pos + neg z rows
            ],
            out_specs=pl.BlockSpec((1, 8, 128), lambda t, k: (t, 0, 0)),
        ),
        compiler_params=pltpu.CompilerParams(
            dimension_semantics=("parallel", "arbitrary")),
    )(cb, w_all, tgt)

    return jnp.sum(partial[:, 0, 0])


# ----------------------------------------------------------------------------
# Pure-JAX reference (same math, same negative indices, f32 HIGHEST)
# ----------------------------------------------------------------------------
def reference_forward(z, c, w_list, rand_idx_list, neg_samples, skip_step=1):
    B, C, H, W = z.shape
    pred_steps = len(w_list)
    total = jnp.float32(0.0)
    for k in range(1, pred_steps + 1):
        hp = H - (k + skip_step)
        z_flat = jnp.transpose(z[:, :, k + skip_step:, :], (2, 3, 0, 1)).reshape(-1, C)
        c_flat = jnp.transpose(c[:, :, :hp, :], (2, 3, 0, 1)).reshape(-1, C)
        ztwk = jnp.dot(z_flat, w_list[k - 1].T, precision=jax.lax.Precision.HIGHEST)
        negs = ztwk[rand_idx_list[k - 1]]                    # (neg, n, C)
        pos = jnp.sum(c_flat * ztwk, axis=-1)                # (n,)
        negd = jnp.einsum("nc,jnc->nj", c_flat, negs,
                          precision=jax.lax.Precision.HIGHEST)
        logits = jnp.concatenate([pos[:, None], negd], axis=1)
        p = jax.nn.softmax(logits, axis=1)
        total = total + (-jnp.mean(jnp.log(p[:, 0] + 1e-11)))
    return total / pred_steps


if __name__ == "__main__":
    key = jax.random.PRNGKey(0)
    B, C, H, W = 2, 32, 16, 16
    pred_steps, neg_samples, skip_step = 2, 4, 1

    kz, kc, kw, kidx = jax.random.split(key, 4)
    z = jax.random.normal(kz, (B, C, H, W), jnp.float32)
    c = jax.random.normal(kc, (B, C, H, W), jnp.float32)

    # deterministic Conv2d(C, C, 1, bias=False) weights (kaiming-uniform-like)
    bound = 1.0 / float(np.sqrt(C))
    w_list = [
        jax.random.uniform(jax.random.fold_in(kw, i), (C, C), jnp.float32,
                           minval=-bound, maxval=bound)
        for i in range(pred_steps)
    ]

    # deterministic replacement for the module's internal torch.randint
    # negative sampling (torch RNG is untranslatable; indices passed in).
    rand_idx_list = []
    for k in range(1, pred_steps + 1):
        n = (H - (k + skip_step)) * W * B
        kidx, sub = jax.random.split(kidx)
        rand_idx_list.append(
            jax.random.randint(sub, (neg_samples, n), 0, n, dtype=jnp.int32))

    loss = infonce_loss_forward(z, c, w_list, rand_idx_list, neg_samples, skip_step)
    loss = jax.block_until_ready(loss)

    ref = reference_forward(z, c, w_list, rand_idx_list, neg_samples, skip_step)
    # bf16 MXU operands + approx reciprocal in the kernel vs f32 HIGHEST reference.
    np.testing.assert_allclose(np.asarray(loss), np.asarray(ref), rtol=1e-2, atol=1e-3)

    print("KERNEL_OK")
</pallas_src>

<mosaic_0001>
module attributes {stable_mosaic.version = 11 : i64} {
  func.func @_infonce_kernel(%arg0: i32, %arg1: i32, %arg2: memref<224x32xbf16, #tpu.memory_space<vmem>>, %arg3: memref<1x32x32xbf16, #tpu.memory_space<vmem>>, %arg4: memref<1x5x224x32xf32, #tpu.memory_space<vmem>>, %arg5: memref<1x8x128xf32, #tpu.memory_space<vmem>>) attributes {dimension_semantics = [#tpu.dimension_semantics<parallel>, #tpu.dimension_semantics<arbitrary>], iteration_bounds = array<i64: 2, 2>, scalar_prefetch = 0 : i64, scratch_operands = 0 : i64, tpu.core_type = #tpu.core_type<tc>, window_params = [{transform_indices = @transform_0, window_bounds = array<i64: 224, 32>}, {transform_indices = @transform_1, window_bounds = array<i64: 1, 32, 32>}, {transform_indices = @transform_2, window_bounds = array<i64: 1, 5, 224, 32>}, {transform_indices = @transform_3, window_bounds = array<i64: 1, 8, 128>}]} {
    %c0_i32 = arith.constant 0 : i32
    %0 = arith.cmpi eq, %arg1, %c0_i32 : i32
    %1 = arith.extui %0 : i1 to i32
    %c0_i32_0 = arith.constant 0 : i32
    %2 = arith.cmpi ne, %1, %c0_i32_0 : i32
    scf.if %2 {
      %cst_36 = arith.constant 0.000000e+00 : f32
      %76 = vector.broadcast %cst_36 : f32 to vector<1x8x128xf32>
      %c0_37 = arith.constant 0 : index
      %c0_38 = arith.constant 0 : index
      %c0_39 = arith.constant 0 : index
      %77 = vector.load %arg5[%c0_37, %c0_38, %c0_39] : memref<1x8x128xf32, #tpu.memory_space<vmem>>, vector<1x8x128xf32>
      tpu.vector_store %arg5[%c0_37, %c0_38, %c0_39], %76 {strides = array<i32>} : memref<1x8x128xf32, #tpu.memory_space<vmem>>, vector<1x8x128xf32>,
    } else {
    }
    %c32_i32 = arith.constant 32 : i32
    %3 = arith.muli %arg1, %c32_i32 : i32
    %c448_i32 = arith.constant 448 : i32
    %4 = arith.subi %c448_i32, %3 : i32
    %c224_i32 = arith.constant 224 : i32
    %5 = arith.muli %arg0, %c224_i32 : i32
    %6 = arith.subi %4, %5 : i32
    %c0 = arith.constant 0 : index
    %c0_1 = arith.constant 0 : index
    %7 = vector.load %arg2[%c0, %c0_1] : memref<224x32xbf16, #tpu.memory_space<vmem>>, vector<224x32xbf16>
    %c0_2 = arith.constant 0 : index
    %c0_3 = arith.constant 0 : index
    %c0_4 = arith.constant 0 : index
    %8 = vector.load %arg3[%c0_2, %c0_3, %c0_4] : memref<1x32x32xbf16, #tpu.memory_space<vmem>>, vector<1x32x32xbf16>
    %9 = vector.shape_cast %8 : vector<1x32x32xbf16> to vector<32x32xbf16>
    %cst = arith.constant dense<0.000000e+00> : vector<224x32xf32>
    %10 = tpu.matmul %7, %9, %cst {dimension_numbers = #tpu.dot_dimension_numbers<[1], [0], [0], [1], [0, 0, 1, 1], [], []>} : vector<224x32xbf16>, vector<32x32xbf16>, vector<224x32xf32> -> vector<224x32xf32>
    %c0_5 = arith.constant 0 : index
    %c0_6 = arith.constant 0 : index
    %c0_7 = arith.constant 0 : index
    %c0_8 = arith.constant 0 : index
    %11 = vector.load %arg4[%c0_5, %c0_6, %c0_7, %c0_8] : memref<1x5x224x32xf32, #tpu.memory_space<vmem>>, vector<1x1x224x32xf32>
    %12 = vector.shape_cast %11 : vector<1x1x224x32xf32> to vector<224x32xf32>
    %13 = arith.mulf %10, %12 : vector<224x32xf32>
    %cst_9 = arith.constant dense<0.000000e+00> : vector<224xf32>
    %14 = vector.multi_reduction <add>, %13, %cst_9 [1] : vector<224x32xf32> to vector<224xf32>
    %15 = vector.shape_cast %14 : vector<224xf32> to vector<224x1xf32>
    %c0_10 = arith.constant 0 : index
    %c1 = arith.constant 1 : index
    %c0_11 = arith.constant 0 : index
    %c0_12 = arith.constant 0 : index
    %16 = vector.load %arg4[%c0_10, %c1, %c0_11, %c0_12] : memref<1x5x224x32xf32, #tpu.memory_space<vmem>>, vector<1x1x224x32xf32>
    %17 = vector.shape_cast %16 : vector<1x1x224x32xf32> to vector<224x32xf32>
    %18 = arith.mulf %10, %17 : vector<224x32xf32>
    %cst_13 = arith.constant dense<0.000000e+00> : vector<224xf32>
    %19 = vector.multi_reduction <add>, %18, %cst_13 [1] : vector<224x32xf32> to vector<224xf32>
    %20 = vector.shape_cast %19 : vector<224xf32> to vector<224x1xf32>
    %c0_14 = arith.constant 0 : index
    %c2 = arith.constant 2 : index
    %c0_15 = arith.constant 0 : index
    %c0_16 = arith.constant 0 : index
    %21 = vector.load %arg4[%c0_14, %c2, %c0_15, %c0_16] : memref<1x5x224x32xf32, #tpu.memory_space<vmem>>, vector<1x1x224x32xf32>
    %22 = vector.shape_cast %21 : vector<1x1x224x32xf32> to vector<224x32xf32>
    %23 = arith.mulf %10, %22 : vector<224x32xf32>
    %cst_17 = arith.constant dense<0.000000e+00> : vector<224xf32>
    %24 = vector.multi_reduction <add>, %23, %cst_17 [1] : vector<224x32xf32> to vector<224xf32>
    %25 = vector.shape_cast %24 : vector<224xf32> to vector<224x1xf32>
    %c0_18 = arith.constant 0 : index
    %c3 = arith.constant 3 : index
    %c0_19 = arith.constant 0 : index
    %c0_20 = arith.constant 0 : index
    %26 = vector.load %arg4[%c0_18, %c3, %c0_19, %c0_20] : memref<1x5x224x32xf32, #tpu.memory_space<vmem>>, vector<1x1x224x32xf32>
    %27 = vector.shape_cast %26 : vector<1x1x224x32xf32> to vector<224x32xf32>
    %28 = arith.mulf %10, %27 : vector<224x32xf32>
    %cst_21 = arith.constant dense<0.000000e+00> : vector<224xf32>
    %29 = vector.multi_reduction <add>, %28, %cst_21 [1] : vector<224x32xf32> to vector<224xf32>
    %30 = vector.shape_cast %29 : vector<224xf32> to vector<224x1xf32>
    %c0_22 = arith.constant 0 : index
    %c4 = arith.constant 4 : index
    %c0_23 = arith.constant 0 : index
    %c0_24 = arith.constant 0 : index
    %31 = vector.load %arg4[%c0_22, %c4, %c0_23, %c0_24] : memref<1x5x224x32xf32, #tpu.memory_space<vmem>>, vector<1x1x224x32xf32>
    %32 = vector.shape_cast %31 : vector<1x1x224x32xf32> to vector<224x32xf32>
    %33 = arith.mulf %10, %32 : vector<224x32xf32>
    %cst_25 = arith.constant dense<0.000000e+00> : vector<224xf32>
    %34 = vector.multi_reduction <add>, %33, %cst_25 [1] : vector<224x32xf32> to vector<224xf32>
    %35 = vector.shape_cast %34 : vector<224xf32> to vector<224x1xf32>
    %36 = arith.maximumf %15, %20 : vector<224x1xf32>
    %37 = arith.maximumf %36, %25 : vector<224x1xf32>
    %38 = arith.maximumf %37, %30 : vector<224x1xf32>
    %39 = arith.maximumf %38, %35 : vector<224x1xf32>
    %40 = arith.subf %15, %39 : vector<224x1xf32>
    %41 = math.exp %40 : vector<224x1xf32>
    %42 = arith.subf %20, %39 : vector<224x1xf32>
    %43 = math.exp %42 : vector<224x1xf32>
    %44 = arith.subf %25, %39 : vector<224x1xf32>
    %45 = math.exp %44 : vector<224x1xf32>
    %46 = arith.subf %30, %39 : vector<224x1xf32>
    %47 = math.exp %46 : vector<224x1xf32>
    %48 = arith.subf %35, %39 : vector<224x1xf32>
    %49 = math.exp %48 : vector<224x1xf32>
    %50 = arith.addf %41, %43 : vector<224x1xf32>
    %51 = arith.addf %50, %45 : vector<224x1xf32>
    %52 = arith.addf %51, %47 : vector<224x1xf32>
    %53 = arith.addf %52, %49 : vector<224x1xf32>
    %54 = tpu.reciprocal %53 {approx = true} : vector<224x1xf32> -> vector<224x1xf32>
    %55 = arith.mulf %41, %54 : vector<224x1xf32>
    %cst_26 = arith.constant 9.99999996E-12 : f32
    %56 = vector.broadcast %cst_26 : f32 to vector<224x1xf32>
    %57 = arith.addf %55, %56 : vector<224x1xf32>
    %58 = math.log %57 : vector<224x1xf32>
    %59 = tpu.iota {dimensions = array<i32: 0>} : vector<224x1xi32>
    %60 = vector.broadcast %6 : i32 to vector<224x1xi32>
    %61 = arith.cmpi slt, %59, %60 : vector<224x1xi32>
    %cst_27 = arith.constant 0.000000e+00 : f32
    %62 = vector.broadcast %cst_27 : f32 to vector<224x1xf32>
    %63 = arith.select %61, %58, %62 : vector<224x1xi1>, vector<224x1xf32>
    %64 = vector.shape_cast %63 : vector<224x1xf32> to vector<1x224x1xf32>
    %cst_28 = arith.constant dense<0.000000e+00> : vector<1xf32>
    %65 = vector.multi_reduction <add>, %64, %cst_28 [1, 2] : vector<1x224x1xf32> to vector<1xf32>
    %66 = vector.shape_cast %65 : vector<1xf32> to vector<1x1x1xf32>
    %67 = vector.extract %66[0, 0, 0] : f32 from vector<1x1x1xf32>
    %c2_i32 = arith.constant 2 : i32
    %68 = arith.muli %4, %c2_i32 : i32
    %69 = arith.sitofp %68 : i32 to f32
    %c0_29 = arith.constant 0 : index
    %c0_30 = arith.constant 0 : index
    %c0_31 = arith.constant 0 : index
    %70 = vector.load %arg5[%c0_29, %c0_30, %c0_31] : memref<1x8x128xf32, #tpu.memory_space<vmem>>, vector<1x8x128xf32>
    %cst_32 = arith.constant 0.000000e+00 : f32
    %71 = arith.subf %cst_32, %67 : f32
    %72 = arith.divf %71, %69 : f32
    %73 = vector.broadcast %72 : f32 to vector<1x8x128xf32>
    %74 = arith.addf %70, %73 : vector<1x8x128xf32>
    %c0_33 = arith.constant 0 : index
    %c0_34 = arith.constant 0 : index
    %c0_35 = arith.constant 0 : index
    %75 = vector.load %arg5[%c0_33, %c0_34, %c0_35] : memref<1x8x128xf32, #tpu.memory_space<vmem>>, vector<1x8x128xf32>
    tpu.vector_store %arg5[%c0_33, %c0_34, %c0_35], %74 {strides = array<i32>} : memref<1x8x128xf32, #tpu.memory_space<vmem>>, vector<1x8x128xf32>,
    return
  }
  func.func @transform_0(%arg0: i32, %arg1: i32) -> (i32, i32) {
    %c0_i32 = arith.constant 0 : i32
    %c0_i32_0 = arith.constant 0 : i32
    return %arg0, %c0_i32 : i32, i32
  }
  func.func @transform_1(%arg0: i32, %arg1: i32) -> (i32, i32, i32) {
    %c0_i32 = arith.constant 0 : i32
    %c0_i32_0 = arith.constant 0 : i32
    %c0_i32_1 = arith.constant 0 : i32
    return %arg1, %c0_i32, %c0_i32_0 : i32, i32, i32
  }
  func.func @transform_2(%arg0: i32, %arg1: i32) -> (i32, i32, i32, i32) {
    %c0_i32 = arith.constant 0 : i32
    %c0_i32_0 = arith.constant 0 : i32
    %c0_i32_1 = arith.constant 0 : i32
    return %arg1, %c0_i32, %arg0, %c0_i32_0 : i32, i32, i32, i32
  }
  func.func @transform_3(%arg0: i32, %arg1: i32) -> (i32, i32, i32) {
    %c0_i32 = arith.constant 0 : i32
    %c0_i32_0 = arith.constant 0 : i32
    %c0_i32_1 = arith.constant 0 : i32
    return %arg0, %c0_i32, %c0_i32_0 : i32, i32, i32
  }
}

</mosaic_0001>

<llo_original>
// kernel: tpu_custom_call.1
$region0: #{tpu_custom_call.1}
  #allocation0 [shape = 'u32[]', space=smem, size = 0x4, offset = 0x4, fixed_abs, tag = 'smem constant byte address 0x4 - core index']
  #allocation1 [shape = 'u32[144,128]{1,0:T(1,128)}', space=vmem, size = 0x12000, scoped, tag = 'internal scratch']
  %s0 = inlined_call_operand.vmem [shape: bf16[448,32], index: 0, kind: input, shape index: {}]
  %s1 = inlined_call_operand.vmem [shape: bf16[2,32,32], index: 1, kind: input, shape index: {}]
  %s2 = inlined_call_operand.vmem [shape: f32[2,5,448,32], index: 2, kind: input, shape index: {}]
  %s3 = inlined_call_operand.hbm [shape: f32[2,8,128], index: 3, kind: output, shape index: {}]
  %s4 = sld [smem:[#allocation0]]
  $region87: #{tpu_custom_call.1} parent=0
    _
  %s6 = ssub.s32 1, %s4
  %s7 = scalar_select 0, %s6, %s4
  $region1: #{tpu_custom_call.1} parent=0
    #allocation2 [shape = 'u8[1146880]{0}', space=vmem, size = 0x118000, scoped, tag = 'input window, operand 2']
    #allocation3 [shape = 'u8[8192]{0}', space=vmem, size = 0x2000, scoped, tag = 'output window, operand 0']
    #allocation4 [shape = 's32[2]{0}', space=sflag, size = 0x8, scoped, tag = 'scoped memory for tpu_custom_call.1']
    %8 = vsyncpa [#allocation4], 0
    %s9 = scalar_lea.sflag [#allocation4], 1
    %10 = vsyncpa %s9, 0
    loop: start=0, step=1, limit=6
    $region2: #{tpu_custom_call.1} parent=1 // loop_pre_header
      _
    $region3: #{tpu_custom_call.1} parent=1 // loop_header
      %s12 = sphi 0, %s16
      %p13 = scmp.ge.s32.totalorder %s12, 6
      %s19 = sphi 0, %s31
      %s20 = sphi 0, %s27
      %s21 = sphi 0, %s19
      %s22 = sphi 0, %s20
      %s23 = sphi 0, %s21
      %s24 = sphi 0, %s22
      %s34 = sphi 0, %s36
      %s37 = sphi 0, %s34
      %s38 = sphi 0, %s37
      %s54 = sphi 0, %s38
      %s60 = sphi 0, %s62
      %s63 = sphi 0, %s60
      %s64 = sphi 0, %s63
      %s80 = sphi 0, %s64
      %s88 = sphi 0, %s90
      %s91 = sphi 0, %s88
      %s92 = sphi 0, %s91
      %s108 = sphi 0, %s92
      %s114 = sphi 0, %s116
      %s117 = sphi 0, %s114
      %s118 = sphi 0, %s117
      %s134 = sphi 0, %s118
    $region4: #{tpu_custom_call.1} parent=1 // loop_header_branch
      %15 = sbr.rel (%p13) target = $region8
    $region5: #{tpu_custom_call.1} parent=1 // loop_body
      %s17 = ssub.s32 %s12, 1
      %s18 = ssub.s32 %s12, 2
      %s25 = sadd.s32 1, %s20
      %p26 = scmp.ge.s32.totalorder %s25, 2
      %s27 = scalar_select %p26, 0, %s25
      %s28 = sadd.s32 1, %s19
      %s29 = scalar_select %p26, %s28, %s19
      %p30 = scmp.ge.s32.totalorder %s29, 2
      %s31 = scalar_select %p30, 0, %s29
      %s32 = ssub.s32 %s19, %s31
      %p33 = scmp.eq.s32.totalorder %s32, 0
      %s35 = sadd.s32 %s34, 1
      %s36 = scalar_select %p33, %s34, %s35
      %p39 = pneg %p33
      %p40 = scmp.eq.s32.totalorder %s12, 3
      %p41 = por %p39, %p40
      %p42 = scmp.ne.s32.totalorder %s34, %s37
      %p43 = scmp.eq.s32.totalorder %s12, 0
      %p44 = por %p42, %p43
      %p45 = scmp.ne.s32.totalorder %s34, %s37
      %p46 = scmp.eq.s32.totalorder %s17, 3
      %p47 = por %p45, %p46
      %p48 = scmp.ne.s32.totalorder %s37, %s38
      %p49 = scmp.eq.s32.totalorder %s17, 0
      %p50 = por %p48, %p49
      %p51 = scmp.ne.s32.totalorder %s37, %s38
      %p52 = scmp.eq.s32.totalorder %s18, 3
      %p53 = por %p51, %p52
      %p55 = scmp.ne.s32.totalorder %s38, %s54
      %p56 = scmp.eq.s32.totalorder %s18, 0
      %p57 = por %p55, %p56
      %s58 = ssub.s32 %s20, %s27
      %p59 = scmp.eq.s32.totalorder %s58, 0
      %s61 = sadd.s32 %s60, 1
      %s62 = scalar_select %p59, %s60, %s61
      %p65 = pneg %p59
      %p66 = scmp.eq.s32.totalorder %s12, 3
      %p67 = por %p65, %p66
      %p68 = scmp.ne.s32.totalorder %s60, %s63
      %p69 = scmp.eq.s32.totalorder %s12, 0
      %p70 = por %p68, %p69
      %p71 = scmp.ne.s32.totalorder %s60, %s63
      %p72 = scmp.eq.s32.totalorder %s17, 3
      %p73 = por %p71, %p72
      %p74 = scmp.ne.s32.totalorder %s63, %s64
      %p75 = scmp.eq.s32.totalorder %s17, 0
      %p76 = por %p74, %p75
      %p77 = scmp.ne.s32.totalorder %s63, %s64
      %p78 = scmp.eq.s32.totalorder %s18, 3
      %p79 = por %p77, %p78
      %p81 = scmp.ne.s32.totalorder %s64, %s80
      %p82 = scmp.eq.s32.totalorder %s18, 0
      %p83 = por %p81, %p82
      %s84 = ssub.s32 %s20, %s27
      %s85 = ssub.s32 %s19, %s31
      %s86 = sor.u32 %s84, %s85
      %p87 = scmp.eq.s32.totalorder %s86, 0
      %s89 = sadd.s32 %s88, 1
      %s90 = scalar_select %p87, %s88, %s89
      %p93 = pneg %p87
      %p94 = scmp.eq.s32.totalorder %s12, 3
      %p95 = por %p93, %p94
      %p96 = scmp.ne.s32.totalorder %s88, %s91
      %p97 = scmp.eq.s32.totalorder %s12, 0
      %p98 = por %p96, %p97
      %p99 = scmp.ne.s32.totalorder %s88, %s91
      %p100 = scmp.eq.s32.totalorder %s17, 3
      %p101 = por %p99, %p100
      %p102 = scmp.ne.s32.totalorder %s91, %s92
      %p103 = scmp.eq.s32.totalorder %s17, 0
      %p104 = por %p102, %p103
      %p105 = scmp.ne.s32.totalorder %s91, %s92
      %p106 = scmp.eq.s32.totalorder %s18, 3
      %p107 = por %p105, %p106
      %p109 = scmp.ne.s32.totalorder %s92, %s108
      %p110 = scmp.eq.s32.totalorder %s18, 0
      %p111 = por %p109, %p110
      %s112 = ssub.s32 %s19, %s31
      %p113 = scmp.eq.s32.totalorder %s112, 0
      %s115 = sadd.s32 %s114, 1
      %s116 = scalar_select %p113, %s114, %s115
      %p119 = pneg %p113
      %p120 = scmp.eq.s32.totalorder %s12, 3
      %p121 = por %p119, %p120
      %p122 = scmp.ne.s32.totalorder %s114, %s117
      %p123 = scmp.eq.s32.totalorder %s12, 0
      %p124 = por %p122, %p123
      %p125 = scmp.ne.s32.totalorder %s114, %s117
      %p126 = scmp.eq.s32.totalorder %s17, 3
      %p127 = por %p125, %p126
      %p128 = scmp.ne.s32.totalorder %s117, %s118
      %p129 = scmp.eq.s32.totalorder %s17, 0
      %p130 = por %p128, %p129
      %p131 = scmp.ne.s32.totalorder %s117, %s118
      %p132 = scmp.eq.s32.totalorder %s18, 3
      %p133 = por %p131, %p132
      %p135 = scmp.ne.s32.totalorder %s118, %s134
      %p136 = scmp.eq.s32.totalorder %s18, 0
      %p137 = por %p135, %p136
      %p138 = scmp.le.s32.totalorder 1, %s12
      %p139 = scmp.lt.s32.totalorder %s12, 5
      %p140 = pnand %p138, %p139
      %p141 = pneg %p140
      // Predicated region
      $region9: #{tpu_custom_call.1} parent=5 // pred_check
        _
      $region10: #{tpu_custom_call.1} parent=5 // pred_check_branch
        %143 = sbr.rel (%p140) target = $region12
      $region11: #{tpu_custom_call.1} parent=5 // pred_region
        %s144 = ssub.s32 %s12, 1
      $region12: #{tpu_custom_call.1} parent=5 // pred_fallthru
        _
      %p145 = scmp.lt.s32.totalorder %s12, 4
      // Predicated region
      $region13: #{tpu_custom_call.1} parent=5 // pred_check
        %p146 = pneg %p145
      $region14: #{tpu_custom_call.1} parent=5 // pred_check_branch
        %148 = sbr.rel (%p146) target = $region16
      $region15: #{tpu_custom_call.1} parent=5 // pred_region
        // Predicated region
        $region17: #{tpu_custom_call.1} parent=15 // pred_check
          %p149 = pneg %p44
        $region18: #{tpu_custom_call.1} parent=15 // pred_check_branch
          %151 = sbr.rel (%p149) target = $region20
        $region19: #{tpu_custom_call.1} parent=15 // pred_region
          %s152 = smul.u32 28, %s19
          %p153 = scmp.lt.s32.totalorder %s152, 55
          %s154 = scalar_select %p153, %s152, 55
          %s155 = smul.addr %s154, 4
          %s156 = scalar_lea.vmem %s0, %s155
          %s157 = smul.u32 28, %s19
        $region20: #{tpu_custom_call.1} parent=15 // pred_fallthru
          _
        // Predicated region
        $region21: #{tpu_custom_call.1} parent=15 // pred_check
          %p158 = pneg %p70
        $region22: #{tpu_custom_call.1} parent=15 // pred_check_branch
          %160 = sbr.rel (%p158) target = $region24
        $region23: #{tpu_custom_call.1} parent=15 // pred_region
          %p161 = scmp.lt.s32.totalorder %s20, 1
          %s162 = scalar_select %p161, %s20, 1
          %s163 = smul.addr %s162, 4
          %s164 = smul.addr %s163, 4
          %s165 = scalar_lea.vmem %s1, %s164
        $region24: #{tpu_custom_call.1} parent=15 // pred_fallthru
          _
        // Predicated region
        $region25: #{tpu_custom_call.1} parent=15 // pred_check
          %p166 = pneg %p98
        $region26: #{tpu_custom_call.1} parent=15 // pred_check_branch
          %168 = sbr.rel (%p166) target = $region28
        $region27: #{tpu_custom_call.1} parent=15 // pred_region
          %s169 = sand.u32 %s88, 1
          %s170 = sand.u32 %s88, 1
          %s171 = smul.addr %s170, 1120
          %s172 = scalar_lea.vmem [#allocation2], %s171
          %s173 = smul.u32 28, %s19
          %s174 = smul.addr %s20, 280
          %s175 = sadd.s32 %s173, %s174
          %s176 = smul.addr %s175, 8
          %s177 = scalar_lea.vmem %s2, %s176
          // Predicated region
          $region29: #{tpu_custom_call.1} parent=27 // pred_check
            _
          $region30: #{tpu_custom_call.1} parent=27 // pred_check_branch
            %179 = sbr.rel (0) target = $region32
          $region31: #{tpu_custom_call.1} parent=27 // pred_region
            // Predicated region
            $region33: #{tpu_custom_call.1} parent=31 // pred_check
              _
            $region34: #{tpu_custom_call.1} parent=31 // pred_check_branch
              %181 = sbr.rel (0) target = $region36
            $region35: #{tpu_custom_call.1} parent=31 // pred_region
              // Predicated region
              $region48: #{tpu_custom_call.1} parent=35 // pred_check
                _
              $region49: #{tpu_custom_call.1} parent=35 // pred_check_branch
                %474 = sbr.rel (0) target = $region51
              $region50: #{tpu_custom_call.1} parent=35 // pred_region
                loop: start=0, step=1, limit=1
                $region52: #{tpu_custom_call.1} parent=50 // loop_pre_header
                  _
                $region53: #{tpu_custom_call.1} parent=50 // loop_header
                  %s476 = sphi 0, %s480
                  %p477 = scmp.ge.s32.totalorder %s476, 1
                  %s481 = sphi %s177, %s177
                  %s482 = sphi %s172, %s172
                $region54: #{tpu_custom_call.1} parent=50 // loop_header_branch
                  %479 = sbr.rel (%p477) target = $region58
                $region55: #{tpu_custom_call.1} parent=50 // loop_body
                  %v483 = vld [vmem:[%s481] sm:$0xff]
                  %484 = vst [vmem:[%s482] sm:$0xff] %v483
                  %v485 = vld [vmem:[%s481 + $0x8] sm:$0xff]
                  %486 = vst [vmem:[%s482 + $0x8] sm:$0xff] %v485
                  %v487 = vld [vmem:[%s481 + $0x10] sm:$0xff]
                  %488 = vst [vmem:[%s482 + $0x10] sm:$0xff] %v487
                  %v489 = vld [vmem:[%s481 + $0x18] sm:$0xff]
                  %490 = vst [vmem:[%s482 + $0x18] sm:$0xff] %v489
                  %v491 = vld [vmem:[%s481 + $0x20] sm:$0xff]
                  %492 = vst [vmem:[%s482 + $0x20] sm:$0xff] %v491
                  %v493 = vld [vmem:[%s481 + $0x28] sm:$0xff]
                  %494 = vst [vmem:[%s482 + $0x28] sm:$0xff] %v493
                  %v495 = vld [vmem:[%s481 + $0x30] sm:$0xff]
                  %496 = vst [vmem:[%s482 + $0x30] sm:$0xff] %v495
                  %v497 = vld [vmem:[%s481 + $0x38] sm:$0xff]
                  %498 = vst [vmem:[%s482 + $0x38] sm:$0xff] %v497
                  %v499 = vld [vmem:[%s481 + $0x40] sm:$0xff]
                  %500 = vst [vmem:[%s482 + $0x40] sm:$0xff] %v499
                  %v501 = vld [vmem:[%s481 + $0x48] sm:$0xff]
                  %502 = vst [vmem:[%s482 + $0x48] sm:$0xff] %v501
                  %v503 = vld [vmem:[%s481 + $0x50] sm:$0xff]
                  %504 = vst [vmem:[%s482 + $0x50] sm:$0xff] %v503
                  %v505 = vld [vmem:[%s481 + $0x58] sm:$0xff]
                  %506 = vst [vmem:[%s482 + $0x58] sm:$0xff] %v505
                  %v507 = vld [vmem:[%s481 + $0x60] sm:$0xff]
                  %508 = vst [vmem:[%s482 + $0x60] sm:$0xff] %v507
                  %v509 = vld [vmem:[%s481 + $0x68] sm:$0xff]
                  %510 = vst [vmem:[%s482 + $0x68] sm:$0xff] %v509
                  %v511 = vld [vmem:[%s481 + $0x70] sm:$0xff]
                  %512 = vst [vmem:[%s482 + $0x70] sm:$0xff] %v511
                  %v513 = vld [vmem:[%s481 + $0x78] sm:$0xff]
                  %514 = vst [vmem:[%s482 + $0x78] sm:$0xff] %v513
                  %v515 = vld [vmem:[%s481 + $0x80] sm:$0xff]
                  %516 = vst [vmem:[%s482 + $0x80] sm:$0xff] %v515
                  %v517 = vld [vmem:[%s481 + $0x88] sm:$0xff]
                  %518 = vst [vmem:[%s482 + $0x88] sm:$0xff] %v517
                  %v519 = vld [vmem:[%s481 + $0x90] sm:$0xff]
                  %520 = vst [vmem:[%s482 + $0x90] sm:$0xff] %v519
                  %v521 = vld [vmem:[%s481 + $0x98] sm:$0xff]
                  %522 = vst [vmem:[%s482 + $0x98] sm:$0xff] %v521
                  %v523 = vld [vmem:[%s481 + $0xa0] sm:$0xff]
                  %524 = vst [vmem:[%s482 + $0xa0] sm:$0xff] %v523
                  %v525 = vld [vmem:[%s481 + $0xa8] sm:$0xff]
                  %526 = vst [vmem:[%s482 + $0xa8] sm:$0xff] %v525
                  %v527 = vld [vmem:[%s481 + $0xb0] sm:$0xff]
                  %528 = vst [vmem:[%s482 + $0xb0] sm:$0xff] %v527
                  %v529 = vld [vmem:[%s481 + $0xb8] sm:$0xff]
                  %530 = vst [vmem:[%s482 + $0xb8] sm:$0xff] %v529
                  %v531 = vld [vmem:[%s481 + $0xc0] sm:$0xff]
                  %532 = vst [vmem:[%s482 + $0xc0] sm:$0xff] %v531
                  %v533 = vld [vmem:[%s481 + $0xc8] sm:$0xff]
                  %534 = vst [vmem:[%s482 + $0xc8] sm:$0xff] %v533
                  %v535 = vld [vmem:[%s481 + $0xd0] sm:$0xff]
                  %536 = vst [vmem:[%s482 + $0xd0] sm:$0xff] %v535
                  %v537 = vld [vmem:[%s481 + $0xd8] sm:$0xff]
                  %538 = vst [vmem:[%s482 + $0xd8] sm:$0xff] %v537
                  %v539 = vld [vmem:[%s481 + $0x1c0] sm:$0xff]
                  %540 = vst [vmem:[%s482 + $0xe0] sm:$0xff] %v539
                  %v541 = vld [vmem:[%s481 + $0x1c8] sm:$0xff]
                  %542 = vst [vmem:[%s482 + $0xe8] sm:$0xff] %v541
                  %v543 = vld [vmem:[%s481 + $0x1d0] sm:$0xff]
                  %544 = vst [vmem:[%s482 + $0xf0] sm:$0xff] %v543
                  %v545 = vld [vmem:[%s481 + $0x1d8] sm:$0xff]
                  %546 = vst [vmem:[%s482 + $0xf8] sm:$0xff] %v545
                  %v547 = vld [vmem:[%s481 + $0x1e0] sm:$0xff]
                  %548 = vst [vmem:[%s482 + $0x100] sm:$0xff] %v547
                  %v549 = vld [vmem:[%s481 + $0x1e8] sm:$0xff]
                  %550 = vst [vmem:[%s482 + $0x108] sm:$0xff] %v549
                  %v551 = vld [vmem:[%s481 + $0x1f0] sm:$0xff]
                  %552 = vst [vmem:[%s482 + $0x110] sm:$0xff] %v551
                  %v553 = vld [vmem:[%s481 + $0x1f8] sm:$0xff]
                  %554 = vst [vmem:[%s482 + $0x118] sm:$0xff] %v553
                  %v555 = vld [vmem:[%s481 + $0x200] sm:$0xff]
                  %556 = vst [vmem:[%s482 + $0x120] sm:$0xff] %v555
                  %v557 = vld [vmem:[%s481 + $0x208] sm:$0xff]
                  %558 = vst [vmem:[%s482 + $0x128] sm:$0xff] %v557
                  %v559 = vld [vmem:[%s481 + $0x210] sm:$0xff]
                  %560 = vst [vmem:[%s482 + $0x130] sm:$0xff] %v559
                  %v561 = vld [vmem:[%s481 + $0x218] sm:$0xff]
                  %562 = vst [vmem:[%s482 + $0x138] sm:$0xff] %v561
                  %v563 = vld [vmem:[%s481 + $0x220] sm:$0xff]
                  %564 = vst [vmem:[%s482 + $0x140] sm:$0xff] %v563
                  %v565 = vld [vmem:[%s481 + $0x228] sm:$0xff]
                  %566 = vst [vmem:[%s482 + $0x148] sm:$0xff] %v565
                  %v567 = vld [vmem:[%s481 + $0x230] sm:$0xff]
                  %568 = vst [vmem:[%s482 + $0x150] sm:$0xff] %v567
                  %v569 = vld [vmem:[%s481 + $0x238] sm:$0xff]
                  %570 = vst [vmem:[%s482 + $0x158] sm:$0xff] %v569
                  %v571 = vld [vmem:[%s481 + $0x240] sm:$0xff]
                  %572 = vst [vmem:[%s482 + $0x160] sm:$0xff] %v571
                  %v573 = vld [vmem:[%s481 + $0x248] sm:$0xff]
                  %574 = vst [vmem:[%s482 + $0x168] sm:$0xff] %v573
                  %v575 = vld [vmem:[%s481 + $0x250] sm:$0xff]
                  %576 = vst [vmem:[%s482 + $0x170] sm:$0xff] %v575
                  %v577 = vld [vmem:[%s481 + $0x258] sm:$0xff]
                  %578 = vst [vmem:[%s482 + $0x178] sm:$0xff] %v577
                  %v579 = vld [vmem:[%s481 + $0x260] sm:$0xff]
                  %580 = vst [vmem:[%s482 + $0x180] sm:$0xff] %v579
                  %v581 = vld [vmem:[%s481 + $0x268] sm:$0xff]
                  %582 = vst [vmem:[%s482 + $0x188] sm:$0xff] %v581
                  %v583 = vld [vmem:[%s481 + $0x270] sm:$0xff]
                  %584 = vst [vmem:[%s482 + $0x190] sm:$0xff] %v583
                  %v585 = vld [vmem:[%s481 + $0x278] sm:$0xff]
                  %586 = vst [vmem:[%s482 + $0x198] sm:$0xff] %v585
                  %v587 = vld [vmem:[%s481 + $0x280] sm:$0xff]
                  %588 = vst [vmem:[%s482 + $0x1a0] sm:$0xff] %v587
                  %v589 = vld [vmem:[%s481 + $0x288] sm:$0xff]
                  %590 = vst [vmem:[%s482 + $0x1a8] sm:$0xff] %v589
                  %v591 = vld [vmem:[%s481 + $0x290] sm:$0xff]
                  %592 = vst [vmem:[%s482 + $0x1b0] sm:$0xff] %v591
                  %v593 = vld [vmem:[%s481 + $0x298] sm:$0xff]
                  %594 = vst [vmem:[%s482 + $0x1b8] sm:$0xff] %v593
                  %v595 = vld [vmem:[%s481 + $0x380] sm:$0xff]
                  %596 = vst [vmem:[%s482 + $0x1c0] sm:$0xff] %v595
                  %v597 = vld [vmem:[%s481 + $0x388] sm:$0xff]
                  %598 = vst [vmem:[%s482 + $0x1c8] sm:$0xff] %v597
                  %v599 = vld [vmem:[%s481 + $0x390] sm:$0xff]
                  %600 = vst [vmem:[%s482 + $0x1d0] sm:$0xff] %v599
                  %v601 = vld [vmem:[%s481 + $0x398] sm:$0xff]
                  %602 = vst [vmem:[%s482 + $0x1d8] sm:$0xff] %v601
                  %v603 = vld [vmem:[%s481 + $0x3a0] sm:$0xff]
                  %604 = vst [vmem:[%s482 + $0x1e0] sm:$0xff] %v603
                  %v605 = vld [vmem:[%s481 + $0x3a8] sm:$0xff]
                  %606 = vst [vmem:[%s482 + $0x1e8] sm:$0xff] %v605
                  %v607 = vld [vmem:[%s481 + $0x3b0] sm:$0xff]
                  %608 = vst [vmem:[%s482 + $0x1f0] sm:$0xff] %v607
                  %v609 = vld [vmem:[%s481 + $0x3b8] sm:$0xff]
                  %610 = vst [vmem:[%s482 + $0x1f8] sm:$0xff] %v609
                  %v611 = vld [vmem:[%s481 + $0x3c0] sm:$0xff]
                  %612 = vst [vmem:[%s482 + $0x200] sm:$0xff] %v611
                  %v613 = vld [vmem:[%s481 + $0x3c8] sm:$0xff]
                  %614 = vst [vmem:[%s482 + $0x208] sm:$0xff] %v613
                  %v615 = vld [vmem:[%s481 + $0x3d0] sm:$0xff]
                  %616 = vst [vmem:[%s482 + $0x210] sm:$0xff] %v615
                  %v617 = vld [vmem:[%s481 + $0x3d8] sm:$0xff]
                  %618 = vst [vmem:[%s482 + $0x218] sm:$0xff] %v617
                  %v619 = vld [vmem:[%s481 + $0x3e0] sm:$0xff]
                  %620 = vst [vmem:[%s482 + $0x220] sm:$0xff] %v619
                  %v621 = vld [vmem:[%s481 + $0x3e8] sm:$0xff]
                  %622 = vst [vmem:[%s482 + $0x228] sm:$0xff] %v621
                  %v623 = vld [vmem:[%s481 + $0x3f0] sm:$0xff]
                  %624 = vst [vmem:[%s482 + $0x230] sm:$0xff] %v623
                  %v625 = vld [vmem:[%s481 + $0x3f8] sm:$0xff]
                  %626 = vst [vmem:[%s482 + $0x238] sm:$0xff] %v625
                  %v627 = vld [vmem:[%s481 + $0x400] sm:$0xff]
                  %628 = vst [vmem:[%s482 + $0x240] sm:$0xff] %v627
                  %v629 = vld [vmem:[%s481 + $0x408] sm:$0xff]
                  %630 = vst [vmem:[%s482 + $0x248] sm:$0xff] %v629
                  %v631 = vld [vmem:[%s481 + $0x410] sm:$0xff]
                  %632 = vst [vmem:[%s482 + $0x250] sm:$0xff] %v631
                  %v633 = vld [vmem:[%s481 + $0x418] sm:$0xff]
                  %634 = vst [vmem:[%s482 + $0x258] sm:$0xff] %v633
                  %v635 = vld [vmem:[%s481 + $0x420] sm:$0xff]
                  %636 = vst [vmem:[%s482 + $0x260] sm:$0xff] %v635
                  %v637 = vld [vmem:[%s481 + $0x428] sm:$0xff]
                  %638 = vst [vmem:[%s482 + $0x268] sm:$0xff] %v637
                  %v639 = vld [vmem:[%s481 + $0x430] sm:$0xff]
                  %640 = vst [vmem:[%s482 + $0x270] sm:$0xff] %v639
                  %v641 = vld [vmem:[%s481 + $0x438] sm:$0xff]
                  %642 = vst [vmem:[%s482 + $0x278] sm:$0xff] %v641
                  %v643 = vld [vmem:[%s481 + $0x440] sm:$0xff]
                  %644 = vst [vmem:[%s482 + $0x280] sm:$0xff] %v643
                  %v645 = vld [vmem:[%s481 + $0x448] sm:$0xff]
                  %646 = vst [vmem:[%s482 + $0x288] sm:$0xff] %v645
                  %v647 = vld [vmem:[%s481 + $0x450] sm:$0xff]
                  %648 = vst [vmem:[%s482 + $0x290] sm:$0xff] %v647
                  %v649 = vld [vmem:[%s481 + $0x458] sm:$0xff]
                  %650 = vst [vmem:[%s482 + $0x298] sm:$0xff] %v649
                  %v651 = vld [vmem:[%s481 + $0x540] sm:$0xff]
                  %652 = vst [vmem:[%s482 + $0x2a0] sm:$0xff] %v651
                  %v653 = vld [vmem:[%s481 + $0x548] sm:$0xff]
                  %654 = vst [vmem:[%s482 + $0x2a8] sm:$0xff] %v653
                  %v655 = vld [vmem:[%s481 + $0x550] sm:$0xff]
                  %656 = vst [vmem:[%s482 + $0x2b0] sm:$0xff] %v655
                  %v657 = vld [vmem:[%s481 + $0x558] sm:$0xff]
                  %658 = vst [vmem:[%s482 + $0x2b8] sm:$0xff] %v657
                  %v659 = vld [vmem:[%s481 + $0x560] sm:$0xff]
                  %660 = vst [vmem:[%s482 + $0x2c0] sm:$0xff] %v659
                  %v661 = vld [vmem:[%s481 + $0x568] sm:$0xff]
                  %662 = vst [vmem:[%s482 + $0x2c8] sm:$0xff] %v661
                  %v663 = vld [vmem:[%s481 + $0x570] sm:$0xff]
                  %664 = vst [vmem:[%s482 + $0x2d0] sm:$0xff] %v663
                  %v665 = vld [vmem:[%s481 + $0x578] sm:$0xff]
                  %666 = vst [vmem:[%s482 + $0x2d8] sm:$0xff] %v665
                  %v667 = vld [vmem:[%s481 + $0x580] sm:$0xff]
                  %668 = vst [vmem:[%s482 + $0x2e0] sm:$0xff] %v667
                  %v669 = vld [vmem:[%s481 + $0x588] sm:$0xff]
                  %670 = vst [vmem:[%s482 + $0x2e8] sm:$0xff] %v669
                  %v671 = vld [vmem:[%s481 + $0x590] sm:$0xff]
                  %672 = vst [vmem:[%s482 + $0x2f0] sm:$0xff] %v671
                  %v673 = vld [vmem:[%s481 + $0x598] sm:$0xff]
                  %674 = vst [vmem:[%s482 + $0x2f8] sm:$0xff] %v673
                  %v675 = vld [vmem:[%s481 + $0x5a0] sm:$0xff]
                  %676 = vst [vmem:[%s482 + $0x300] sm:$0xff] %v675
                  %v677 = vld [vmem:[%s481 + $0x5a8] sm:$0xff]
                  %678 = vst [vmem:[%s482 + $0x308] sm:$0xff] %v677
                  %v679 = vld [vmem:[%s481 + $0x5b0] sm:$0xff]
                  %680 = vst [vmem:[%s482 + $0x310] sm:$0xff] %v679
                  %v681 = vld [vmem:[%s481 + $0x5b8] sm:$0xff]
                  %682 = vst [vmem:[%s482 + $0x318] sm:$0xff] %v681
                  %v683 = vld [vmem:[%s481 + $0x5c0] sm:$0xff]
                  %684 = vst [vmem:[%s482 + $0x320] sm:$0xff] %v683
                  %v685 = vld [vmem:[%s481 + $0x5c8] sm:$0xff]
                  %686 = vst [vmem:[%s482 + $0x328] sm:$0xff] %v685
                  %v687 = vld [vmem:[%s481 + $0x5d0] sm:$0xff]
                  %688 = vst [vmem:[%s482 + $0x330] sm:$0xff] %v687
                  %v689 = vld [vmem:[%s481 + $0x5d8] sm:$0xff]
                  %690 = vst [vmem:[%s482 + $0x338] sm:$0xff] %v689
                  %v691 = vld [vmem:[%s481 + $0x5e0] sm:$0xff]
                  %692 = vst [vmem:[%s482 + $0x340] sm:$0xff] %v691
                  %v693 = vld [vmem:[%s481 + $0x5e8] sm:$0xff]
                  %694 = vst [vmem:[%s482 + $0x348] sm:$0xff] %v693
                  %v695 = vld [vmem:[%s481 + $0x5f0] sm:$0xff]
                  %696 = vst [vmem:[%s482 + $0x350] sm:$0xff] %v695
                  %v697 = vld [vmem:[%s481 + $0x5f8] sm:$0xff]
                  %698 = vst [vmem:[%s482 + $0x358] sm:$0xff] %v697
                  %v699 = vld [vmem:[%s481 + $0x600] sm:$0xff]
                  %700 = vst [vmem:[%s482 + $0x360] sm:$0xff] %v699
                  %v701 = vld [vmem:[%s481 + $0x608] sm:$0xff]
                  %702 = vst [vmem:[%s482 + $0x368] sm:$0xff] %v701
                  %v703 = vld [vmem:[%s481 + $0x610] sm:$0xff]
                  %704 = vst [vmem:[%s482 + $0x370] sm:$0xff] %v703
                  %v705 = vld [vmem:[%s481 + $0x618] sm:$0xff]
                  %706 = vst [vmem:[%s482 + $0x378] sm:$0xff] %v705
                  %v707 = vld [vmem:[%s481 + $0x700] sm:$0xff]
                  %708 = vst [vmem:[%s482 + $0x380] sm:$0xff] %v707
                  %v709 = vld [vmem:[%s481 + $0x708] sm:$0xff]
                  %710 = vst [vmem:[%s482 + $0x388] sm:$0xff] %v709
                  %v711 = vld [vmem:[%s481 + $0x710] sm:$0xff]
                  %712 = vst [vmem:[%s482 + $0x390] sm:$0xff] %v711
                  %v713 = vld [vmem:[%s481 + $0x718] sm:$0xff]
                  %714 = vst [vmem:[%s482 + $0x398] sm:$0xff] %v713
                  %v715 = vld [vmem:[%s481 + $0x720] sm:$0xff]
                  %716 = vst [vmem:[%s482 + $0x3a0] sm:$0xff] %v715
                  %v717 = vld [vmem:[%s481 + $0x728] sm:$0xff]
                  %718 = vst [vmem:[%s482 + $0x3a8] sm:$0xff] %v717
                  %v719 = vld [vmem:[%s481 + $0x730] sm:$0xff]
                  %720 = vst [vmem:[%s482 + $0x3b0] sm:$0xff] %v719
                  %v721 = vld [vmem:[%s481 + $0x738] sm:$0xff]
                  %722 = vst [vmem:[%s482 + $0x3b8] sm:$0xff] %v721
                  %v723 = vld [vmem:[%s481 + $0x740] sm:$0xff]
                  %724 = vst [vmem:[%s482 + $0x3c0] sm:$0xff] %v723
                  %v725 = vld [vmem:[%s481 + $0x748] sm:$0xff]
                  %726 = vst [vmem:[%s482 + $0x3c8] sm:$0xff] %v725
                  %v727 = vld [vmem:[%s481 + $0x750] sm:$0xff]
                  %728 = vst [vmem:[%s482 + $0x3d0] sm:$0xff] %v727
                  %v729 = vld [vmem:[%s481 + $0x758] sm:$0xff]
                  %730 = vst [vmem:[%s482 + $0x3d8] sm:$0xff] %v729
                  %v731 = vld [vmem:[%s481 + $0x760] sm:$0xff]
                  %732 = vst [vmem:[%s482 + $0x3e0] sm:$0xff] %v731
                  %v733 = vld [vmem:[%s481 + $0x768] sm:$0xff]
                  %734 = vst [vmem:[%s482 + $0x3e8] sm:$0xff] %v733
                  %v735 = vld [vmem:[%s481 + $0x770] sm:$0xff]
                  %736 = vst [vmem:[%s482 + $0x3f0] sm:$0xff] %v735
                  %v737 = vld [vmem:[%s481 + $0x778] sm:$0xff]
                  %738 = vst [vmem:[%s482 + $0x3f8] sm:$0xff] %v737
                  %v739 = vld [vmem:[%s481 + $0x780] sm:$0xff]
                  %740 = vst [vmem:[%s482 + $0x400] sm:$0xff] %v739
                  %v741 = vld [vmem:[%s481 + $0x788] sm:$0xff]
                  %742 = vst [vmem:[%s482 + $0x408] sm:$0xff] %v741
                  %v743 = vld [vmem:[%s481 + $0x790] sm:$0xff]
                  %744 = vst [vmem:[%s482 + $0x410] sm:$0xff] %v743
                  %v745 = vld [vmem:[%s481 + $0x798] sm:$0xff]
                  %746 = vst [vmem:[%s482 + $0x418] sm:$0xff] %v745
                  %v747 = vld [vmem:[%s481 + $0x7a0] sm:$0xff]
                  %748 = vst [vmem:[%s482 + $0x420] sm:$0xff] %v747
                  %v749 = vld [vmem:[%s481 + $0x7a8] sm:$0xff]
                  %750 = vst [vmem:[%s482 + $0x428] sm:$0xff] %v749
                  %v751 = vld [vmem:[%s481 + $0x7b0] sm:$0xff]
                  %752 = vst [vmem:[%s482 + $0x430] sm:$0xff] %v751
                  %v753 = vld [vmem:[%s481 + $0x7b8] sm:$0xff]
                  %754 = vst [vmem:[%s482 + $0x438] sm:$0xff] %v753
                  %v755 = vld [vmem:[%s481 + $0x7c0] sm:$0xff]
                  %756 = vst [vmem:[%s482 + $0x440] sm:$0xff] %v755
                  %v757 = vld [vmem:[%s481 + $0x7c8] sm:$0xff]
                  %758 = vst [vmem:[%s482 + $0x448] sm:$0xff] %v757
                  %v759 = vld [vmem:[%s481 + $0x7d0] sm:$0xff]
                  %760 = vst [vmem:[%s482 + $0x450] sm:$0xff] %v759
                  %v761 = vld [vmem:[%s481 + $0x7d8] sm:$0xff]
                  %762 = vst [vmem:[%s482 + $0x458] sm:$0xff] %v761
                $region56: #{tpu_custom_call.1} parent=50 // loop_footer
                  %s480 = sadd.s32 1, %s476
                $region57: #{tpu_custom_call.1} parent=50 // loop_footer_branch
                  %475 = sbr.rel target = $region53
                $region58: #{tpu_custom_call.1} parent=50 // loop_exit
                  _
              $region51: #{tpu_custom_call.1} parent=35 // pred_fallthru
                _
              // Predicated region
              $region59: #{tpu_custom_call.1} parent=35 // pred_check
                _
              $region60: #{tpu_custom_call.1} parent=35 // pred_check_branch
                %764 = sbr.rel target = $region62
              $region61: #{tpu_custom_call.1} parent=35 // pred_region
                _
              $region62: #{tpu_custom_call.1} parent=35 // pred_fallthru
                _
            $region36: #{tpu_custom_call.1} parent=31 // pred_fallthru
              _
            // Predicated region
            $region37: #{tpu_custom_call.1} parent=31 // pred_check
              _
            $region38: #{tpu_custom_call.1} parent=31 // pred_check_branch
              %183 = sbr.rel target = $region40
            $region39: #{tpu_custom_call.1} parent=31 // pred_region
              loop: start=0, step=1, limit=1
              $region41: #{tpu_custom_call.1} parent=39 // loop_pre_header
                _
              $region42: #{tpu_custom_call.1} parent=39 // loop_header
                %s186 = sphi 0, %s190
                %p187 = scmp.ge.s32.totalorder %s186, 1
                %s191 = sphi %s177, %s177
                %s192 = sphi %s172, %s172
              $region43: #{tpu_custom_call.1} parent=39 // loop_header_branch
                %189 = sbr.rel (%p187) target = $region47
              $region44: #{tpu_custom_call.1} parent=39 // loop_body
                %v193 = vld [vmem:[%s191] sm:$0xff]
                %194 = vst [vmem:[%s192] sm:$0xff] %v193
                %v195 = vld [vmem:[%s191 + $0x8] sm:$0xff]
                %196 = vst [vmem:[%s192 + $0x8] sm:$0xff] %v195
                %v197 = vld [vmem:[%s191 + $0x10] sm:$0xff]
                %198 = vst [vmem:[%s192 + $0x10] sm:$0xff] %v197
                %v199 = vld [vmem:[%s191 + $0x18] sm:$0xff]
                %200 = vst [vmem:[%s192 + $0x18] sm:$0xff] %v199
                %v201 = vld [vmem:[%s191 + $0x20] sm:$0xff]
                %202 = vst [vmem:[%s192 + $0x20] sm:$0xff] %v201
                %v203 = vld [vmem:[%s191 + $0x28] sm:$0xff]
                %204 = vst [vmem:[%s192 + $0x28] sm:$0xff] %v203
                %v205 = vld [vmem:[%s191 + $0x30] sm:$0xff]
                %206 = vst [vmem:[%s192 + $0x30] sm:$0xff] %v205
                %v207 = vld [vmem:[%s191 + $0x38] sm:$0xff]
                %208 = vst [vmem:[%s192 + $0x38] sm:$0xff] %v207
                %v209 = vld [vmem:[%s191 + $0x40] sm:$0xff]
                %210 = vst [vmem:[%s192 + $0x40] sm:$0xff] %v209
                %v211 = vld [vmem:[%s191 + $0x48] sm:$0xff]
                %212 = vst [vmem:[%s192 + $0x48] sm:$0xff] %v211
                %v213 = vld [vmem:[%s191 + $0x50] sm:$0xff]
                %214 = vst [vmem:[%s192 + $0x50] sm:$0xff] %v213
                %v215 = vld [vmem:[%s191 + $0x58] sm:$0xff]
                %216 = vst [vmem:[%s192 + $0x58] sm:$0xff] %v215
                %v217 = vld [vmem:[%s191 + $0x60] sm:$0xff]
                %218 = vst [vmem:[%s192 + $0x60] sm:$0xff] %v217
                %v219 = vld [vmem:[%s191 + $0x68] sm:$0xff]
                %220 = vst [vmem:[%s192 + $0x68] sm:$0xff] %v219
                %v221 = vld [vmem:[%s191 + $0x70] sm:$0xff]
                %222 = vst [vmem:[%s192 + $0x70] sm:$0xff] %v221
                %v223 = vld [vmem:[%s191 + $0x78] sm:$0xff]
                %224 = vst [vmem:[%s192 + $0x78] sm:$0xff] %v223
                %v225 = vld [vmem:[%s191 + $0x80] sm:$0xff]
                %226 = vst [vmem:[%s192 + $0x80] sm:$0xff] %v225
                %v227 = vld [vmem:[%s191 + $0x88] sm:$0xff]
                %228 = vst [vmem:[%s192 + $0x88] sm:$0xff] %v227
                %v229 = vld [vmem:[%s191 + $0x90] sm:$0xff]
                %230 = vst [vmem:[%s192 + $0x90] sm:$0xff] %v229
                %v231 = vld [vmem:[%s191 + $0x98] sm:$0xff]
                %232 = vst [vmem:[%s192 + $0x98] sm:$0xff] %v231
                %v233 = vld [vmem:[%s191 + $0xa0] sm:$0xff]
                %234 = vst [vmem:[%s192 + $0xa0] sm:$0xff] %v233
                %v235 = vld [vmem:[%s191 + $0xa8] sm:$0xff]
                %236 = vst [vmem:[%s192 + $0xa8] sm:$0xff] %v235
                %v237 = vld [vmem:[%s191 + $0xb0] sm:$0xff]
                %238 = vst [vmem:[%s192 + $0xb0] sm:$0xff] %v237
                %v239 = vld [vmem:[%s191 + $0xb8] sm:$0xff]
                %240 = vst [vmem:[%s192 + $0xb8] sm:$0xff] %v239
                %v241 = vld [vmem:[%s191 + $0xc0] sm:$0xff]
                %242 = vst [vmem:[%s192 + $0xc0] sm:$0xff] %v241
                %v243 = vld [vmem:[%s191 + $0xc8] sm:$0xff]
                %244 = vst [vmem:[%s192 + $0xc8] sm:$0xff] %v243
                %v245 = vld [vmem:[%s191 + $0xd0] sm:$0xff]
                %246 = vst [vmem:[%s192 + $0xd0] sm:$0xff] %v245
                %v247 = vld [vmem:[%s191 + $0xd8] sm:$0xff]
                %248 = vst [vmem:[%s192 + $0xd8] sm:$0xff] %v247
                %v249 = vld [vmem:[%s191 + $0x1c0] sm:$0xff]
                %250 = vst [vmem:[%s192 + $0xe0] sm:$0xff] %v249
                %v251 = vld [vmem:[%s191 + $0x1c8] sm:$0xff]
                %252 = vst [vmem:[%s192 + $0xe8] sm:$0xff] %v251
                %v253 = vld [vmem:[%s191 + $0x1d0] sm:$0xff]
                %254 = vst [vmem:[%s192 + $0xf0] sm:$0xff] %v253
                %v255 = vld [vmem:[%s191 + $0x1d8] sm:$0xff]
                %256 = vst [vmem:[%s192 + $0xf8] sm:$0xff] %v255
                %v257 = vld [vmem:[%s191 + $0x1e0] sm:$0xff]
                %258 = vst [vmem:[%s192 + $0x100] sm:$0xff] %v257
                %v259 = vld [vmem:[%s191 + $0x1e8] sm:$0xff]
                %260 = vst [vmem:[%s192 + $0x108] sm:$0xff] %v259
                %v261 = vld [vmem:[%s191 + $0x1f0] sm:$0xff]
                %262 = vst [vmem:[%s192 + $0x110] sm:$0xff] %v261
                %v263 = vld [vmem:[%s191 + $0x1f8] sm:$0xff]
                %264 = vst [vmem:[%s192 + $0x118] sm:$0xff] %v263
                %v265 = vld [vmem:[%s191 + $0x200] sm:$0xff]
                %266 = vst [vmem:[%s192 + $0x120] sm:$0xff] %v265
                %v267 = vld [vmem:[%s191 + $0x208] sm:$0xff]
                %268 = vst [vmem:[%s192 + $0x128] sm:$0xff] %v267
                %v269 = vld [vmem:[%s191 + $0x210] sm:$0xff]
                %270 = vst [vmem:[%s192 + $0x130] sm:$0xff] %v269
                %v271 = vld [vmem:[%s191 + $0x218] sm:$0xff]
                %272 = vst [vmem:[%s192 + $0x138] sm:$0xff] %v271
                %v273 = vld [vmem:[%s191 + $0x220] sm:$0xff]
                %274 = vst [vmem:[%s192 + $0x140] sm:$0xff] %v273
                %v275 = vld [vmem:[%s191 + $0x228] sm:$0xff]
                %276 = vst [vmem:[%s192 + $0x148] sm:$0xff] %v275
                %v277 = vld [vmem:[%s191 + $0x230] sm:$0xff]
                %278 = vst [vmem:[%s192 + $0x150] sm:$0xff] %v277
                %v279 = vld [vmem:[%s191 + $0x238] sm:$0xff]
                %280 = vst [vmem:[%s192 + $0x158] sm:$0xff] %v279
                %v281 = vld [vmem:[%s191 + $0x240] sm:$0xff]
                %282 = vst [vmem:[%s192 + $0x160] sm:$0xff] %v281
                %v283 = vld [vmem:[%s191 + $0x248] sm:$0xff]
                %284 = vst [vmem:[%s192 + $0x168] sm:$0xff] %v283
                %v285 = vld [vmem:[%s191 + $0x250] sm:$0xff]
                %286 = vst [vmem:[%s192 + $0x170] sm:$0xff] %v285
                %v287 = vld [vmem:[%s191 + $0x258] sm:$0xff]
                %288 = vst [vmem:[%s192 + $0x178] sm:$0xff] %v287
                %v289 = vld [vmem:[%s191 + $0x260] sm:$0xff]
                %290 = vst [vmem:[%s192 + $0x180] sm:$0xff] %v289
                %v291 = vld [vmem:[%s191 + $0x268] sm:$0xff]
                %292 = vst [vmem:[%s192 + $0x188] sm:$0xff] %v291
                %v293 = vld [vmem:[%s191 + $0x270] sm:$0xff]
                %294 = vst [vmem:[%s192 + $0x190] sm:$0xff] %v293
                %v295 = vld [vmem:[%s191 + $0x278] sm:$0xff]
                %296 = vst [vmem:[%s192 + $0x198] sm:$0xff] %v295
                %v297 = vld [vmem:[%s191 + $0x280] sm:$0xff]
                %298 = vst [vmem:[%s192 + $0x1a0] sm:$0xff] %v297
                %v299 = vld [vmem:[%s191 + $0x288] sm:$0xff]
                %300 = vst [vmem:[%s192 + $0x1a8] sm:$0xff] %v299
                %v301 = vld [vmem:[%s191 + $0x290] sm:$0xff]
                %302 = vst [vmem:[%s192 + $0x1b0] sm:$0xff] %v301
                %v303 = vld [vmem:[%s191 + $0x298] sm:$0xff]
                %304 = vst [vmem:[%s192 + $0x1b8] sm:$0xff] %v303
                %v305 = vld [vmem:[%s191 + $0x380] sm:$0xff]
                %306 = vst [vmem:[%s192 + $0x1c0] sm:$0xff] %v305
                %v307 = vld [vmem:[%s191 + $0x388] sm:$0xff]
                %308 = vst [vmem:[%s192 + $0x1c8] sm:$0xff] %v307
                %v309 = vld [vmem:[%s191 + $0x390] sm:$0xff]
                %310 = vst [vmem:[%s192 + $0x1d0] sm:$0xff] %v309
                %v311 = vld [vmem:[%s191 + $0x398] sm:$0xff]
                %312 = vst [vmem:[%s192 + $0x1d8] sm:$0xff] %v311
                %v313 = vld [vmem:[%s191 + $0x3a0] sm:$0xff]
                %314 = vst [vmem:[%s192 + $0x1e0] sm:$0xff] %v313
                %v315 = vld [vmem:[%s191 + $0x3a8] sm:$0xff]
                %316 = vst [vmem:[%s192 + $0x1e8] sm:$0xff] %v315
                %v317 = vld [vmem:[%s191 + $0x3b0] sm:$0xff]
                %318 = vst [vmem:[%s192 + $0x1f0] sm:$0xff] %v317
                %v319 = vld [vmem:[%s191 + $0x3b8] sm:$0xff]
                %320 = vst [vmem:[%s192 + $0x1f8] sm:$0xff] %v319
                %v321 = vld [vmem:[%s191 + $0x3c0] sm:$0xff]
                %322 = vst [vmem:[%s192 + $0x200] sm:$0xff] %v321
                %v323 = vld [vmem:[%s191 + $0x3c8] sm:$0xff]
                %324 = vst [vmem:[%s192 + $0x208] sm:$0xff] %v323
                %v325 = vld [vmem:[%s191 + $0x3d0] sm:$0xff]
                %326 = vst [vmem:[%s192 + $0x210] sm:$0xff] %v325
                %v327 = vld [vmem:[%s191 + $0x3d8] sm:$0xff]
                %328 = vst [vmem:[%s192 + $0x218] sm:$0xff] %v327
                %v329 = vld [vmem:[%s191 + $0x3e0] sm:$0xff]
                %330 = vst [vmem:[%s192 + $0x220] sm:$0xff] %v329
                %v331 = vld [vmem:[%s191 + $0x3e8] sm:$0xff]
                %332 = vst [vmem:[%s192 + $0x228] sm:$0xff] %v331
                %v333 = vld [vmem:[%s191 + $0x3f0] sm:$0xff]
                %334 = vst [vmem:[%s192 + $0x230] sm:$0xff] %v333
                %v335 = vld [vmem:[%s191 + $0x3f8] sm:$0xff]
                %336 = vst [vmem:[%s192 + $0x238] sm:$0xff] %v335
                %v337 = vld [vmem:[%s191 + $0x400] sm:$0xff]
                %338 = vst [vmem:[%s192 + $0x240] sm:$0xff] %v337
                %v339 = vld [vmem:[%s191 + $0x408] sm:$0xff]
                %340 = vst [vmem:[%s192 + $0x248] sm:$0xff] %v339
                %v341 = vld [vmem:[%s191 + $0x410] sm:$0xff]
                %342 = vst [vmem:[%s192 + $0x250] sm:$0xff] %v341
                %v343 = vld [vmem:[%s191 + $0x418] sm:$0xff]
                %344 = vst [vmem:[%s192 + $0x258] sm:$0xff] %v343
                %v345 = vld [vmem:[%s191 + $0x420] sm:$0xff]
                %346 = vst [vmem:[%s192 + $0x260] sm:$0xff] %v345
                %v347 = vld [vmem:[%s191 + $0x428] sm:$0xff]
                %348 = vst [vmem:[%s192 + $0x268] sm:$0xff] %v347
                %v349 = vld [vmem:[%s191 + $0x430] sm:$0xff]
                %350 = vst [vmem:[%s192 + $0x270] sm:$0xff] %v349
                %v351 = vld [vmem:[%s191 + $0x438] sm:$0xff]
                %352 = vst [vmem:[%s192 + $0x278] sm:$0xff] %v351
                %v353 = vld [vmem:[%s191 + $0x440] sm:$0xff]
                %354 = vst [vmem:[%s192 + $0x280] sm:$0xff] %v353
                %v355 = vld [vmem:[%s191 + $0x448] sm:$0xff]
                %356 = vst [vmem:[%s192 + $0x288] sm:$0xff] %v355
                %v357 = vld [vmem:[%s191 + $0x450] sm:$0xff]
                %358 = vst [vmem:[%s192 + $0x290] sm:$0xff] %v357
                %v359 = vld [vmem:[%s191 + $0x458] sm:$0xff]
                %360 = vst [vmem:[%s192 + $0x298] sm:$0xff] %v359
                %v361 = vld [vmem:[%s191 + $0x540] sm:$0xff]
                %362 = vst [vmem:[%s192 + $0x2a0] sm:$0xff] %v361
                %v363 = vld [vmem:[%s191 + $0x548] sm:$0xff]
                %364 = vst [vmem:[%s192 + $0x2a8] sm:$0xff] %v363
                %v365 = vld [vmem:[%s191 + $0x550] sm:$0xff]
                %366 = vst [vmem:[%s192 + $0x2b0] sm:$0xff] %v365
                %v367 = vld [vmem:[%s191 + $0x558] sm:$0xff]
                %368 = vst [vmem:[%s192 + $0x2b8] sm:$0xff] %v367
                %v369 = vld [vmem:[%s191 + $0x560] sm:$0xff]
                %370 = vst [vmem:[%s192 + $0x2c0] sm:$0xff] %v369
                %v371 = vld [vmem:[%s191 + $0x568] sm:$0xff]
                %372 = vst [vmem:[%s192 + $0x2c8] sm:$0xff] %v371
                %v373 = vld [vmem:[%s191 + $0x570] sm:$0xff]
                %374 = vst [vmem:[%s192 + $0x2d0] sm:$0xff] %v373
                %v375 = vld [vmem:[%s191 + $0x578] sm:$0xff]
                %376 = vst [vmem:[%s192 + $0x2d8] sm:$0xff] %v375
                %v377 = vld [vmem:[%s191 + $0x580] sm:$0xff]
                %378 = vst [vmem:[%s192 + $0x2e0] sm:$0xff] %v377
                %v379 = vld [vmem:[%s191 + $0x588] sm:$0xff]
                %380 = vst [vmem:[%s192 + $0x2e8] sm:$0xff] %v379
                %v381 = vld [vmem:[%s191 + $0x590] sm:$0xff]
                %382 = vst [vmem:[%s192 + $0x2f0] sm:$0xff] %v381
                %v383 = vld [vmem:[%s191 + $0x598] sm:$0xff]
                %384 = vst [vmem:[%s192 + $0x2f8] sm:$0xff] %v383
                %v385 = vld [vmem:[%s191 + $0x5a0] sm:$0xff]
                %386 = vst [vmem:[%s192 + $0x300] sm:$0xff] %v385
                %v387 = vld [vmem:[%s191 + $0x5a8] sm:$0xff]
                %388 = vst [vmem:[%s192 + $0x308] sm:$0xff] %v387
                %v389 = vld [vmem:[%s191 + $0x5b0] sm:$0xff]
                %390 = vst [vmem:[%s192 + $0x310] sm:$0xff] %v389
                %v391 = vld [vmem:[%s191 + $0x5b8] sm:$0xff]
                %392 = vst [vmem:[%s192 + $0x318] sm:$0xff] %v391
                %v393 = vld [vmem:[%s191 + $0x5c0] sm:$0xff]
                %394 = vst [vmem:[%s192 + $0x320] sm:$0xff] %v393
                %v395 = vld [vmem:[%s191 + $0x5c8] sm:$0xff]
                %396 = vst [vmem:[%s192 + $0x328] sm:$0xff] %v395
                %v397 = vld [vmem:[%s191 + $0x5d0] sm:$0xff]
                %398 = vst [vmem:[%s192 + $0x330] sm:$0xff] %v397
                %v399 = vld [vmem:[%s191 + $0x5d8] sm:$0xff]
                %400 = vst [vmem:[%s192 + $0x338] sm:$0xff] %v399
                %v401 = vld [vmem:[%s191 + $0x5e0] sm:$0xff]
                %402 = vst [vmem:[%s192 + $0x340] sm:$0xff] %v401
                %v403 = vld [vmem:[%s191 + $0x5e8] sm:$0xff]
                %404 = vst [vmem:[%s192 + $0x348] sm:$0xff] %v403
                %v405 = vld [vmem:[%s191 + $0x5f0] sm:$0xff]
                %406 = vst [vmem:[%s192 + $0x350] sm:$0xff] %v405
                %v407 = vld [vmem:[%s191 + $0x5f8] sm:$0xff]
                %408 = vst [vmem:[%s192 + $0x358] sm:$0xff] %v407
                %v409 = vld [vmem:[%s191 + $0x600] sm:$0xff]
                %410 = vst [vmem:[%s192 + $0x360] sm:$0xff] %v409
                %v411 = vld [vmem:[%s191 + $0x608] sm:$0xff]
                %412 = vst [vmem:[%s192 + $0x368] sm:$0xff] %v411
                %v413 = vld [vmem:[%s191 + $0x610] sm:$0xff]
                %414 = vst [vmem:[%s192 + $0x370] sm:$0xff] %v413
                %v415 = vld [vmem:[%s191 + $0x618] sm:$0xff]
                %416 = vst [vmem:[%s192 + $0x378] sm:$0xff] %v415
                %v417 = vld [vmem:[%s191 + $0x700] sm:$0xff]
                %418 = vst [vmem:[%s192 + $0x380] sm:$0xff] %v417
                %v419 = vld [vmem:[%s191 + $0x708] sm:$0xff]
                %420 = vst [vmem:[%s192 + $0x388] sm:$0xff] %v419
                %v421 = vld [vmem:[%s191 + $0x710] sm:$0xff]
                %422 = vst [vmem:[%s192 + $0x390] sm:$0xff] %v421
                %v423 = vld [vmem:[%s191 + $0x718] sm:$0xff]
                %424 = vst [vmem:[%s192 + $0x398] sm:$0xff] %v423
                %v425 = vld [vmem:[%s191 + $0x720] sm:$0xff]
                %426 = vst [vmem:[%s192 + $0x3a0] sm:$0xff] %v425
                %v427 = vld [vmem:[%s191 + $0x728] sm:$0xff]
                %428 = vst [vmem:[%s192 + $0x3a8] sm:$0xff] %v427
                %v429 = vld [vmem:[%s191 + $0x730] sm:$0xff]
                %430 = vst [vmem:[%s192 + $0x3b0] sm:$0xff] %v429
                %v431 = vld [vmem:[%s191 + $0x738] sm:$0xff]
                %432 = vst [vmem:[%s192 + $0x3b8] sm:$0xff] %v431
                %v433 = vld [vmem:[%s191 + $0x740] sm:$0xff]
                %434 = vst [vmem:[%s192 + $0x3c0] sm:$0xff] %v433
                %v435 = vld [vmem:[%s191 + $0x748] sm:$0xff]
                %436 = vst [vmem:[%s192 + $0x3c8] sm:$0xff] %v435
                %v437 = vld [vmem:[%s191 + $0x750] sm:$0xff]
                %438 = vst [vmem:[%s192 + $0x3d0] sm:$0xff] %v437
                %v439 = vld [vmem:[%s191 + $0x758] sm:$0xff]
                %440 = vst [vmem:[%s192 + $0x3d8] sm:$0xff] %v439
                %v441 = vld [vmem:[%s191 + $0x760] sm:$0xff]
                %442 = vst [vmem:[%s192 + $0x3e0] sm:$0xff] %v441
                %v443 = vld [vmem:[%s191 + $0x768] sm:$0xff]
                %444 = vst [vmem:[%s192 + $0x3e8] sm:$0xff] %v443
                %v445 = vld [vmem:[%s191 + $0x770] sm:$0xff]
                %446 = vst [vmem:[%s192 + $0x3f0] sm:$0xff] %v445
                %v447 = vld [vmem:[%s191 + $0x778] sm:$0xff]
                %448 = vst [vmem:[%s192 + $0x3f8] sm:$0xff] %v447
                %v449 = vld [vmem:[%s191 + $0x780] sm:$0xff]
                %450 = vst [vmem:[%s192 + $0x400] sm:$0xff] %v449
                %v451 = vld [vmem:[%s191 + $0x788] sm:$0xff]
                %452 = vst [vmem:[%s192 + $0x408] sm:$0xff] %v451
                %v453 = vld [vmem:[%s191 + $0x790] sm:$0xff]
                %454 = vst [vmem:[%s192 + $0x410] sm:$0xff] %v453
                %v455 = vld [vmem:[%s191 + $0x798] sm:$0xff]
                %456 = vst [vmem:[%s192 + $0x418] sm:$0xff] %v455
                %v457 = vld [vmem:[%s191 + $0x7a0] sm:$0xff]
                %458 = vst [vmem:[%s192 + $0x420] sm:$0xff] %v457
                %v459 = vld [vmem:[%s191 + $0x7a8] sm:$0xff]
                %460 = vst [vmem:[%s192 + $0x428] sm:$0xff] %v459
                %v461 = vld [vmem:[%s191 + $0x7b0] sm:$0xff]
                %462 = vst [vmem:[%s192 + $0x430] sm:$0xff] %v461
                %v463 = vld [vmem:[%s191 + $0x7b8] sm:$0xff]
                %464 = vst [vmem:[%s192 + $0x438] sm:$0xff] %v463
                %v465 = vld [vmem:[%s191 + $0x7c0] sm:$0xff]
                %466 = vst [vmem:[%s192 + $0x440] sm:$0xff] %v465
                %v467 = vld [vmem:[%s191 + $0x7c8] sm:$0xff]
                %468 = vst [vmem:[%s192 + $0x448] sm:$0xff] %v467
                %v469 = vld [vmem:[%s191 + $0x7d0] sm:$0xff]
                %470 = vst [vmem:[%s192 + $0x450] sm:$0xff] %v469
                %v471 = vld [vmem:[%s191 + $0x7d8] sm:$0xff]
                %472 = vst [vmem:[%s192 + $0x458] sm:$0xff] %v471
              $region45: #{tpu_custom_call.1} parent=39 // loop_footer
                %s190 = sadd.s32 1, %s186
              $region46: #{tpu_custom_call.1} parent=39 // loop_footer_branch
                %185 = sbr.rel target = $region42
              $region47: #{tpu_custom_call.1} parent=39 // loop_exit
                _
            $region40: #{tpu_custom_call.1} parent=31 // pred_fallthru
              _
          $region32: #{tpu_custom_call.1} parent=27 // pred_fallthru
            _
          %765 = vnop
        $region28: #{tpu_custom_call.1} parent=15 // pred_fallthru
          _
      $region16: #{tpu_custom_call.1} parent=5 // pred_fallthru
        _
      %p766 = scmp.le.s32.totalorder 1, %s12
      %p767 = scmp.lt.s32.totalorder %s12, 5
      %p768 = pnand %p766, %p767
      %p769 = pneg %p768
      // Predicated region
      $region63: #{tpu_custom_call.1} parent=5 // pred_check
        _
      $region64: #{tpu_custom_call.1} parent=5 // pred_check_branch
        %771 = sbr.rel (%p768) target = $region66
      $region65: #{tpu_custom_call.1} parent=5 // pred_region
        %s772 = ssub.s32 %s12, 1
        %s773 = sand.u32 %s91, 1
        %s774 = sand.u32 %s91, 1
        %s775 = smul.addr %s774, 1120
        %s776 = scalar_lea.vmem [#allocation2], %s775
        // Predicated region
        $region67: #{tpu_custom_call.1} parent=65 // pred_check
          %p777 = pneg %p104
        $region68: #{tpu_custom_call.1} parent=65 // pred_check_branch
          %779 = sbr.rel (%p777) target = $region70
        $region69: #{tpu_custom_call.1} parent=65 // pred_region
          _
        $region70: #{tpu_custom_call.1} parent=65 // pred_fallthru
          _
        %s780 = smul.u32 28, %s21
        %p781 = scmp.lt.s32.totalorder %s780, 55
        %s782 = scalar_select %p781, %s780, 55
        %s783 = smul.addr %s782, 4
        %s784 = scalar_lea.vmem %s0, %s783
        %p785 = pneg %p50
        %p786 = pneg %p47
        %p787 = scmp.lt.s32.totalorder %s22, 1
        %s788 = scalar_select %p787, %s22, 1
        %s789 = smul.addr %s788, 4
        %s790 = smul.addr %s789, 4
        %s791 = scalar_lea.vmem %s1, %s790
        %p792 = pneg %p76
        %p793 = pneg %p73
        %s794 = sand.u32 %s91, 1
        %s795 = sand.u32 %s91, 1
        %s796 = smul.addr %s795, 1120
        %s797 = scalar_lea.vmem [#allocation2], %s796
        %p798 = pneg %p104
        %p799 = pneg %p101
        %p800 = pneg %p130
        %p801 = pneg %p127
        %s802 = sand.u32 %s117, 1
        %s803 = scalar_lea.sflag [#allocation4], %s802
        %s804 = sand.u32 %s117, 1
        %s805 = smul.addr %s804, 8
        %s806 = scalar_lea.vmem [#allocation3], %s805
        %s807 = smul.u32 28, %s21
        %p808 = scmp.lt.s32.totalorder %s807, 55
        %s809 = scalar_select %p808, %s807, 55
        %s810 = smul.addr %s809, 4
        %s811 = scalar_lea.vmem %s0, %s810
        %s812 = smul.u32 28, %s21
        %p813 = scmp.lt.s32.totalorder %s22, 1
        %s814 = scalar_select %p813, %s22, 1
        %s815 = smul.addr %s814, 4
        %s816 = smul.addr %s815, 4
        %s817 = scalar_lea.vmem %s1, %s816
        %s818 = smul.u32 28, %s21
        %p820 = scmp.eq.s32.totalorder %s22, 0
        // Predicated region
        $region71: #{tpu_custom_call.1} parent=65 // pred_check
          %p821 = pneg %p820
        $region72: #{tpu_custom_call.1} parent=65 // pred_check_branch
          %823 = sbr.rel (%p821) target = $region74
        $region73: #{tpu_custom_call.1} parent=65 // pred_region
          %824 = vst [vmem:[%s806] sm:$0xff] 0.0
        $region74: #{tpu_custom_call.1} parent=65 // pred_fallthru
          _
        %s825 = smul.u32 %s22, 32
        %s826 = ssub.s32 448, %s825
        %s827 = smul.u32 %s21, 224
        %s828 = ssub.s32 %s826, %s827
        %v829 = vld [vmem:[%s811] sm:$0xf]
        %v830 = vld [vmem:[%s811 + $0x4] sm:$0xf]
        %v831 = vld [vmem:[%s811 + $0x8] sm:$0xf]
        %v832 = vld [vmem:[%s811 + $0xc] sm:$0xf]
        %v833 = vld [vmem:[%s811 + $0x10] sm:$0xf]
        %v834 = vld [vmem:[%s811 + $0x14] sm:$0xf]
        %v835 = vld [vmem:[%s811 + $0x18] sm:$0xf]
        %v836 = vld [vmem:[%s811 + $0x1c] sm:$0xf]
        %v837 = vld [vmem:[%s811 + $0x20] sm:$0xf]
        %v838 = vld [vmem:[%s811 + $0x24] sm:$0xf]
        %v839 = vld [vmem:[%s811 + $0x28] sm:$0xf]
        %v840 = vld [vmem:[%s811 + $0x2c] sm:$0xf]
        %v841 = vld [vmem:[%s811 + $0x30] sm:$0xf]
        %v842 = vld [vmem:[%s811 + $0x34] sm:$0xf]
        %v843 = vld [vmem:[%s811 + $0x38] sm:$0xf]
        %v844 = vld [vmem:[%s811 + $0x3c] sm:$0xf]
        %v845 = vld [vmem:[%s811 + $0x40] sm:$0xf]
        %v846 = vld [vmem:[%s811 + $0x44] sm:$0xf]
        %v847 = vld [vmem:[%s811 + $0x48] sm:$0xf]
        %v848 = vld [vmem:[%s811 + $0x4c] sm:$0xf]
        %v849 = vld [vmem:[%s811 + $0x50] sm:$0xf]
        %v850 = vld [vmem:[%s811 + $0x54] sm:$0xf]
        %v851 = vld [vmem:[%s811 + $0x58] sm:$0xf]
        %v852 = vld [vmem:[%s811 + $0x5c] sm:$0xf]
        %v853 = vld [vmem:[%s811 + $0x60] sm:$0xf]
        %v854 = vld [vmem:[%s811 + $0x64] sm:$0xf]
        %v855 = vld [vmem:[%s811 + $0x68] sm:$0xf]
        %v856 = vld [vmem:[%s811 + $0x6c] sm:$0xf]
        %v857 = vld [vmem:[%s817] sm:$0xf]
        %v858 = vld [vmem:[%s817 + $0x4] sm:$0xf]
        %v859 = vld [vmem:[%s817 + $0x8] sm:$0xf]
        %v860 = vld [vmem:[%s817 + $0xc] sm:$0xf]
        %v889 = vunpack.c.l.b16 %v829
        %v890 = vunpack.c.l.b16 %v830
        %v891 = vunpack.c.l.b16 %v831
        %v892 = vunpack.c.l.b16 %v832
        %v893 = vunpack.c.l.b16 %v833
        %v894 = vunpack.c.l.b16 %v834
        %v895 = vunpack.c.l.b16 %v835
        %v896 = vunpack.c.l.b16 %v836
        %v897 = vunpack.c.l.b16 %v837
        %v898 = vunpack.c.l.b16 %v838
        %v899 = vunpack.c.l.b16 %v839
        %v900 = vunpack.c.l.b16 %v840
        %v901 = vunpack.c.l.b16 %v841
        %v902 = vunpack.c.l.b16 %v842
        %v903 = vunpack.c.l.b16 %v843
        %v904 = vunpack.c.l.b16 %v844
        %v905 = vunpack.c.l.b16 %v845
        %v906 = vunpack.c.l.b16 %v846
        %v907 = vunpack.c.l.b16 %v847
        %v908 = vunpack.c.l.b16 %v848
        %v909 = vunpack.c.l.b16 %v849
        %v910 = vunpack.c.l.b16 %v850
        %v911 = vunpack.c.l.b16 %v851
        %v912 = vunpack.c.l.b16 %v852
        %v913 = vunpack.c.l.b16 %v853
        %v914 = vunpack.c.l.b16 %v854
        %v915 = vunpack.c.l.b16 %v855
        %v916 = vunpack.c.l.b16 %v856
        %v917 = vpack.c.b16 %v890, %v889
        %v918 = vpack.c.b16 %v892, %v891
        %v919 = vpack.c.b16 %v894, %v893
        %v920 = vpack.c.b16 %v896, %v895
        %v921 = vpack.c.b16 %v898, %v897
        %v922 = vpack.c.b16 %v900, %v899
        %v923 = vpack.c.b16 %v902, %v901
        %v924 = vpack.c.b16 %v904, %v903
        %v925 = vpack.c.b16 %v906, %v905
        %v926 = vpack.c.b16 %v908, %v907
        %v927 = vpack.c.b16 %v910, %v909
        %v928 = vpack.c.b16 %v912, %v911
        %v929 = vpack.c.b16 %v914, %v913
        %v930 = vpack.c.b16 %v916, %v915
        %v935 = vunpack.c.l.b16 %v857
        %v936 = vunpack.c.l.b16 %v858
        %v937 = vunpack.c.l.b16 %v859
        %v938 = vunpack.c.l.b16 %v860
        %v939 = vpack.c.b16 %v936, %v935
        %v940 = vpack.c.b16 %v938, %v937
        %vm943 = vcmask 261120
        %v945 = vsel %vm943, %v917, 0
        %v948 = vsel %vm943, %v918, 0
        %v951 = vsel %vm943, %v919, 0
        %v954 = vsel %vm943, %v920, 0
        %v957 = vsel %vm943, %v921, 0
        %v960 = vsel %vm943, %v922, 0
        %v963 = vsel %vm943, %v923, 0
        %v966 = vsel %vm943, %v924, 0
        %v969 = vsel %vm943, %v925, 0
        %v972 = vsel %vm943, %v926, 0
        %v975 = vsel %vm943, %v927, 0
        %v978 = vsel %vm943, %v928, 0
        %v981 = vsel %vm943, %v929, 0
        %v984 = vsel %vm943, %v930, 0
        %986 = vmatprep.subr.bf16.mxu0 0
        %987 = vmatpush1.bf16.msra.mxu0 %v939
        %988 = vmatprep.subr.bf16.mxu0 0
        %989 = vmatpush1.bf16.msra.mxu0 %v940
        %990 = vmatprep.subr.bf16.mxu0 0
        %991 = vmatpush1.bf16.msra.mxu0 0
        %992 = vmatprep.subr.bf16.mxu0 0
        %993 = vmatpush1.bf16.msra.mxu0 0
        %994 = vmatprep.subr.bf16.mxu0 0
        %995 = vmatpush1.bf16.msra.mxu0 0
        %996 = vmatprep.subr.bf16.mxu0 0
        %997 = vmatpush1.bf16.msra.mxu0 0
        %998 = vmatprep.subr.bf16.mxu0 0
        %999 = vmatpush1.bf16.msra.mxu0 0
        %1000 = vmatprep.subr.bf16.mxu0 0
        %1001 = vmatpush1.bf16.msra.mxu0 0
        %1002 = vmatprep.subr.bf16.mxu0 0
        %1003 = vmatpush1.bf16.msra.mxu0 0
        %1004 = vmatprep.subr.bf16.mxu0 0
        %1005 = vmatpush1.bf16.msra.mxu0 0
        %1006 = vmatprep.subr.bf16.mxu0 0
        %1007 = vmatpush1.bf16.msra.mxu0 0
        %1008 = vmatprep.subr.bf16.mxu0 0
        %1009 = vmatpush1.bf16.msra.mxu0 0
        %1010 = vmatprep.subr.bf16.mxu0 0
        %1011 = vmatpush1.bf16.msra.mxu0 0
        %1012 = vmatprep.subr.bf16.mxu0 0
        %1013 = vmatpush1.bf16.msra.mxu0 0
        %1014 = vmatprep.subr.bf16.mxu0 0
        %1015 = vmatpush1.bf16.msra.mxu0 0
        %1016 = vmatprep.subr.bf16.mxu0 0
        %1017 = vmatpush1.bf16.msra.mxu0 0
        %1018 = vmatprep.mubr.bf16.mxu0 0
        %1019 = vmatmul.mubr.bf16.gmra.mrb[0].mxu0 %v945
        %v1020 = vpop.f32.mrb[0].mxu0
        %v1021 = vadd.f32 0.0, %v1020
        %v1022 = vpop.f32.mrb[0].mxu0
        %v1023 = vpop.f32.mrb[0].mxu0
        %v1024 = vadd.f32 0.0, %v1023
        %v1025 = vpop.f32.mrb[0].mxu0
        %1026 = vmatprep.mubr.bf16.mxu0 0
        %1027 = vmatmul.mubr.bf16.gmra.mrb[0].mxu0 %v948
        %v1028 = vpop.f32.mrb[0].mxu0
        %v1029 = vadd.f32 0.0, %v1028
        %v1030 = vpop.f32.mrb[0].mxu0
        %v1031 = vpop.f32.mrb[0].mxu0
        %v1032 = vadd.f32 0.0, %v1031
        %v1033 = vpop.f32.mrb[0].mxu0
        %1034 = vmatprep.mubr.bf16.mxu0 0
        %1035 = vmatmul.mubr.bf16.gmra.mrb[0].mxu0 %v951
        %v1036 = vpop.f32.mrb[0].mxu0
        %v1037 = vadd.f32 0.0, %v1036
        %v1038 = vpop.f32.mrb[0].mxu0
        %v1039 = vpop.f32.mrb[0].mxu0
        %v1040 = vadd.f32 0.0, %v1039
        %v1041 = vpop.f32.mrb[0].mxu0
        %1042 = vmatprep.mubr.bf16.mxu0 0
        %1043 = vmatmul.mubr.bf16.gmra.mrb[0].mxu0 %v954
        %v1044 = vpop.f32.mrb[0].mxu0
        %v1045 = vadd.f32 0.0, %v1044
        %v1046 = vpop.f32.mrb[0].mxu0
        %v1047 = vpop.f32.mrb[0].mxu0
        %v1048 = vadd.f32 0.0, %v1047
        %v1049 = vpop.f32.mrb[0].mxu0
        %1050 = vmatprep.mubr.bf16.mxu0 0
        %1051 = vmatmul.mubr.bf16.gmra.mrb[0].mxu0 %v957
        %v1052 = vpop.f32.mrb[0].mxu0
        %v1053 = vadd.f32 0.0, %v1052
        %v1054 = vpop.f32.mrb[0].mxu0
        %v1055 = vpop.f32.mrb[0].mxu0
        %v1056 = vadd.f32 0.0, %v1055
        %v1057 = vpop.f32.mrb[0].mxu0
        %1058 = vmatprep.mubr.bf16.mxu0 0
        %1059 = vmatmul.mubr.bf16.gmra.mrb[0].mxu0 %v960
        %v1060 = vpop.f32.mrb[0].mxu0
        %v1061 = vadd.f32 0.0, %v1060
        %v1062 = vpop.f32.mrb[0].mxu0
        %v1063 = vpop.f32.mrb[0].mxu0
        %v1064 = vadd.f32 0.0, %v1063
        %v1065 = vpop.f32.mrb[0].mxu0
        %1066 = vmatprep.mubr.bf16.mxu0 0
        %1067 = vmatmul.mubr.bf16.gmra.mrb[0].mxu0 %v963
        %v1068 = vpop.f32.mrb[0].mxu0
        %v1069 = vadd.f32 0.0, %v1068
        %v1070 = vpop.f32.mrb[0].mxu0
        %v1071 = vpop.f32.mrb[0].mxu0
        %v1072 = vadd.f32 0.0, %v1071
        %v1073 = vpop.f32.mrb[0].mxu0
        %1074 = vmatprep.mubr.bf16.mxu0 0
        %1075 = vmatmul.mubr.bf16.gmra.mrb[0].mxu0 %v966
        %v1076 = vpop.f32.mrb[0].mxu0
        %v1077 = vadd.f32 0.0, %v1076
        %v1078 = vpop.f32.mrb[0].mxu0
        %v1079 = vpop.f32.mrb[0].mxu0
        %v1080 = vadd.f32 0.0, %v1079
        %v1081 = vpop.f32.mrb[0].mxu0
        %1082 = vmatprep.mubr.bf16.mxu0 0
        %1083 = vmatmul.mubr.bf16.gmra.mrb[0].mxu0 %v969
        %v1084 = vpop.f32.mrb[0].mxu0
        %v1085 = vadd.f32 0.0, %v1084
        %v1086 = vpop.f32.mrb[0].mxu0
        %v1087 = vpop.f32.mrb[0].mxu0
        %v1088 = vadd.f32 0.0, %v1087
        %v1089 = vpop.f32.mrb[0].mxu0
        %1090 = vmatprep.mubr.bf16.mxu0 0
        %1091 = vmatmul.mubr.bf16.gmra.mrb[0].mxu0 %v972
        %v1092 = vpop.f32.mrb[0].mxu0
        %v1093 = vadd.f32 0.0, %v1092
        %v1094 = vpop.f32.mrb[0].mxu0
        %v1095 = vpop.f32.mrb[0].mxu0
        %v1096 = vadd.f32 0.0, %v1095
        %v1097 = vpop.f32.mrb[0].mxu0
        %1098 = vmatprep.mubr.bf16.mxu0 0
        %1099 = vmatmul.mubr.bf16.gmra.mrb[0].mxu0 %v975
        %v1100 = vpop.f32.mrb[0].mxu0
        %v1101 = vadd.f32 0.0, %v1100
        %v1102 = vpop.f32.mrb[0].mxu0
        %v1103 = vpop.f32.mrb[0].mxu0
        %v1104 = vadd.f32 0.0, %v1103
        %v1105 = vpop.f32.mrb[0].mxu0
        %1106 = vmatprep.mubr.bf16.mxu0 0
        %1107 = vmatmul.mubr.bf16.gmra.mrb[0].mxu0 %v978
        %v1108 = vpop.f32.mrb[0].mxu0
        %v1109 = vadd.f32 0.0, %v1108
        %v1110 = vpop.f32.mrb[0].mxu0
        %v1111 = vpop.f32.mrb[0].mxu0
        %v1112 = vadd.f32 0.0, %v1111
        %v1113 = vpop.f32.mrb[0].mxu0
        %1114 = vmatprep.mubr.bf16.mxu0 0
        %1115 = vmatmul.mubr.bf16.gmra.mrb[0].mxu0 %v981
        %v1116 = vpop.f32.mrb[0].mxu0
        %v1117 = vadd.f32 0.0, %v1116
        %v1118 = vpop.f32.mrb[0].mxu0
        %v1119 = vpop.f32.mrb[0].mxu0
        %v1120 = vadd.f32 0.0, %v1119
        %v1121 = vpop.f32.mrb[0].mxu0
        %1122 = vmatprep.mubr.bf16.mxu0 0
        %1123 = vmatmul.mubr.bf16.gmra.mrb[0].mxu0 %v984
        %v1124 = vpop.f32.mrb[0].mxu0
        %v1125 = vadd.f32 0.0, %v1124
        %v1126 = vpop.f32.mrb[0].mxu0
        %v1127 = vpop.f32.mrb[0].mxu0
        %v1128 = vadd.f32 0.0, %v1127
        %v1129 = vpop.f32.mrb[0].mxu0
        %1130 = vdwg.mxu0
        %v1131 = vld [vmem:[%s776] sm:$0xff]
        %v1132 = vld [vmem:[%s776 + $0x8] sm:$0xff]
        %v1133 = vld [vmem:[%s776 + $0x10] sm:$0xff]
        %v1134 = vld [vmem:[%s776 + $0x18] sm:$0xff]
        %v1135 = vld [vmem:[%s776 + $0x20] sm:$0xff]
        %v1136 = vld [vmem:[%s776 + $0x28] sm:$0xff]
        %v1137 = vld [vmem:[%s776 + $0x30] sm:$0xff]
        %v1138 = vld [vmem:[%s776 + $0x38] sm:$0xff]
        %v1139 = vld [vmem:[%s776 + $0x40] sm:$0xff]
        %v1140 = vld [vmem:[%s776 + $0x48] sm:$0xff]
        %v1141 = vld [vmem:[%s776 + $0x50] sm:$0xff]
        %v1142 = vld [vmem:[%s776 + $0x58] sm:$0xff]
        %v1143 = vld [vmem:[%s776 + $0x60] sm:$0xff]
        %v1144 = vld [vmem:[%s776 + $0x68] sm:$0xff]
        %v1145 = vld [vmem:[%s776 + $0x70] sm:$0xff]
        %v1146 = vld [vmem:[%s776 + $0x78] sm:$0xff]
        %v1147 = vld [vmem:[%s776 + $0x80] sm:$0xff]
        %v1148 = vld [vmem:[%s776 + $0x88] sm:$0xff]
        %v1149 = vld [vmem:[%s776 + $0x90] sm:$0xff]
        %v1150 = vld [vmem:[%s776 + $0x98] sm:$0xff]
        %v1151 = vld [vmem:[%s776 + $0xa0] sm:$0xff]
        %v1152 = vld [vmem:[%s776 + $0xa8] sm:$0xff]
        %v1153 = vld [vmem:[%s776 + $0xb0] sm:$0xff]
        %v1154 = vld [vmem:[%s776 + $0xb8] sm:$0xff]
        %v1155 = vld [vmem:[%s776 + $0xc0] sm:$0xff]
        %v1156 = vld [vmem:[%s776 + $0xc8] sm:$0xff]
        %v1157 = vld [vmem:[%s776 + $0xd0] sm:$0xff]
        %v1158 = vld [vmem:[%s776 + $0xd8] sm:$0xff]
        %v1159 = vmul.f32 %v1021, %v1131
        %v1160 = vmul.f32 %v1024, %v1132
        %v1161 = vmul.f32 %v1029, %v1133
        %v1162 = vmul.f32 %v1032, %v1134
        %v1163 = vmul.f32 %v1037, %v1135
        %v1164 = vmul.f32 %v1040, %v1136
        %v1165 = vmul.f32 %v1045, %v1137
        %v1166 = vmul.f32 %v1048, %v1138
        %v1167 = vmul.f32 %v1053, %v1139
        %v1168 = vmul.f32 %v1056, %v1140
        %v1169 = vmul.f32 %v1061, %v1141
        %v1170 = vmul.f32 %v1064, %v1142
        %v1171 = vmul.f32 %v1069, %v1143
        %v1172 = vmul.f32 %v1072, %v1144
        %v1173 = vmul.f32 %v1077, %v1145
        %v1174 = vmul.f32 %v1080, %v1146
        %v1175 = vmul.f32 %v1085, %v1147
        %v1176 = vmul.f32 %v1088, %v1148
        %v1177 = vmul.f32 %v1093, %v1149
        %v1178 = vmul.f32 %v1096, %v1150
        %v1179 = vmul.f32 %v1101, %v1151
        %v1180 = vmul.f32 %v1104, %v1152
        %v1181 = vmul.f32 %v1109, %v1153
        %v1182 = vmul.f32 %v1112, %v1154
        %v1183 = vmul.f32 %v1117, %v1155
        %v1184 = vmul.f32 %v1120, %v1156
        %v1185 = vmul.f32 %v1125, %v1157
        %v1186 = vmul.f32 %v1128, %v1158
        %v1187 = vsel %vm943, %v1159, 0.0
        %1188 = vadd.xlane.f32.xlu0 %v1187
        %v1189 = vpop.xlane.xlu0 %1188
        %v1190 = vsel %vm943, %v1160, 0.0
        %1191 = vadd.xlane.f32.xlu0 %v1190
        %v1192 = vpop.xlane.xlu0 %1191
        %v1193 = vsel %vm943, %v1161, 0.0
        %1194 = vadd.xlane.f32.xlu0 %v1193
        %v1195 = vpop.xlane.xlu0 %1194
        %v1196 = vsel %vm943, %v1162, 0.0
        %1197 = vadd.xlane.f32.xlu0 %v1196
        %v1198 = vpop.xlane.xlu0 %1197
        %v1199 = vsel %vm943, %v1163, 0.0
        %1200 = vadd.xlane.f32.xlu0 %v1199
        %v1201 = vpop.xlane.xlu0 %1200
        %v1202 = vsel %vm943, %v1164, 0.0
        %1203 = vadd.xlane.f32.xlu0 %v1202
        %v1204 = vpop.xlane.xlu0 %1203
        %v1205 = vsel %vm943, %v1165, 0.0
        %1206 = vadd.xlane.f32.xlu0 %v1205
        %v1207 = vpop.xlane.xlu0 %1206
        %v1208 = vsel %vm943, %v1166, 0.0
        %1209 = vadd.xlane.f32.xlu0 %v1208
        %v1210 = vpop.xlane.xlu0 %1209
        %v1211 = vsel %vm943, %v1167, 0.0
        %1212 = vadd.xlane.f32.xlu0 %v1211
        %v1213 = vpop.xlane.xlu0 %1212
        %v1214 = vsel %vm943, %v1168, 0.0
        %1215 = vadd.xlane.f32.xlu0 %v1214
        %v1216 = vpop.xlane.xlu0 %1215
        %v1217 = vsel %vm943, %v1169, 0.0
        %1218 = vadd.xlane.f32.xlu0 %v1217
        %v1219 = vpop.xlane.xlu0 %1218
        %v1220 = vsel %vm943, %v1170, 0.0
        %1221 = vadd.xlane.f32.xlu0 %v1220
        %v1222 = vpop.xlane.xlu0 %1221
        %v1223 = vsel %vm943, %v1171, 0.0
        %1224 = vadd.xlane.f32.xlu0 %v1223
        %v1225 = vpop.xlane.xlu0 %1224
        %v1226 = vsel %vm943, %v1172, 0.0
        %1227 = vadd.xlane.f32.xlu0 %v1226
        %v1228 = vpop.xlane.xlu0 %1227
        %v1229 = vsel %vm943, %v1173, 0.0
        %1230 = vadd.xlane.f32.xlu0 %v1229
        %v1231 = vpop.xlane.xlu0 %1230
        %v1232 = vsel %vm943, %v1174, 0.0
        %1233 = vadd.xlane.f32.xlu0 %v1232
        %v1234 = vpop.xlane.xlu0 %1233
        %v1235 = vsel %vm943, %v1175, 0.0
        %1236 = vadd.xlane.f32.xlu0 %v1235
        %v1237 = vpop.xlane.xlu0 %1236
        %v1238 = vsel %vm943, %v1176, 0.0
        %1239 = vadd.xlane.f32.xlu0 %v1238
        %v1240 = vpop.xlane.xlu0 %1239
        %v1241 = vsel %vm943, %v1177, 0.0
        %1242 = vadd.xlane.f32.xlu0 %v1241
        %v1243 = vpop.xlane.xlu0 %1242
        %v1244 = vsel %vm943, %v1178, 0.0
        %1245 = vadd.xlane.f32.xlu0 %v1244
        %v1246 = vpop.xlane.xlu0 %1245
        %v1247 = vsel %vm943, %v1179, 0.0
        %1248 = vadd.xlane.f32.xlu0 %v1247
        %v1249 = vpop.xlane.xlu0 %1248
        %v1250 = vsel %vm943, %v1180, 0.0
        %1251 = vadd.xlane.f32.xlu0 %v1250
        %v1252 = vpop.xlane.xlu0 %1251
        %v1253 = vsel %vm943, %v1181, 0.0
        %1254 = vadd.xlane.f32.xlu0 %v1253
        %v1255 = vpop.xlane.xlu0 %1254
        %v1256 = vsel %vm943, %v1182, 0.0
        %1257 = vadd.xlane.f32.xlu0 %v1256
        %v1258 = vpop.xlane.xlu0 %1257
        %v1259 = vsel %vm943, %v1183, 0.0
        %1260 = vadd.xlane.f32.xlu0 %v1259
        %v1261 = vpop.xlane.xlu0 %1260
        %v1262 = vsel %vm943, %v1184, 0.0
        %1263 = vadd.xlane.f32.xlu0 %v1262
        %v1264 = vpop.xlane.xlu0 %1263
        %v1265 = vsel %vm943, %v1185, 0.0
        %1266 = vadd.xlane.f32.xlu0 %v1265
        %v1267 = vpop.xlane.xlu0 %1266
        %v1268 = vsel %vm943, %v1186, 0.0
        %1269 = vadd.xlane.f32.xlu0 %v1268
        %v1270 = vpop.xlane.xlu0 %1269
        %s1271 = scalar_lea.vmem %s776, 224 [#allocation2]
        %v1272 = vld [vmem:[%s1271] sm:$0xff]
        %v1273 = vld [vmem:[%s1271 + $0x8] sm:$0xff]
        %v1274 = vld [vmem:[%s1271 + $0x10] sm:$0xff]
        %v1275 = vld [vmem:[%s1271 + $0x18] sm:$0xff]
        %v1276 = vld [vmem:[%s1271 + $0x20] sm:$0xff]
        %v1277 = vld [vmem:[%s1271 + $0x28] sm:$0xff]
        %v1278 = vld [vmem:[%s1271 + $0x30] sm:$0xff]
        %v1279 = vld [vmem:[%s1271 + $0x38] sm:$0xff]
        %v1280 = vld [vmem:[%s1271 + $0x40] sm:$0xff]
        %v1281 = vld [vmem:[%s1271 + $0x48] sm:$0xff]
        %v1282 = vld [vmem:[%s1271 + $0x50] sm:$0xff]
        %v1283 = vld [vmem:[%s1271 + $0x58] sm:$0xff]
        %v1284 = vld [vmem:[%s1271 + $0x60] sm:$0xff]
        %v1285 = vld [vmem:[%s1271 + $0x68] sm:$0xff]
        %v1286 = vld [vmem:[%s1271 + $0x70] sm:$0xff]
        %v1287 = vld [vmem:[%s1271 + $0x78] sm:$0xff]
        %v1288 = vld [vmem:[%s1271 + $0x80] sm:$0xff]
        %v1289 = vld [vmem:[%s1271 + $0x88] sm:$0xff]
        %v1290 = vld [vmem:[%s1271 + $0x90] sm:$0xff]
        %v1291 = vld [vmem:[%s1271 + $0x98] sm:$0xff]
        %v1292 = vld [vmem:[%s1271 + $0xa0] sm:$0xff]
        %v1293 = vld [vmem:[%s1271 + $0xa8] sm:$0xff]
        %v1294 = vld [vmem:[%s1271 + $0xb0] sm:$0xff]
        %v1295 = vld [vmem:[%s1271 + $0xb8] sm:$0xff]
        %v1296 = vld [vmem:[%s1271 + $0xc0] sm:$0xff]
        %v1297 = vld [vmem:[%s1271 + $0xc8] sm:$0xff]
        %v1298 = vld [vmem:[%s1271 + $0xd0] sm:$0xff]
        %v1299 = vld [vmem:[%s1271 + $0xd8] sm:$0xff]
        %v1300 = vmul.f32 %v1021, %v1272
        %v1301 = vmul.f32 %v1024, %v1273
        %v1302 = vmul.f32 %v1029, %v1274
        %v1303 = vmul.f32 %v1032, %v1275
        %v1304 = vmul.f32 %v1037, %v1276
        %v1305 = vmul.f32 %v1040, %v1277
        %v1306 = vmul.f32 %v1045, %v1278
        %v1307 = vmul.f32 %v1048, %v1279
        %v1308 = vmul.f32 %v1053, %v1280
        %v1309 = vmul.f32 %v1056, %v1281
        %v1310 = vmul.f32 %v1061, %v1282
        %v1311 = vmul.f32 %v1064, %v1283
        %v1312 = vmul.f32 %v1069, %v1284
        %v1313 = vmul.f32 %v1072, %v1285
        %v1314 = vmul.f32 %v1077, %v1286
        %v1315 = vmul.f32 %v1080, %v1287
        %v1316 = vmul.f32 %v1085, %v1288
        %v1317 = vmul.f32 %v1088, %v1289
        %v1318 = vmul.f32 %v1093, %v1290
        %v1319 = vmul.f32 %v1096, %v1291
        %v1320 = vmul.f32 %v1101, %v1292
        %v1321 = vmul.f32 %v1104, %v1293
        %v1322 = vmul.f32 %v1109, %v1294
        %v1323 = vmul.f32 %v1112, %v1295
        %v1324 = vmul.f32 %v1117, %v1296
        %v1325 = vmul.f32 %v1120, %v1297
        %v1326 = vmul.f32 %v1125, %v1298
        %v1327 = vmul.f32 %v1128, %v1299
        %v1328 = vsel %vm943, %v1300, 0.0
        %1329 = vadd.xlane.f32.xlu0 %v1328
        %v1330 = vpop.xlane.xlu0 %1329
        %v1331 = vsel %vm943, %v1301, 0.0
        %1332 = vadd.xlane.f32.xlu0 %v1331
        %v1333 = vpop.xlane.xlu0 %1332
        %v1334 = vsel %vm943, %v1302, 0.0
        %1335 = vadd.xlane.f32.xlu0 %v1334
        %v1336 = vpop.xlane.xlu0 %1335
        %v1337 = vsel %vm943, %v1303, 0.0
        %1338 = vadd.xlane.f32.xlu0 %v1337
        %v1339 = vpop.xlane.xlu0 %1338
        %v1340 = vsel %vm943, %v1304, 0.0
        %1341 = vadd.xlane.f32.xlu0 %v1340
        %v1342 = vpop.xlane.xlu0 %1341
        %v1343 = vsel %vm943, %v1305, 0.0
        %1344 = vadd.xlane.f32.xlu0 %v1343
        %v1345 = vpop.xlane.xlu0 %1344
        %v1346 = vsel %vm943, %v1306, 0.0
        %1347 = vadd.xlane.f32.xlu0 %v1346
        %v1348 = vpop.xlane.xlu0 %1347
        %v1349 = vsel %vm943, %v1307, 0.0
        %1350 = vadd.xlane.f32.xlu0 %v1349
        %v1351 = vpop.xlane.xlu0 %1350
        %v1352 = vsel %vm943, %v1308, 0.0
        %1353 = vadd.xlane.f32.xlu0 %v1352
        %v1354 = vpop.xlane.xlu0 %1353
        %v1355 = vsel %vm943, %v1309, 0.0
        %1356 = vadd.xlane.f32.xlu0 %v1355
        %v1357 = vpop.xlane.xlu0 %1356
        %v1358 = vsel %vm943, %v1310, 0.0
        %1359 = vadd.xlane.f32.xlu0 %v1358
        %v1360 = vpop.xlane.xlu0 %1359
        %v1361 = vsel %vm943, %v1311, 0.0
        %1362 = vadd.xlane.f32.xlu0 %v1361
        %v1363 = vpop.xlane.xlu0 %1362
        %v1364 = vsel %vm943, %v1312, 0.0
        %1365 = vadd.xlane.f32.xlu0 %v1364
        %v1366 = vpop.xlane.xlu0 %1365
        %v1367 = vsel %vm943, %v1313, 0.0
        %1368 = vadd.xlane.f32.xlu0 %v1367
        %v1369 = vpop.xlane.xlu0 %1368
        %v1370 = vsel %vm943, %v1314, 0.0
        %1371 = vadd.xlane.f32.xlu0 %v1370
        %v1372 = vpop.xlane.xlu0 %1371
        %v1373 = vsel %vm943, %v1315, 0.0
        %1374 = vadd.xlane.f32.xlu0 %v1373
        %v1375 = vpop.xlane.xlu0 %1374
        %v1376 = vsel %vm943, %v1316, 0.0
        %1377 = vadd.xlane.f32.xlu0 %v1376
        %v1378 = vpop.xlane.xlu0 %1377
        %v1379 = vsel %vm943, %v1317, 0.0
        %1380 = vadd.xlane.f32.xlu0 %v1379
        %v1381 = vpop.xlane.xlu0 %1380
        %v1382 = vsel %vm943, %v1318, 0.0
        %1383 = vadd.xlane.f32.xlu0 %v1382
        %v1384 = vpop.xlane.xlu0 %1383
        %v1385 = vsel %vm943, %v1319, 0.0
        %1386 = vadd.xlane.f32.xlu0 %v1385
        %v1387 = vpop.xlane.xlu0 %1386
        %v1388 = vsel %vm943, %v1320, 0.0
        %1389 = vadd.xlane.f32.xlu0 %v1388
        %v1390 = vpop.xlane.xlu0 %1389
        %v1391 = vsel %vm943, %v1321, 0.0
        %1392 = vadd.xlane.f32.xlu0 %v1391
        %v1393 = vpop.xlane.xlu0 %1392
        %v1394 = vsel %vm943, %v1322, 0.0
        %1395 = vadd.xlane.f32.xlu0 %v1394
        %v1396 = vpop.xlane.xlu0 %1395
        %v1397 = vsel %vm943, %v1323, 0.0
        %1398 = vadd.xlane.f32.xlu0 %v1397
        %v1399 = vpop.xlane.xlu0 %1398
        %v1400 = vsel %vm943, %v1324, 0.0
        %1401 = vadd.xlane.f32.xlu0 %v1400
        %v1402 = vpop.xlane.xlu0 %1401
        %v1403 = vsel %vm943, %v1325, 0.0
        %1404 = vadd.xlane.f32.xlu0 %v1403
        %v1405 = vpop.xlane.xlu0 %1404
        %v1406 = vsel %vm943, %v1326, 0.0
        %1407 = vadd.xlane.f32.xlu0 %v1406
        %v1408 = vpop.xlane.xlu0 %1407
        %v1409 = vsel %vm943, %v1327, 0.0
        %1410 = vadd.xlane.f32.xlu0 %v1409
        %v1411 = vpop.xlane.xlu0 %1410
        %s1412 = scalar_lea.vmem %s776, 448 [#allocation2]
        %v1413 = vld [vmem:[%s1412] sm:$0xff]
        %v1414 = vld [vmem:[%s1412 + $0x8] sm:$0xff]
        %v1415 = vld [vmem:[%s1412 + $0x10] sm:$0xff]
        %v1416 = vld [vmem:[%s1412 + $0x18] sm:$0xff]
        %v1417 = vld [vmem:[%s1412 + $0x20] sm:$0xff]
        %v1418 = vld [vmem:[%s1412 + $0x28] sm:$0xff]
        %v1419 = vld [vmem:[%s1412 + $0x30] sm:$0xff]
        %v1420 = vld [vmem:[%s1412 + $0x38] sm:$0xff]
        %v1421 = vld [vmem:[%s1412 + $0x40] sm:$0xff]
        %v1422 = vld [vmem:[%s1412 + $0x48] sm:$0xff]
        %v1423 = vld [vmem:[%s1412 + $0x50] sm:$0xff]
        %v1424 = vld [vmem:[%s1412 + $0x58] sm:$0xff]
        %v1425 = vld [vmem:[%s1412 + $0x60] sm:$0xff]
        %v1426 = vld [vmem:[%s1412 + $0x68] sm:$0xff]
        %v1427 = vld [vmem:[%s1412 + $0x70] sm:$0xff]
        %v1428 = vld [vmem:[%s1412 + $0x78] sm:$0xff]
        %v1429 = vld [vmem:[%s1412 + $0x80] sm:$0xff]
        %v1430 = vld [vmem:[%s1412 + $0x88] sm:$0xff]
        %v1431 = vld [vmem:[%s1412 + $0x90] sm:$0xff]
        %v1432 = vld [vmem:[%s1412 + $0x98] sm:$0xff]
        %v1433 = vld [vmem:[%s1412 + $0xa0] sm:$0xff]
        %v1434 = vld [vmem:[%s1412 + $0xa8] sm:$0xff]
        %v1435 = vld [vmem:[%s1412 + $0xb0] sm:$0xff]
        %v1436 = vld [vmem:[%s1412 + $0xb8] sm:$0xff]
        %v1437 = vld [vmem:[%s1412 + $0xc0] sm:$0xff]
        %v1438 = vld [vmem:[%s1412 + $0xc8] sm:$0xff]
        %v1439 = vld [vmem:[%s1412 + $0xd0] sm:$0xff]
        %v1440 = vld [vmem:[%s1412 + $0xd8] sm:$0xff]
        %v1441 = vmul.f32 %v1021, %v1413
        %v1442 = vmul.f32 %v1024, %v1414
        %v1443 = vmul.f32 %v1029, %v1415
        %v1444 = vmul.f32 %v1032, %v1416
        %v1445 = vmul.f32 %v1037, %v1417
        %v1446 = vmul.f32 %v1040, %v1418
        %v1447 = vmul.f32 %v1045, %v1419
        %v1448 = vmul.f32 %v1048, %v1420
        %v1449 = vmul.f32 %v1053, %v1421
        %v1450 = vmul.f32 %v1056, %v1422
        %v1451 = vmul.f32 %v1061, %v1423
        %v1452 = vmul.f32 %v1064, %v1424
        %v1453 = vmul.f32 %v1069, %v1425
        %v1454 = vmul.f32 %v1072, %v1426
        %v1455 = vmul.f32 %v1077, %v1427
        %v1456 = vmul.f32 %v1080, %v1428
        %v1457 = vmul.f32 %v1085, %v1429
        %v1458 = vmul.f32 %v1088, %v1430
        %v1459 = vmul.f32 %v1093, %v1431
        %v1460 = vmul.f32 %v1096, %v1432
        %v1461 = vmul.f32 %v1101, %v1433
        %v1462 = vmul.f32 %v1104, %v1434
        %v1463 = vmul.f32 %v1109, %v1435
        %v1464 = vmul.f32 %v1112, %v1436
        %v1465 = vmul.f32 %v1117, %v1437
        %v1466 = vmul.f32 %v1120, %v1438
        %v1467 = vmul.f32 %v1125, %v1439
        %v1468 = vmul.f32 %v1128, %v1440
        %v1469 = vsel %vm943, %v1441, 0.0
        %1470 = vadd.xlane.f32.xlu0 %v1469
        %v1471 = vpop.xlane.xlu0 %1470
        %v1472 = vsel %vm943, %v1442, 0.0
        %1473 = vadd.xlane.f32.xlu0 %v1472
        %v1474 = vpop.xlane.xlu0 %1473
        %v1475 = vsel %vm943, %v1443, 0.0
        %1476 = vadd.xlane.f32.xlu0 %v1475
        %v1477 = vpop.xlane.xlu0 %1476
        %v1478 = vsel %vm943, %v1444, 0.0
        %1479 = vadd.xlane.f32.xlu0 %v1478
        %v1480 = vpop.xlane.xlu0 %1479
        %v1481 = vsel %vm943, %v1445, 0.0
        %1482 = vadd.xlane.f32.xlu0 %v1481
        %v1483 = vpop.xlane.xlu0 %1482
        %v1484 = vsel %vm943, %v1446, 0.0
        %1485 = vadd.xlane.f32.xlu0 %v1484
        %v1486 = vpop.xlane.xlu0 %1485
        %v1487 = vsel %vm943, %v1447, 0.0
        %1488 = vadd.xlane.f32.xlu0 %v1487
        %v1489 = vpop.xlane.xlu0 %1488
        %v1490 = vsel %vm943, %v1448, 0.0
        %1491 = vadd.xlane.f32.xlu0 %v1490
        %v1492 = vpop.xlane.xlu0 %1491
        %v1493 = vsel %vm943, %v1449, 0.0
        %1494 = vadd.xlane.f32.xlu0 %v1493
        %v1495 = vpop.xlane.xlu0 %1494
        %v1496 = vsel %vm943, %v1450, 0.0
        %1497 = vadd.xlane.f32.xlu0 %v1496
        %v1498 = vpop.xlane.xlu0 %1497
        %v1499 = vsel %vm943, %v1451, 0.0
        %1500 = vadd.xlane.f32.xlu0 %v1499
        %v1501 = vpop.xlane.xlu0 %1500
        %v1502 = vsel %vm943, %v1452, 0.0
        %1503 = vadd.xlane.f32.xlu0 %v1502
        %v1504 = vpop.xlane.xlu0 %1503
        %v1505 = vsel %vm943, %v1453, 0.0
        %1506 = vadd.xlane.f32.xlu0 %v1505
        %v1507 = vpop.xlane.xlu0 %1506
        %v1508 = vsel %vm943, %v1454, 0.0
        %1509 = vadd.xlane.f32.xlu0 %v1508
        %v1510 = vpop.xlane.xlu0 %1509
        %v1511 = vsel %vm943, %v1455, 0.0
        %1512 = vadd.xlane.f32.xlu0 %v1511
        %v1513 = vpop.xlane.xlu0 %1512
        %v1514 = vsel %vm943, %v1456, 0.0
        %1515 = vadd.xlane.f32.xlu0 %v1514
        %v1516 = vpop.xlane.xlu0 %1515
        %v1517 = vsel %vm943, %v1457, 0.0
        %1518 = vadd.xlane.f32.xlu0 %v1517
        %v1519 = vpop.xlane.xlu0 %1518
        %v1520 = vsel %vm943, %v1458, 0.0
        %1521 = vadd.xlane.f32.xlu0 %v1520
        %v1522 = vpop.xlane.xlu0 %1521
        %v1523 = vsel %vm943, %v1459, 0.0
        %1524 = vadd.xlane.f32.xlu0 %v1523
        %v1525 = vpop.xlane.xlu0 %1524
        %v1526 = vsel %vm943, %v1460, 0.0
        %1527 = vadd.xlane.f32.xlu0 %v1526
        %v1528 = vpop.xlane.xlu0 %1527
        %v1529 = vsel %vm943, %v1461, 0.0
        %1530 = vadd.xlane.f32.xlu0 %v1529
        %v1531 = vpop.xlane.xlu0 %1530
        %v1532 = vsel %vm943, %v1462, 0.0
        %1533 = vadd.xlane.f32.xlu0 %v1532
        %v1534 = vpop.xlane.xlu0 %1533
        %v1535 = vsel %vm943, %v1463, 0.0
        %1536 = vadd.xlane.f32.xlu0 %v1535
        %v1537 = vpop.xlane.xlu0 %1536
        %v1538 = vsel %vm943, %v1464, 0.0
        %1539 = vadd.xlane.f32.xlu0 %v1538
        %v1540 = vpop.xlane.xlu0 %1539
        %v1541 = vsel %vm943, %v1465, 0.0
        %1542 = vadd.xlane.f32.xlu0 %v1541
        %v1543 = vpop.xlane.xlu0 %1542
        %v1544 = vsel %vm943, %v1466, 0.0
        %1545 = vadd.xlane.f32.xlu0 %v1544
        %v1546 = vpop.xlane.xlu0 %1545
        %v1547 = vsel %vm943, %v1467, 0.0
        %1548 = vadd.xlane.f32.xlu0 %v1547
        %v1549 = vpop.xlane.xlu0 %1548
        %v1550 = vsel %vm943, %v1468, 0.0
        %1551 = vadd.xlane.f32.xlu0 %v1550
        %v1552 = vpop.xlane.xlu0 %1551
        %s1553 = scalar_lea.vmem %s776, 672 [#allocation2]
        %v1554 = vld [vmem:[%s1553] sm:$0xff]
        %v1555 = vld [vmem:[%s1553 + $0x8] sm:$0xff]
        %v1556 = vld [vmem:[%s1553 + $0x10] sm:$0xff]
        %v1557 = vld [vmem:[%s1553 + $0x18] sm:$0xff]
        %v1558 = vld [vmem:[%s1553 + $0x20] sm:$0xff]
        %v1559 = vld [vmem:[%s1553 + $0x28] sm:$0xff]
        %v1560 = vld [vmem:[%s1553 + $0x30] sm:$0xff]
        %v1561 = vld [vmem:[%s1553 + $0x38] sm:$0xff]
        %v1562 = vld [vmem:[%s1553 + $0x40] sm:$0xff]
        %v1563 = vld [vmem:[%s1553 + $0x48] sm:$0xff]
        %v1564 = vld [vmem:[%s1553 + $0x50] sm:$0xff]
        %v1565 = vld [vmem:[%s1553 + $0x58] sm:$0xff]
        %v1566 = vld [vmem:[%s1553 + $0x60] sm:$0xff]
        %v1567 = vld [vmem:[%s1553 + $0x68] sm:$0xff]
        %v1568 = vld [vmem:[%s1553 + $0x70] sm:$0xff]
        %v1569 = vld [vmem:[%s1553 + $0x78] sm:$0xff]
        %v1570 = vld [vmem:[%s1553 + $0x80] sm:$0xff]
        %v1571 = vld [vmem:[%s1553 + $0x88] sm:$0xff]
        %v1572 = vld [vmem:[%s1553 + $0x90] sm:$0xff]
        %v1573 = vld [vmem:[%s1553 + $0x98] sm:$0xff]
        %v1574 = vld [vmem:[%s1553 + $0xa0] sm:$0xff]
        %v1575 = vld [vmem:[%s1553 + $0xa8] sm:$0xff]
        %v1576 = vld [vmem:[%s1553 + $0xb0] sm:$0xff]
        %v1577 = vld [vmem:[%s1553 + $0xb8] sm:$0xff]
        %v1578 = vld [vmem:[%s1553 + $0xc0] sm:$0xff]
        %v1579 = vld [vmem:[%s1553 + $0xc8] sm:$0xff]
        %v1580 = vld [vmem:[%s1553 + $0xd0] sm:$0xff]
        %v1581 = vld [vmem:[%s1553 + $0xd8] sm:$0xff]
        %v1582 = vmul.f32 %v1021, %v1554
        %v1583 = vmul.f32 %v1024, %v1555
        %v1584 = vmul.f32 %v1029, %v1556
        %v1585 = vmul.f32 %v1032, %v1557
        %v1586 = vmul.f32 %v1037, %v1558
        %v1587 = vmul.f32 %v1040, %v1559
        %v1588 = vmul.f32 %v1045, %v1560
        %v1589 = vmul.f32 %v1048, %v1561
        %v1590 = vmul.f32 %v1053, %v1562
        %v1591 = vmul.f32 %v1056, %v1563
        %v1592 = vmul.f32 %v1061, %v1564
        %v1593 = vmul.f32 %v1064, %v1565
        %v1594 = vmul.f32 %v1069, %v1566
        %v1595 = vmul.f32 %v1072, %v1567
        %v1596 = vmul.f32 %v1077, %v1568
        %v1597 = vmul.f32 %v1080, %v1569
        %v1598 = vmul.f32 %v1085, %v1570
        %v1599 = vmul.f32 %v1088, %v1571
        %v1600 = vmul.f32 %v1093, %v1572
        %v1601 = vmul.f32 %v1096, %v1573
        %v1602 = vmul.f32 %v1101, %v1574
        %v1603 = vmul.f32 %v1104, %v1575
        %v1604 = vmul.f32 %v1109, %v1576
        %v1605 = vmul.f32 %v1112, %v1577
        %v1606 = vmul.f32 %v1117, %v1578
        %v1607 = vmul.f32 %v1120, %v1579
        %v1608 = vmul.f32 %v1125, %v1580
        %v1609 = vmul.f32 %v1128, %v1581
        %v1610 = vsel %vm943, %v1582, 0.0
        %1611 = vadd.xlane.f32.xlu0 %v1610
        %v1612 = vpop.xlane.xlu0 %1611
        %v1613 = vsel %vm943, %v1583, 0.0
        %1614 = vadd.xlane.f32.xlu0 %v1613
        %v1615 = vpop.xlane.xlu0 %1614
        %v1616 = vsel %vm943, %v1584, 0.0
        %1617 = vadd.xlane.f32.xlu0 %v1616
        %v1618 = vpop.xlane.xlu0 %1617
        %v1619 = vsel %vm943, %v1585, 0.0
        %1620 = vadd.xlane.f32.xlu0 %v1619
        %v1621 = vpop.xlane.xlu0 %1620
        %v1622 = vsel %vm943, %v1586, 0.0
        %1623 = vadd.xlane.f32.xlu0 %v1622
        %v1624 = vpop.xlane.xlu0 %1623
        %v1625 = vsel %vm943, %v1587, 0.0
        %1626 = vadd.xlane.f32.xlu0 %v1625
        %v1627 = vpop.xlane.xlu0 %1626
        %v1628 = vsel %vm943, %v1588, 0.0
        %1629 = vadd.xlane.f32.xlu0 %v1628
        %v1630 = vpop.xlane.xlu0 %1629
        %v1631 = vsel %vm943, %v1589, 0.0
        %1632 = vadd.xlane.f32.xlu0 %v1631
        %v1633 = vpop.xlane.xlu0 %1632
        %v1634 = vsel %vm943, %v1590, 0.0
        %1635 = vadd.xlane.f32.xlu0 %v1634
        %v1636 = vpop.xlane.xlu0 %1635
        %v1637 = vsel %vm943, %v1591, 0.0
        %1638 = vadd.xlane.f32.xlu0 %v1637
        %v1639 = vpop.xlane.xlu0 %1638
        %v1640 = vsel %vm943, %v1592, 0.0
        %1641 = vadd.xlane.f32.xlu0 %v1640
        %v1642 = vpop.xlane.xlu0 %1641
        %v1643 = vsel %vm943, %v1593, 0.0
        %1644 = vadd.xlane.f32.xlu0 %v1643
        %v1645 = vpop.xlane.xlu0 %1644
        %v1646 = vsel %vm943, %v1594, 0.0
        %1647 = vadd.xlane.f32.xlu0 %v1646
        %v1648 = vpop.xlane.xlu0 %1647
        %v1649 = vsel %vm943, %v1595, 0.0
        %1650 = vadd.xlane.f32.xlu0 %v1649
        %v1651 = vpop.xlane.xlu0 %1650
        %v1652 = vsel %vm943, %v1596, 0.0
        %1653 = vadd.xlane.f32.xlu0 %v1652
        %v1654 = vpop.xlane.xlu0 %1653
        %v1655 = vsel %vm943, %v1597, 0.0
        %1656 = vadd.xlane.f32.xlu0 %v1655
        %v1657 = vpop.xlane.xlu0 %1656
        %v1658 = vsel %vm943, %v1598, 0.0
        %1659 = vadd.xlane.f32.xlu0 %v1658
        %v1660 = vpop.xlane.xlu0 %1659
        %v1661 = vsel %vm943, %v1599, 0.0
        %1662 = vadd.xlane.f32.xlu0 %v1661
        %v1663 = vpop.xlane.xlu0 %1662
        %v1664 = vsel %vm943, %v1600, 0.0
        %1665 = vadd.xlane.f32.xlu0 %v1664
        %v1666 = vpop.xlane.xlu0 %1665
        %v1667 = vsel %vm943, %v1601, 0.0
        %1668 = vadd.xlane.f32.xlu0 %v1667
        %v1669 = vpop.xlane.xlu0 %1668
        %v1670 = vsel %vm943, %v1602, 0.0
        %1671 = vadd.xlane.f32.xlu0 %v1670
        %v1672 = vpop.xlane.xlu0 %1671
        %v1673 = vsel %vm943, %v1603, 0.0
        %1674 = vadd.xlane.f32.xlu0 %v1673
        %v1675 = vpop.xlane.xlu0 %1674
        %v1676 = vsel %vm943, %v1604, 0.0
        %1677 = vadd.xlane.f32.xlu0 %v1676
        %v1678 = vpop.xlane.xlu0 %1677
        %v1679 = vsel %vm943, %v1605, 0.0
        %1680 = vadd.xlane.f32.xlu0 %v1679
        %v1681 = vpop.xlane.xlu0 %1680
        %v1682 = vsel %vm943, %v1606, 0.0
        %1683 = vadd.xlane.f32.xlu0 %v1682
        %v1684 = vpop.xlane.xlu0 %1683
        %v1685 = vsel %vm943, %v1607, 0.0
        %1686 = vadd.xlane.f32.xlu0 %v1685
        %v1687 = vpop.xlane.xlu0 %1686
        %v1688 = vsel %vm943, %v1608, 0.0
        %1689 = vadd.xlane.f32.xlu0 %v1688
        %v1690 = vpop.xlane.xlu0 %1689
        %v1691 = vsel %vm943, %v1609, 0.0
        %1692 = vadd.xlane.f32.xlu0 %v1691
        %v1693 = vpop.xlane.xlu0 %1692
        %s1694 = scalar_lea.vmem %s776, 896 [#allocation2]
        %v1695 = vld [vmem:[%s1694] sm:$0xff]
        %v1696 = vld [vmem:[%s1694 + $0x8] sm:$0xff]
        %v1697 = vld [vmem:[%s1694 + $0x10] sm:$0xff]
        %v1698 = vld [vmem:[%s1694 + $0x18] sm:$0xff]
        %v1699 = vld [vmem:[%s1694 + $0x20] sm:$0xff]
        %v1700 = vld [vmem:[%s1694 + $0x28] sm:$0xff]
        %v1701 = vld [vmem:[%s1694 + $0x30] sm:$0xff]
        %v1702 = vld [vmem:[%s1694 + $0x38] sm:$0xff]
        %v1703 = vld [vmem:[%s1694 + $0x40] sm:$0xff]
        %v1704 = vld [vmem:[%s1694 + $0x48] sm:$0xff]
        %v1705 = vld [vmem:[%s1694 + $0x50] sm:$0xff]
        %v1706 = vld [vmem:[%s1694 + $0x58] sm:$0xff]
        %v1707 = vld [vmem:[%s1694 + $0x60] sm:$0xff]
        %v1708 = vld [vmem:[%s1694 + $0x68] sm:$0xff]
        %v1709 = vld [vmem:[%s1694 + $0x70] sm:$0xff]
        %v1710 = vld [vmem:[%s1694 + $0x78] sm:$0xff]
        %v1711 = vld [vmem:[%s1694 + $0x80] sm:$0xff]
        %v1712 = vld [vmem:[%s1694 + $0x88] sm:$0xff]
        %v1713 = vld [vmem:[%s1694 + $0x90] sm:$0xff]
        %v1714 = vld [vmem:[%s1694 + $0x98] sm:$0xff]
        %v1715 = vld [vmem:[%s1694 + $0xa0] sm:$0xff]
        %v1716 = vld [vmem:[%s1694 + $0xa8] sm:$0xff]
        %v1717 = vld [vmem:[%s1694 + $0xb0] sm:$0xff]
        %v1718 = vld [vmem:[%s1694 + $0xb8] sm:$0xff]
        %v1719 = vld [vmem:[%s1694 + $0xc0] sm:$0xff]
        %v1720 = vld [vmem:[%s1694 + $0xc8] sm:$0xff]
        %v1721 = vld [vmem:[%s1694 + $0xd0] sm:$0xff]
        %v1722 = vld [vmem:[%s1694 + $0xd8] sm:$0xff]
        %v1723 = vmul.f32 %v1021, %v1695
        %v1724 = vmul.f32 %v1024, %v1696
        %v1725 = vmul.f32 %v1029, %v1697
        %v1726 = vmul.f32 %v1032, %v1698
        %v1727 = vmul.f32 %v1037, %v1699
        %v1728 = vmul.f32 %v1040, %v1700
        %v1729 = vmul.f32 %v1045, %v1701
        %v1730 = vmul.f32 %v1048, %v1702
        %v1731 = vmul.f32 %v1053, %v1703
        %v1732 = vmul.f32 %v1056, %v1704
        %v1733 = vmul.f32 %v1061, %v1705
        %v1734 = vmul.f32 %v1064, %v1706
        %v1735 = vmul.f32 %v1069, %v1707
        %v1736 = vmul.f32 %v1072, %v1708
        %v1737 = vmul.f32 %v1077, %v1709
        %v1738 = vmul.f32 %v1080, %v1710
        %v1739 = vmul.f32 %v1085, %v1711
        %v1740 = vmul.f32 %v1088, %v1712
        %v1741 = vmul.f32 %v1093, %v1713
        %v1742 = vmul.f32 %v1096, %v1714
        %v1743 = vmul.f32 %v1101, %v1715
        %v1744 = vmul.f32 %v1104, %v1716
        %v1745 = vmul.f32 %v1109, %v1717
        %v1746 = vmul.f32 %v1112, %v1718
        %v1747 = vmul.f32 %v1117, %v1719
        %v1748 = vmul.f32 %v1120, %v1720
        %v1749 = vmul.f32 %v1125, %v1721
        %v1750 = vmul.f32 %v1128, %v1722
        %v1751 = vsel %vm943, %v1723, 0.0
        %1752 = vadd.xlane.f32.xlu0 %v1751
        %v1753 = vpop.xlane.xlu0 %1752
        %v1754 = vsel %vm943, %v1724, 0.0
        %1755 = vadd.xlane.f32.xlu0 %v1754
        %v1756 = vpop.xlane.xlu0 %1755
        %v1757 = vsel %vm943, %v1725, 0.0
        %1758 = vadd.xlane.f32.xlu0 %v1757
        %v1759 = vpop.xlane.xlu0 %1758
        %v1760 = vsel %vm943, %v1726, 0.0
        %1761 = vadd.xlane.f32.xlu0 %v1760
        %v1762 = vpop.xlane.xlu0 %1761
        %v1763 = vsel %vm943, %v1727, 0.0
        %1764 = vadd.xlane.f32.xlu0 %v1763
        %v1765 = vpop.xlane.xlu0 %1764
        %v1766 = vsel %vm943, %v1728, 0.0
        %1767 = vadd.xlane.f32.xlu0 %v1766
        %v1768 = vpop.xlane.xlu0 %1767
        %v1769 = vsel %vm943, %v1729, 0.0
        %1770 = vadd.xlane.f32.xlu0 %v1769
        %v1771 = vpop.xlane.xlu0 %1770
        %v1772 = vsel %vm943, %v1730, 0.0
        %1773 = vadd.xlane.f32.xlu0 %v1772
        %v1774 = vpop.xlane.xlu0 %1773
        %v1775 = vsel %vm943, %v1731, 0.0
        %1776 = vadd.xlane.f32.xlu0 %v1775
        %v1777 = vpop.xlane.xlu0 %1776
        %v1778 = vsel %vm943, %v1732, 0.0
        %1779 = vadd.xlane.f32.xlu0 %v1778
        %v1780 = vpop.xlane.xlu0 %1779
        %v1781 = vsel %vm943, %v1733, 0.0
        %1782 = vadd.xlane.f32.xlu0 %v1781
        %v1783 = vpop.xlane.xlu0 %1782
        %v1784 = vsel %vm943, %v1734, 0.0
        %1785 = vadd.xlane.f32.xlu0 %v1784
        %v1786 = vpop.xlane.xlu0 %1785
        %v1787 = vsel %vm943, %v1735, 0.0
        %1788 = vadd.xlane.f32.xlu0 %v1787
        %v1789 = vpop.xlane.xlu0 %1788
        %v1790 = vsel %vm943, %v1736, 0.0
        %1791 = vadd.xlane.f32.xlu0 %v1790
        %v1792 = vpop.xlane.xlu0 %1791
        %v1793 = vsel %vm943, %v1737, 0.0
        %1794 = vadd.xlane.f32.xlu0 %v1793
        %v1795 = vpop.xlane.xlu0 %1794
        %v1796 = vsel %vm943, %v1738, 0.0
        %1797 = vadd.xlane.f32.xlu0 %v1796
        %v1798 = vpop.xlane.xlu0 %1797
        %v1799 = vsel %vm943, %v1739, 0.0
        %1800 = vadd.xlane.f32.xlu0 %v1799
        %v1801 = vpop.xlane.xlu0 %1800
        %v1802 = vsel %vm943, %v1740, 0.0
        %1803 = vadd.xlane.f32.xlu0 %v1802
        %v1804 = vpop.xlane.xlu0 %1803
        %v1805 = vsel %vm943, %v1741, 0.0
        %1806 = vadd.xlane.f32.xlu0 %v1805
        %v1807 = vpop.xlane.xlu0 %1806
        %v1808 = vsel %vm943, %v1742, 0.0
        %1809 = vadd.xlane.f32.xlu0 %v1808
        %v1810 = vpop.xlane.xlu0 %1809
        %v1811 = vsel %vm943, %v1743, 0.0
        %1812 = vadd.xlane.f32.xlu0 %v1811
        %v1813 = vpop.xlane.xlu0 %1812
        %v1814 = vsel %vm943, %v1744, 0.0
        %1815 = vadd.xlane.f32.xlu0 %v1814
        %v1816 = vpop.xlane.xlu0 %1815
        %v1817 = vsel %vm943, %v1745, 0.0
        %1818 = vadd.xlane.f32.xlu0 %v1817
        %v1819 = vpop.xlane.xlu0 %1818
        %v1820 = vsel %vm943, %v1746, 0.0
        %1821 = vadd.xlane.f32.xlu0 %v1820
        %v1822 = vpop.xlane.xlu0 %1821
        %v1823 = vsel %vm943, %v1747, 0.0
        %1824 = vadd.xlane.f32.xlu0 %v1823
        %v1825 = vpop.xlane.xlu0 %1824
        %v1826 = vsel %vm943, %v1748, 0.0
        %1827 = vadd.xlane.f32.xlu0 %v1826
        %v1828 = vpop.xlane.xlu0 %1827
        %v1829 = vsel %vm943, %v1749, 0.0
        %1830 = vadd.xlane.f32.xlu0 %v1829
        %v1831 = vpop.xlane.xlu0 %1830
        %v1832 = vsel %vm943, %v1750, 0.0
        %1833 = vadd.xlane.f32.xlu0 %v1832
        %v1834 = vpop.xlane.xlu0 %1833
        %v1835 = vmax.f32 %v1189, %v1330
        %v1836 = vmax.f32 %v1192, %v1333
        %v1837 = vmax.f32 %v1195, %v1336
        %v1838 = vmax.f32 %v1198, %v1339
        %v1839 = vmax.f32 %v1201, %v1342
        %v1840 = vmax.f32 %v1204, %v1345
        %v1841 = vmax.f32 %v1207, %v1348
        %v1842 = vmax.f32 %v1210, %v1351
        %v1843 = vmax.f32 %v1213, %v1354
        %v1844 = vmax.f32 %v1216, %v1357
        %v1845 = vmax.f32 %v1219, %v1360
        %v1846 = vmax.f32 %v1222, %v1363
        %v1847 = vmax.f32 %v1225, %v1366
        %v1848 = vmax.f32 %v1228, %v1369
        %v1849 = vmax.f32 %v1231, %v1372
        %v1850 = vmax.f32 %v1234, %v1375
        %v1851 = vmax.f32 %v1237, %v1378
        %v1852 = vmax.f32 %v1240, %v1381
        %v1853 = vmax.f32 %v1243, %v1384
        %v1854 = vmax.f32 %v1246, %v1387
        %v1855 = vmax.f32 %v1249, %v1390
        %v1856 = vmax.f32 %v1252, %v1393
        %v1857 = vmax.f32 %v1255, %v1396
        %v1858 = vmax.f32 %v1258, %v1399
        %v1859 = vmax.f32 %v1261, %v1402
        %v1860 = vmax.f32 %v1264, %v1405
        %v1861 = vmax.f32 %v1267, %v1408
        %v1862 = vmax.f32 %v1270, %v1411
        %v1863 = vmax.f32 %v1835, %v1471
        %v1864 = vmax.f32 %v1836, %v1474
        %v1865 = vmax.f32 %v1837, %v1477
        %v1866 = vmax.f32 %v1838, %v1480
        %v1867 = vmax.f32 %v1839, %v1483
        %v1868 = vmax.f32 %v1840, %v1486
        %v1869 = vmax.f32 %v1841, %v1489
        %v1870 = vmax.f32 %v1842, %v1492
        %v1871 = vmax.f32 %v1843, %v1495
        %v1872 = vmax.f32 %v1844, %v1498
        %v1873 = vmax.f32 %v1845, %v1501
        %v1874 = vmax.f32 %v1846, %v1504
        %v1875 = vmax.f32 %v1847, %v1507
        %v1876 = vmax.f32 %v1848, %v1510
        %v1877 = vmax.f32 %v1849, %v1513
        %v1878 = vmax.f32 %v1850, %v1516
        %v1879 = vmax.f32 %v1851, %v1519
        %v1880 = vmax.f32 %v1852, %v1522
        %v1881 = vmax.f32 %v1853, %v1525
        %v1882 = vmax.f32 %v1854, %v1528
        %v1883 = vmax.f32 %v1855, %v1531
        %v1884 = vmax.f32 %v1856, %v1534
        %v1885 = vmax.f32 %v1857, %v1537
        %v1886 = vmax.f32 %v1858, %v1540
        %v1887 = vmax.f32 %v1859, %v1543
        %v1888 = vmax.f32 %v1860, %v1546
        %v1889 = vmax.f32 %v1861, %v1549
        %v1890 = vmax.f32 %v1862, %v1552
        %v1891 = vmax.f32 %v1863, %v1612
        %v1892 = vmax.f32 %v1864, %v1615
        %v1893 = vmax.f32 %v1865, %v1618
        %v1894 = vmax.f32 %v1866, %v1621
        %v1895 = vmax.f32 %v1867, %v1624
        %v1896 = vmax.f32 %v1868, %v1627
        %v1897 = vmax.f32 %v1869, %v1630
        %v1898 = vmax.f32 %v1870, %v1633
        %v1899 = vmax.f32 %v1871, %v1636
        %v1900 = vmax.f32 %v1872, %v1639
        %v1901 = vmax.f32 %v1873, %v1642
        %v1902 = vmax.f32 %v1874, %v1645
        %v1903 = vmax.f32 %v1875, %v1648
        %v1904 = vmax.f32 %v1876, %v1651
        %v1905 = vmax.f32 %v1877, %v1654
        %v1906 = vmax.f32 %v1878, %v1657
        %v1907 = vmax.f32 %v1879, %v1660
        %v1908 = vmax.f32 %v1880, %v1663
        %v1909 = vmax.f32 %v1881, %v1666
        %v1910 = vmax.f32 %v1882, %v1669
        %v1911 = vmax.f32 %v1883, %v1672
        %v1912 = vmax.f32 %v1884, %v1675
        %v1913 = vmax.f32 %v1885, %v1678
        %v1914 = vmax.f32 %v1886, %v1681
        %v1915 = vmax.f32 %v1887, %v1684
        %v1916 = vmax.f32 %v1888, %v1687
        %v1917 = vmax.f32 %v1889, %v1690
        %v1918 = vmax.f32 %v1890, %v1693
        %v1919 = vmax.f32 %v1891, %v1753
        %v1920 = vmax.f32 %v1892, %v1756
        %v1921 = vmax.f32 %v1893, %v1759
        %v1922 = vmax.f32 %v1894, %v1762
        %v1923 = vmax.f32 %v1895, %v1765
        %v1924 = vmax.f32 %v1896, %v1768
        %v1925 = vmax.f32 %v1897, %v1771
        %v1926 = vmax.f32 %v1898, %v1774
        %v1927 = vmax.f32 %v1899, %v1777
        %v1928 = vmax.f32 %v1900, %v1780
        %v1929 = vmax.f32 %v1901, %v1783
        %v1930 = vmax.f32 %v1902, %v1786
        %v1931 = vmax.f32 %v1903, %v1789
        %v1932 = vmax.f32 %v1904, %v1792
        %v1933 = vmax.f32 %v1905, %v1795
        %v1934 = vmax.f32 %v1906, %v1798
        %v1935 = vmax.f32 %v1907, %v1801
        %v1936 = vmax.f32 %v1908, %v1804
        %v1937 = vmax.f32 %v1909, %v1807
        %v1938 = vmax.f32 %v1910, %v1810
        %v1939 = vmax.f32 %v1911, %v1813
        %v1940 = vmax.f32 %v1912, %v1816
        %v1941 = vmax.f32 %v1913, %v1819
        %v1942 = vmax.f32 %v1914, %v1822
        %v1943 = vmax.f32 %v1915, %v1825
        %v1944 = vmax.f32 %v1916, %v1828
        %v1945 = vmax.f32 %v1917, %v1831
        %v1946 = vmax.f32 %v1918, %v1834
        %v1947 = vsub.f32 %v1189, %v1919
        %v1948 = vsub.f32 %v1192, %v1920
        %v1949 = vsub.f32 %v1195, %v1921
        %v1950 = vsub.f32 %v1198, %v1922
        %v1951 = vsub.f32 %v1201, %v1923
        %v1952 = vsub.f32 %v1204, %v1924
        %v1953 = vsub.f32 %v1207, %v1925
        %v1954 = vsub.f32 %v1210, %v1926
        %v1955 = vsub.f32 %v1213, %v1927
        %v1956 = vsub.f32 %v1216, %v1928
        %v1957 = vsub.f32 %v1219, %v1929
        %v1958 = vsub.f32 %v1222, %v1930
        %v1959 = vsub.f32 %v1225, %v1931
        %v1960 = vsub.f32 %v1228, %v1932
        %v1961 = vsub.f32 %v1231, %v1933
        %v1962 = vsub.f32 %v1234, %v1934
        %v1963 = vsub.f32 %v1237, %v1935
        %v1964 = vsub.f32 %v1240, %v1936
        %v1965 = vsub.f32 %v1243, %v1937
        %v1966 = vsub.f32 %v1246, %v1938
        %v1967 = vsub.f32 %v1249, %v1939
        %v1968 = vsub.f32 %v1252, %v1940
        %v1969 = vsub.f32 %v1255, %v1941
        %v1970 = vsub.f32 %v1258, %v1942
        %v1971 = vsub.f32 %v1261, %v1943
        %v1972 = vsub.f32 %v1264, %v1944
        %v1973 = vsub.f32 %v1267, %v1945
        %v1974 = vsub.f32 %v1270, %v1946
        %v1975 = vmul.f32 %v1947, 1.442695
        %v1976 = vpow.pop %v1975
        %v1977 = vmul.f32 %v1948, 1.442695
        %v1978 = vpow.pop %v1977
        %v1979 = vmul.f32 %v1949, 1.442695
        %v1980 = vpow.pop %v1979
        %v1981 = vmul.f32 %v1950, 1.442695
        %v1982 = vpow.pop %v1981
        %v1983 = vmul.f32 %v1951, 1.442695
        %v1984 = vpow.pop %v1983
        %v1985 = vmul.f32 %v1952, 1.442695
        %v1986 = vpow.pop %v1985
        %v1987 = vmul.f32 %v1953, 1.442695
        %v1988 = vpow.pop %v1987
        %v1989 = vmul.f32 %v1954, 1.442695
        %v1990 = vpow.pop %v1989
        %v1991 = vmul.f32 %v1955, 1.442695
        %v1992 = vpow.pop %v1991
        %v1993 = vmul.f32 %v1956, 1.442695
        %v1994 = vpow.pop %v1993
        %v1995 = vmul.f32 %v1957, 1.442695
        %v1996 = vpow.pop %v1995
        %v1997 = vmul.f32 %v1958, 1.442695
        %v1998 = vpow.pop %v1997
        %v1999 = vmul.f32 %v1959, 1.442695
        %v2000 = vpow.pop %v1999
        %v2001 = vmul.f32 %v1960, 1.442695
        %v2002 = vpow.pop %v2001
        %v2003 = vmul.f32 %v1961, 1.442695
        %v2004 = vpow.pop %v2003
        %v2005 = vmul.f32 %v1962, 1.442695
        %v2006 = vpow.pop %v2005
        %v2007 = vmul.f32 %v1963, 1.442695
        %v2008 = vpow.pop %v2007
        %v2009 = vmul.f32 %v1964, 1.442695
        %v2010 = vpow.pop %v2009
        %v2011 = vmul.f32 %v1965, 1.442695
        %v2012 = vpow.pop %v2011
        %v2013 = vmul.f32 %v1966, 1.442695
        %v2014 = vpow.pop %v2013
        %v2015 = vmul.f32 %v1967, 1.442695
        %v2016 = vpow.pop %v2015
        %v2017 = vmul.f32 %v1968, 1.442695
        %v2018 = vpow.pop %v2017
        %v2019 = vmul.f32 %v1969, 1.442695
        %v2020 = vpow.pop %v2019
        %v2021 = vmul.f32 %v1970, 1.442695
        %v2022 = vpow.pop %v2021
        %v2023 = vmul.f32 %v1971, 1.442695
        %v2024 = vpow.pop %v2023
        %v2025 = vmul.f32 %v1972, 1.442695
        %v2026 = vpow.pop %v2025
        %v2027 = vmul.f32 %v1973, 1.442695
        %v2028 = vpow.pop %v2027
        %v2029 = vmul.f32 %v1974, 1.442695
        %v2030 = vpow.pop %v2029
        %v2031 = vsub.f32 %v1330, %v1919
        %v2032 = vsub.f32 %v1333, %v1920
        %v2033 = vsub.f32 %v1336, %v1921
        %v2034 = vsub.f32 %v1339, %v1922
        %v2035 = vsub.f32 %v1342, %v1923
        %v2036 = vsub.f32 %v1345, %v1924
        %v2037 = vsub.f32 %v1348, %v1925
        %v2038 = vsub.f32 %v1351, %v1926
        %v2039 = vsub.f32 %v1354, %v1927
        %v2040 = vsub.f32 %v1357, %v1928
        %v2041 = vsub.f32 %v1360, %v1929
        %v2042 = vsub.f32 %v1363, %v1930
        %v2043 = vsub.f32 %v1366, %v1931
        %v2044 = vsub.f32 %v1369, %v1932
        %v2045 = vsub.f32 %v1372, %v1933
        %v2046 = vsub.f32 %v1375, %v1934
        %v2047 = vsub.f32 %v1378, %v1935
        %v2048 = vsub.f32 %v1381, %v1936
        %v2049 = vsub.f32 %v1384, %v1937
        %v2050 = vsub.f32 %v1387, %v1938
        %v2051 = vsub.f32 %v1390, %v1939
        %v2052 = vsub.f32 %v1393, %v1940
        %v2053 = vsub.f32 %v1396, %v1941
        %v2054 = vsub.f32 %v1399, %v1942
        %v2055 = vsub.f32 %v1402, %v1943
        %v2056 = vsub.f32 %v1405, %v1944
        %v2057 = vsub.f32 %v1408, %v1945
        %v2058 = vsub.f32 %v1411, %v1946
        %v2059 = vmul.f32 %v2031, 1.442695
        %v2060 = vpow.pop %v2059
        %v2061 = vmul.f32 %v2032, 1.442695
        %v2062 = vpow.pop %v2061
        %v2063 = vmul.f32 %v2033, 1.442695
        %v2064 = vpow.pop %v2063
        %v2065 = vmul.f32 %v2034, 1.442695
        %v2066 = vpow.pop %v2065
        %v2067 = vmul.f32 %v2035, 1.442695
        %v2068 = vpow.pop %v2067
        %v2069 = vmul.f32 %v2036, 1.442695
        %v2070 = vpow.pop %v2069
        %v2071 = vmul.f32 %v2037, 1.442695
        %v2072 = vpow.pop %v2071
        %v2073 = vmul.f32 %v2038, 1.442695
        %v2074 = vpow.pop %v2073
        %v2075 = vmul.f32 %v2039, 1.442695
        %v2076 = vpow.pop %v2075
        %v2077 = vmul.f32 %v2040, 1.442695
        %v2078 = vpow.pop %v2077
        %v2079 = vmul.f32 %v2041, 1.442695
        %v2080 = vpow.pop %v2079
        %v2081 = vmul.f32 %v2042, 1.442695
        %v2082 = vpow.pop %v2081
        %v2083 = vmul.f32 %v2043, 1.442695
        %v2084 = vpow.pop %v2083
        %v2085 = vmul.f32 %v2044, 1.442695
        %v2086 = vpow.pop %v2085
        %v2087 = vmul.f32 %v2045, 1.442695
        %v2088 = vpow.pop %v2087
        %v2089 = vmul.f32 %v2046, 1.442695
        %v2090 = vpow.pop %v2089
        %v2091 = vmul.f32 %v2047, 1.442695
        %v2092 = vpow.pop %v2091
        %v2093 = vmul.f32 %v2048, 1.442695
        %v2094 = vpow.pop %v2093
        %v2095 = vmul.f32 %v2049, 1.442695
        %v2096 = vpow.pop %v2095
        %v2097 = vmul.f32 %v2050, 1.442695
        %v2098 = vpow.pop %v2097
        %v2099 = vmul.f32 %v2051, 1.442695
        %v2100 = vpow.pop %v2099
        %v2101 = vmul.f32 %v2052, 1.442695
        %v2102 = vpow.pop %v2101
        %v2103 = vmul.f32 %v2053, 1.442695
        %v2104 = vpow.pop %v2103
        %v2105 = vmul.f32 %v2054, 1.442695
        %v2106 = vpow.pop %v2105
        %v2107 = vmul.f32 %v2055, 1.442695
        %v2108 = vpow.pop %v2107
        %v2109 = vmul.f32 %v2056, 1.442695
        %v2110 = vpow.pop %v2109
        %v2111 = vmul.f32 %v2057, 1.442695
        %v2112 = vpow.pop %v2111
        %v2113 = vmul.f32 %v2058, 1.442695
        %v2114 = vpow.pop %v2113
        %v2115 = vsub.f32 %v1471, %v1919
        %v2116 = vsub.f32 %v1474, %v1920
        %v2117 = vsub.f32 %v1477, %v1921
        %v2118 = vsub.f32 %v1480, %v1922
        %v2119 = vsub.f32 %v1483, %v1923
        %v2120 = vsub.f32 %v1486, %v1924
        %v2121 = vsub.f32 %v1489, %v1925
        %v2122 = vsub.f32 %v1492, %v1926
        %v2123 = vsub.f32 %v1495, %v1927
        %v2124 = vsub.f32 %v1498, %v1928
        %v2125 = vsub.f32 %v1501, %v1929
        %v2126 = vsub.f32 %v1504, %v1930
        %v2127 = vsub.f32 %v1507, %v1931
        %v2128 = vsub.f32 %v1510, %v1932
        %v2129 = vsub.f32 %v1513, %v1933
        %v2130 = vsub.f32 %v1516, %v1934
        %v2131 = vsub.f32 %v1519, %v1935
        %v2132 = vsub.f32 %v1522, %v1936
        %v2133 = vsub.f32 %v1525, %v1937
        %v2134 = vsub.f32 %v1528, %v1938
        %v2135 = vsub.f32 %v1531, %v1939
        %v2136 = vsub.f32 %v1534, %v1940
        %v2137 = vsub.f32 %v1537, %v1941
        %v2138 = vsub.f32 %v1540, %v1942
        %v2139 = vsub.f32 %v1543, %v1943
        %v2140 = vsub.f32 %v1546, %v1944
        %v2141 = vsub.f32 %v1549, %v1945
        %v2142 = vsub.f32 %v1552, %v1946
        %v2143 = vmul.f32 %v2115, 1.442695
        %v2144 = vpow.pop %v2143
        %v2145 = vmul.f32 %v2116, 1.442695
        %v2146 = vpow.pop %v2145
        %v2147 = vmul.f32 %v2117, 1.442695
        %v2148 = vpow.pop %v2147
        %v2149 = vmul.f32 %v2118, 1.442695
        %v2150 = vpow.pop %v2149
        %v2151 = vmul.f32 %v2119, 1.442695
        %v2152 = vpow.pop %v2151
        %v2153 = vmul.f32 %v2120, 1.442695
        %v2154 = vpow.pop %v2153
        %v2155 = vmul.f32 %v2121, 1.442695
        %v2156 = vpow.pop %v2155
        %v2157 = vmul.f32 %v2122, 1.442695
        %v2158 = vpow.pop %v2157
        %v2159 = vmul.f32 %v2123, 1.442695
        %v2160 = vpow.pop %v2159
        %v2161 = vmul.f32 %v2124, 1.442695
        %v2162 = vpow.pop %v2161
        %v2163 = vmul.f32 %v2125, 1.442695
        %v2164 = vpow.pop %v2163
        %v2165 = vmul.f32 %v2126, 1.442695
        %v2166 = vpow.pop %v2165
        %v2167 = vmul.f32 %v2127, 1.442695
        %v2168 = vpow.pop %v2167
        %v2169 = vmul.f32 %v2128, 1.442695
        %v2170 = vpow.pop %v2169
        %v2171 = vmul.f32 %v2129, 1.442695
        %v2172 = vpow.pop %v2171
        %v2173 = vmul.f32 %v2130, 1.442695
        %v2174 = vpow.pop %v2173
        %v2175 = vmul.f32 %v2131, 1.442695
        %v2176 = vpow.pop %v2175
        %v2177 = vmul.f32 %v2132, 1.442695
        %v2178 = vpow.pop %v2177
        %v2179 = vmul.f32 %v2133, 1.442695
        %v2180 = vpow.pop %v2179
        %v2181 = vmul.f32 %v2134, 1.442695
        %v2182 = vpow.pop %v2181
        %v2183 = vmul.f32 %v2135, 1.442695
        %v2184 = vpow.pop %v2183
        %v2185 = vmul.f32 %v2136, 1.442695
        %v2186 = vpow.pop %v2185
        %v2187 = vmul.f32 %v2137, 1.442695
        %v2188 = vpow.pop %v2187
        %v2189 = vmul.f32 %v2138, 1.442695
        %v2190 = vpow.pop %v2189
        %v2191 = vmul.f32 %v2139, 1.442695
        %v2192 = vpow.pop %v2191
        %v2193 = vmul.f32 %v2140, 1.442695
        %v2194 = vpow.pop %v2193
        %v2195 = vmul.f32 %v2141, 1.442695
        %v2196 = vpow.pop %v2195
        %v2197 = vmul.f32 %v2142, 1.442695
        %v2198 = vpow.pop %v2197
        %v2199 = vsub.f32 %v1612, %v1919
        %v2200 = vsub.f32 %v1615, %v1920
        %v2201 = vsub.f32 %v1618, %v1921
        %v2202 = vsub.f32 %v1621, %v1922
        %v2203 = vsub.f32 %v1624, %v1923
        %v2204 = vsub.f32 %v1627, %v1924
        %v2205 = vsub.f32 %v1630, %v1925
        %v2206 = vsub.f32 %v1633, %v1926
        %v2207 = vsub.f32 %v1636, %v1927
        %v2208 = vsub.f32 %v1639, %v1928
        %v2209 = vsub.f32 %v1642, %v1929
        %v2210 = vsub.f32 %v1645, %v1930
        %v2211 = vsub.f32 %v1648, %v1931
        %v2212 = vsub.f32 %v1651, %v1932
        %v2213 = vsub.f32 %v1654, %v1933
        %v2214 = vsub.f32 %v1657, %v1934
        %v2215 = vsub.f32 %v1660, %v1935
        %v2216 = vsub.f32 %v1663, %v1936
        %v2217 = vsub.f32 %v1666, %v1937
        %v2218 = vsub.f32 %v1669, %v1938
        %v2219 = vsub.f32 %v1672, %v1939
        %v2220 = vsub.f32 %v1675, %v1940
        %v2221 = vsub.f32 %v1678, %v1941
        %v2222 = vsub.f32 %v1681, %v1942
        %v2223 = vsub.f32 %v1684, %v1943
        %v2224 = vsub.f32 %v1687, %v1944
        %v2225 = vsub.f32 %v1690, %v1945
        %v2226 = vsub.f32 %v1693, %v1946
        %v2227 = vmul.f32 %v2199, 1.442695
        %v2228 = vpow.pop %v2227
        %v2229 = vmul.f32 %v2200, 1.442695
        %v2230 = vpow.pop %v2229
        %v2231 = vmul.f32 %v2201, 1.442695
        %v2232 = vpow.pop %v2231
        %v2233 = vmul.f32 %v2202, 1.442695
        %v2234 = vpow.pop %v2233
        %v2235 = vmul.f32 %v2203, 1.442695
        %v2236 = vpow.pop %v2235
        %v2237 = vmul.f32 %v2204, 1.442695
        %v2238 = vpow.pop %v2237
        %v2239 = vmul.f32 %v2205, 1.442695
        %v2240 = vpow.pop %v2239
        %v2241 = vmul.f32 %v2206, 1.442695
        %v2242 = vpow.pop %v2241
        %v2243 = vmul.f32 %v2207, 1.442695
        %v2244 = vpow.pop %v2243
        %v2245 = vmul.f32 %v2208, 1.442695
        %v2246 = vpow.pop %v2245
        %v2247 = vmul.f32 %v2209, 1.442695
        %v2248 = vpow.pop %v2247
        %v2249 = vmul.f32 %v2210, 1.442695
        %v2250 = vpow.pop %v2249
        %v2251 = vmul.f32 %v2211, 1.442695
        %v2252 = vpow.pop %v2251
        %v2253 = vmul.f32 %v2212, 1.442695
        %v2254 = vpow.pop %v2253
        %v2255 = vmul.f32 %v2213, 1.442695
        %v2256 = vpow.pop %v2255
        %v2257 = vmul.f32 %v2214, 1.442695
        %v2258 = vpow.pop %v2257
        %v2259 = vmul.f32 %v2215, 1.442695
        %v2260 = vpow.pop %v2259
        %v2261 = vmul.f32 %v2216, 1.442695
        %v2262 = vpow.pop %v2261
        %v2263 = vmul.f32 %v2217, 1.442695
        %v2264 = vpow.pop %v2263
        %v2265 = vmul.f32 %v2218, 1.442695
        %v2266 = vpow.pop %v2265
        %v2267 = vmul.f32 %v2219, 1.442695
        %v2268 = vpow.pop %v2267
        %v2269 = vmul.f32 %v2220, 1.442695
        %v2270 = vpow.pop %v2269
        %v2271 = vmul.f32 %v2221, 1.442695
        %v2272 = vpow.pop %v2271
        %v2273 = vmul.f32 %v2222, 1.442695
        %v2274 = vpow.pop %v2273
        %v2275 = vmul.f32 %v2223, 1.442695
        %v2276 = vpow.pop %v2275
        %v2277 = vmul.f32 %v2224, 1.442695
        %v2278 = vpow.pop %v2277
        %v2279 = vmul.f32 %v2225, 1.442695
        %v2280 = vpow.pop %v2279
        %v2281 = vmul.f32 %v2226, 1.442695
        %v2282 = vpow.pop %v2281
        %v2283 = vsub.f32 %v1753, %v1919
        %v2284 = vsub.f32 %v1756, %v1920
        %v2285 = vsub.f32 %v1759, %v1921
        %v2286 = vsub.f32 %v1762, %v1922
        %v2287 = vsub.f32 %v1765, %v1923
        %v2288 = vsub.f32 %v1768, %v1924
        %v2289 = vsub.f32 %v1771, %v1925
        %v2290 = vsub.f32 %v1774, %v1926
        %v2291 = vsub.f32 %v1777, %v1927
        %v2292 = vsub.f32 %v1780, %v1928
        %v2293 = vsub.f32 %v1783, %v1929
        %v2294 = vsub.f32 %v1786, %v1930
        %v2295 = vsub.f32 %v1789, %v1931
        %v2296 = vsub.f32 %v1792, %v1932
        %v2297 = vsub.f32 %v1795, %v1933
        %v2298 = vsub.f32 %v1798, %v1934
        %v2299 = vsub.f32 %v1801, %v1935
        %v2300 = vsub.f32 %v1804, %v1936
        %v2301 = vsub.f32 %v1807, %v1937
        %v2302 = vsub.f32 %v1810, %v1938
        %v2303 = vsub.f32 %v1813, %v1939
        %v2304 = vsub.f32 %v1816, %v1940
        %v2305 = vsub.f32 %v1819, %v1941
        %v2306 = vsub.f32 %v1822, %v1942
        %v2307 = vsub.f32 %v1825, %v1943
        %v2308 = vsub.f32 %v1828, %v1944
        %v2309 = vsub.f32 %v1831, %v1945
        %v2310 = vsub.f32 %v1834, %v1946
        %v2311 = vmul.f32 %v2283, 1.442695
        %v2312 = vpow.pop %v2311
        %v2313 = vmul.f32 %v2284, 1.442695
        %v2314 = vpow.pop %v2313
        %v2315 = vmul.f32 %v2285, 1.442695
        %v2316 = vpow.pop %v2315
        %v2317 = vmul.f32 %v2286, 1.442695
        %v2318 = vpow.pop %v2317
        %v2319 = vmul.f32 %v2287, 1.442695
        %v2320 = vpow.pop %v2319
        %v2321 = vmul.f32 %v2288, 1.442695
        %v2322 = vpow.pop %v2321
        %v2323 = vmul.f32 %v2289, 1.442695
        %v2324 = vpow.pop %v2323
        %v2325 = vmul.f32 %v2290, 1.442695
        %v2326 = vpow.pop %v2325
        %v2327 = vmul.f32 %v2291, 1.442695
        %v2328 = vpow.pop %v2327
        %v2329 = vmul.f32 %v2292, 1.442695
        %v2330 = vpow.pop %v2329
        %v2331 = vmul.f32 %v2293, 1.442695
        %v2332 = vpow.pop %v2331
        %v2333 = vmul.f32 %v2294, 1.442695
        %v2334 = vpow.pop %v2333
        %v2335 = vmul.f32 %v2295, 1.442695
        %v2336 = vpow.pop %v2335
        %v2337 = vmul.f32 %v2296, 1.442695
        %v2338 = vpow.pop %v2337
        %v2339 = vmul.f32 %v2297, 1.442695
        %v2340 = vpow.pop %v2339
        %v2341 = vmul.f32 %v2298, 1.442695
        %v2342 = vpow.pop %v2341
        %v2343 = vmul.f32 %v2299, 1.442695
        %v2344 = vpow.pop %v2343
        %v2345 = vmul.f32 %v2300, 1.442695
        %v2346 = vpow.pop %v2345
        %v2347 = vmul.f32 %v2301, 1.442695
        %v2348 = vpow.pop %v2347
        %v2349 = vmul.f32 %v2302, 1.442695
        %v2350 = vpow.pop %v2349
        %v2351 = vmul.f32 %v2303, 1.442695
        %v2352 = vpow.pop %v2351
        %v2353 = vmul.f32 %v2304, 1.442695
        %v2354 = vpow.pop %v2353
        %v2355 = vmul.f32 %v2305, 1.442695
        %v2356 = vpow.pop %v2355
        %v2357 = vmul.f32 %v2306, 1.442695
        %v2358 = vpow.pop %v2357
        %v2359 = vmul.f32 %v2307, 1.442695
        %v2360 = vpow.pop %v2359
        %v2361 = vmul.f32 %v2308, 1.442695
        %v2362 = vpow.pop %v2361
        %v2363 = vmul.f32 %v2309, 1.442695
        %v2364 = vpow.pop %v2363
        %v2365 = vmul.f32 %v2310, 1.442695
        %v2366 = vpow.pop %v2365
        %v2367 = vadd.f32 %v1976, %v2060
        %v2368 = vadd.f32 %v1978, %v2062
        %v2369 = vadd.f32 %v1980, %v2064
        %v2370 = vadd.f32 %v1982, %v2066
        %v2371 = vadd.f32 %v1984, %v2068
        %v2372 = vadd.f32 %v1986, %v2070
        %v2373 = vadd.f32 %v1988, %v2072
        %v2374 = vadd.f32 %v1990, %v2074
        %v2375 = vadd.f32 %v1992, %v2076
        %v2376 = vadd.f32 %v1994, %v2078
        %v2377 = vadd.f32 %v1996, %v2080
        %v2378 = vadd.f32 %v1998, %v2082
        %v2379 = vadd.f32 %v2000, %v2084
        %v2380 = vadd.f32 %v2002, %v2086
        %v2381 = vadd.f32 %v2004, %v2088
        %v2382 = vadd.f32 %v2006, %v2090
        %v2383 = vadd.f32 %v2008, %v2092
        %v2384 = vadd.f32 %v2010, %v2094
        %v2385 = vadd.f32 %v2012, %v2096
        %v2386 = vadd.f32 %v2014, %v2098
        %v2387 = vadd.f32 %v2016, %v2100
        %v2388 = vadd.f32 %v2018, %v2102
        %v2389 = vadd.f32 %v2020, %v2104
        %v2390 = vadd.f32 %v2022, %v2106
        %v2391 = vadd.f32 %v2024, %v2108
        %v2392 = vadd.f32 %v2026, %v2110
        %v2393 = vadd.f32 %v2028, %v2112
        %v2394 = vadd.f32 %v2030, %v2114
        %v2395 = vadd.f32 %v2367, %v2144
        %v2396 = vadd.f32 %v2368, %v2146
        %v2397 = vadd.f32 %v2369, %v2148
        %v2398 = vadd.f32 %v2370, %v2150
        %v2399 = vadd.f32 %v2371, %v2152
        %v2400 = vadd.f32 %v2372, %v2154
        %v2401 = vadd.f32 %v2373, %v2156
        %v2402 = vadd.f32 %v2374, %v2158
        %v2403 = vadd.f32 %v2375, %v2160
        %v2404 = vadd.f32 %v2376, %v2162
        %v2405 = vadd.f32 %v2377, %v2164
        %v2406 = vadd.f32 %v2378, %v2166
        %v2407 = vadd.f32 %v2379, %v2168
        %v2408 = vadd.f32 %v2380, %v2170
        %v2409 = vadd.f32 %v2381, %v2172
        %v2410 = vadd.f32 %v2382, %v2174
        %v2411 = vadd.f32 %v2383, %v2176
        %v2412 = vadd.f32 %v2384, %v2178
        %v2413 = vadd.f32 %v2385, %v2180
        %v2414 = vadd.f32 %v2386, %v2182
        %v2415 = vadd.f32 %v2387, %v2184
        %v2416 = vadd.f32 %v2388, %v2186
        %v2417 = vadd.f32 %v2389, %v2188
        %v2418 = vadd.f32 %v2390, %v2190
        %v2419 = vadd.f32 %v2391, %v2192
        %v2420 = vadd.f32 %v2392, %v2194
        %v2421 = vadd.f32 %v2393, %v2196
        %v2422 = vadd.f32 %v2394, %v2198
        %v2423 = vadd.f32 %v2395, %v2228
        %v2424 = vadd.f32 %v2396, %v2230
        %v2425 = vadd.f32 %v2397, %v2232
        %v2426 = vadd.f32 %v2398, %v2234
        %v2427 = vadd.f32 %v2399, %v2236
        %v2428 = vadd.f32 %v2400, %v2238
        %v2429 = vadd.f32 %v2401, %v2240
        %v2430 = vadd.f32 %v2402, %v2242
        %v2431 = vadd.f32 %v2403, %v2244
        %v2432 = vadd.f32 %v2404, %v2246
        %v2433 = vadd.f32 %v2405, %v2248
        %v2434 = vadd.f32 %v2406, %v2250
        %v2435 = vadd.f32 %v2407, %v2252
        %v2436 = vadd.f32 %v2408, %v2254
        %v2437 = vadd.f32 %v2409, %v2256
        %v2438 = vadd.f32 %v2410, %v2258
        %v2439 = vadd.f32 %v2411, %v2260
        %v2440 = vadd.f32 %v2412, %v2262
        %v2441 = vadd.f32 %v2413, %v2264
        %v2442 = vadd.f32 %v2414, %v2266
        %v2443 = vadd.f32 %v2415, %v2268
        %v2444 = vadd.f32 %v2416, %v2270
        %v2445 = vadd.f32 %v2417, %v2272
        %v2446 = vadd.f32 %v2418, %v2274
        %v2447 = vadd.f32 %v2419, %v2276
        %v2448 = vadd.f32 %v2420, %v2278
        %v2449 = vadd.f32 %v2421, %v2280
        %v2450 = vadd.f32 %v2422, %v2282
        %v2451 = vadd.f32 %v2423, %v2312
        %v2452 = vadd.f32 %v2424, %v2314
        %v2453 = vadd.f32 %v2425, %v2316
        %v2454 = vadd.f32 %v2426, %v2318
        %v2455 = vadd.f32 %v2427, %v2320
        %v2456 = vadd.f32 %v2428, %v2322
        %v2457 = vadd.f32 %v2429, %v2324
        %v2458 = vadd.f32 %v2430, %v2326
        %v2459 = vadd.f32 %v2431, %v2328
        %v2460 = vadd.f32 %v2432, %v2330
        %v2461 = vadd.f32 %v2433, %v2332
        %v2462 = vadd.f32 %v2434, %v2334
        %v2463 = vadd.f32 %v2435, %v2336
        %v2464 = vadd.f32 %v2436, %v2338
        %v2465 = vadd.f32 %v2437, %v2340
        %v2466 = vadd.f32 %v2438, %v2342
        %v2467 = vadd.f32 %v2439, %v2344
        %v2468 = vadd.f32 %v2440, %v2346
        %v2469 = vadd.f32 %v2441, %v2348
        %v2470 = vadd.f32 %v2442, %v2350
        %v2471 = vadd.f32 %v2443, %v2352
        %v2472 = vadd.f32 %v2444, %v2354
        %v2473 = vadd.f32 %v2445, %v2356
        %v2474 = vadd.f32 %v2446, %v2358
        %v2475 = vadd.f32 %v2447, %v2360
        %v2476 = vadd.f32 %v2448, %v2362
        %v2477 = vadd.f32 %v2449, %v2364
        %v2478 = vadd.f32 %v2450, %v2366
        %v2479 = vrcp.pop %v2451
        %v2480 = vrcp.pop %v2452
        %v2481 = vrcp.pop %v2453
        %v2482 = vrcp.pop %v2454
        %v2483 = vrcp.pop %v2455
        %v2484 = vrcp.pop %v2456
        %v2485 = vrcp.pop %v2457
        %v2486 = vrcp.pop %v2458
        %v2487 = vrcp.pop %v2459
        %v2488 = vrcp.pop %v2460
        %v2489 = vrcp.pop %v2461
        %v2490 = vrcp.pop %v2462
        %v2491 = vrcp.pop %v2463
        %v2492 = vrcp.pop %v2464
        %v2493 = vrcp.pop %v2465
        %v2494 = vrcp.pop %v2466
        %v2495 = vrcp.pop %v2467
        %v2496 = vrcp.pop %v2468
        %v2497 = vrcp.pop %v2469
        %v2498 = vrcp.pop %v2470
        %v2499 = vrcp.pop %v2471
        %v2500 = vrcp.pop %v2472
        %v2501 = vrcp.pop %v2473
        %v2502 = vrcp.pop %v2474
        %v2503 = vrcp.pop %v2475
        %v2504 = vrcp.pop %v2476
        %v2505 = vrcp.pop %v2477
        %v2506 = vrcp.pop %v2478
        %v2507 = vmul.f32 %v1976, %v2479
        %v2508 = vmul.f32 %v1978, %v2480
        %v2509 = vmul.f32 %v1980, %v2481
        %v2510 = vmul.f32 %v1982, %v2482
        %v2511 = vmul.f32 %v1984, %v2483
        %v2512 = vmul.f32 %v1986, %v2484
        %v2513 = vmul.f32 %v1988, %v2485
        %v2514 = vmul.f32 %v1990, %v2486
        %v2515 = vmul.f32 %v1992, %v2487
        %v2516 = vmul.f32 %v1994, %v2488
        %v2517 = vmul.f32 %v1996, %v2489
        %v2518 = vmul.f32 %v1998, %v2490
        %v2519 = vmul.f32 %v2000, %v2491
        %v2520 = vmul.f32 %v2002, %v2492
        %v2521 = vmul.f32 %v2004, %v2493
        %v2522 = vmul.f32 %v2006, %v2494
        %v2523 = vmul.f32 %v2008, %v2495
        %v2524 = vmul.f32 %v2010, %v2496
        %v2525 = vmul.f32 %v2012, %v2497
        %v2526 = vmul.f32 %v2014, %v2498
        %v2527 = vmul.f32 %v2016, %v2499
        %v2528 = vmul.f32 %v2018, %v2500
        %v2529 = vmul.f32 %v2020, %v2501
        %v2530 = vmul.f32 %v2022, %v2502
        %v2531 = vmul.f32 %v2024, %v2503
        %v2532 = vmul.f32 %v2026, %v2504
        %v2533 = vmul.f32 %v2028, %v2505
        %v2534 = vmul.f32 %v2030, %v2506
        %v2535 = vadd.f32 %v2507, 1e-11
        %v2536 = vadd.f32 %v2508, 1e-11
        %v2537 = vadd.f32 %v2509, 1e-11
        %v2538 = vadd.f32 %v2510, 1e-11
        %v2539 = vadd.f32 %v2511, 1e-11
        %v2540 = vadd.f32 %v2512, 1e-11
        %v2541 = vadd.f32 %v2513, 1e-11
        %v2542 = vadd.f32 %v2514, 1e-11
        %v2543 = vadd.f32 %v2515, 1e-11
        %v2544 = vadd.f32 %v2516, 1e-11
        %v2545 = vadd.f32 %v2517, 1e-11
        %v2546 = vadd.f32 %v2518, 1e-11
        %v2547 = vadd.f32 %v2519, 1e-11
        %v2548 = vadd.f32 %v2520, 1e-11
        %v2549 = vadd.f32 %v2521, 1e-11
        %v2550 = vadd.f32 %v2522, 1e-11
        %v2551 = vadd.f32 %v2523, 1e-11
        %v2552 = vadd.f32 %v2524, 1e-11
        %v2553 = vadd.f32 %v2525, 1e-11
        %v2554 = vadd.f32 %v2526, 1e-11
        %v2555 = vadd.f32 %v2527, 1e-11
        %v2556 = vadd.f32 %v2528, 1e-11
        %v2557 = vadd.f32 %v2529, 1e-11
        %v2558 = vadd.f32 %v2530, 1e-11
        %v2559 = vadd.f32 %v2531, 1e-11
        %v2560 = vadd.f32 %v2532, 1e-11
        %v2561 = vadd.f32 %v2533, 1e-11
        %v2562 = vadd.f32 %v2534, 1e-11
        %v2563 = vlog2.pop %v2535
        %v2564 = vmul.f32 %v2563, 0.6931472
        %v2565 = vlog2.pop %v2536
        %v2566 = vmul.f32 %v2565, 0.6931472
        %v2567 = vlog2.pop %v2537
        %v2568 = vmul.f32 %v2567, 0.6931472
        %v2569 = vlog2.pop %v2538
        %v2570 = vmul.f32 %v2569, 0.6931472
        %v2571 = vlog2.pop %v2539
        %v2572 = vmul.f32 %v2571, 0.6931472
        %v2573 = vlog2.pop %v2540
        %v2574 = vmul.f32 %v2573, 0.6931472
        %v2575 = vlog2.pop %v2541
        %v2576 = vmul.f32 %v2575, 0.6931472
        %v2577 = vlog2.pop %v2542
        %v2578 = vmul.f32 %v2577, 0.6931472
        %v2579 = vlog2.pop %v2543
        %v2580 = vmul.f32 %v2579, 0.6931472
        %v2581 = vlog2.pop %v2544
        %v2582 = vmul.f32 %v2581, 0.6931472
        %v2583 = vlog2.pop %v2545
        %v2584 = vmul.f32 %v2583, 0.6931472
        %v2585 = vlog2.pop %v2546
        %v2586 = vmul.f32 %v2585, 0.6931472
        %v2587 = vlog2.pop %v2547
        %v2588 = vmul.f32 %v2587, 0.6931472
        %v2589 = vlog2.pop %v2548
        %v2590 = vmul.f32 %v2589, 0.6931472
        %v2591 = vlog2.pop %v2549
        %v2592 = vmul.f32 %v2591, 0.6931472
        %v2593 = vlog2.pop %v2550
        %v2594 = vmul.f32 %v2593, 0.6931472
        %v2595 = vlog2.pop %v2551
        %v2596 = vmul.f32 %v2595, 0.6931472
        %v2597 = vlog2.pop %v2552
        %v2598 = vmul.f32 %v2597, 0.6931472
        %v2599 = vlog2.pop %v2553
        %v2600 = vmul.f32 %v2599, 0.6931472
        %v2601 = vlog2.pop %v2554
        %v2602 = vmul.f32 %v2601, 0.6931472
        %v2603 = vlog2.pop %v2555
        %v2604 = vmul.f32 %v2603, 0.6931472
        %v2605 = vlog2.pop %v2556
        %v2606 = vmul.f32 %v2605, 0.6931472
        %v2607 = vlog2.pop %v2557
        %v2608 = vmul.f32 %v2607, 0.6931472
        %v2609 = vlog2.pop %v2558
        %v2610 = vmul.f32 %v2609, 0.6931472
        %v2611 = vlog2.pop %v2559
        %v2612 = vmul.f32 %v2611, 0.6931472
        %v2613 = vlog2.pop %v2560
        %v2614 = vmul.f32 %v2613, 0.6931472
        %v2615 = vlog2.pop %v2561
        %v2616 = vmul.f32 %v2615, 0.6931472
        %v2617 = vlog2.pop %v2562
        %v2618 = vmul.f32 %v2617, 0.6931472
        %v2619 = vlaneseq
        %v2620 = vshrl.u32 %v2619, 7
        %v2621 = vadd.s32 %v2620, 8
        %v2622 = vadd.s32 %v2620, 16
        %v2623 = vadd.s32 %v2620, 24
        %v2624 = vadd.s32 %v2620, 32
        %v2625 = vadd.s32 %v2620, 40
        %v2626 = vadd.s32 %v2620, 48
        %v2627 = vadd.s32 %v2620, 56
        %v2628 = vadd.s32 %v2620, 64
        %v2629 = vadd.s32 %v2620, 72
        %v2630 = vadd.s32 %v2620, 80
        %v2631 = vadd.s32 %v2620, 88
        %v2632 = vadd.s32 %v2620, 96
        %v2633 = vadd.s32 %v2620, 104
        %v2634 = vadd.s32 %v2620, 112
        %v2635 = vadd.s32 %v2620, 120
        %v2636 = vadd.s32 %v2620, 128
        %v2637 = vadd.s32 %v2620, 136
        %v2638 = vadd.s32 %v2620, 144
        %v2639 = vadd.s32 %v2620, 152
        %v2640 = vadd.s32 %v2620, 160
        %v2641 = vadd.s32 %v2620, 168
        %v2642 = vadd.s32 %v2620, 176
        %v2643 = vadd.s32 %v2620, 184
        %v2644 = vadd.s32 %v2620, 192
        %v2645 = vadd.s32 %v2620, 200
        %v2646 = vadd.s32 %v2620, 208
        %v2647 = vadd.s32 %v2620, 216
        %v2648 = vstv %s828
        %vm2649 = vcmp.lt.s32.totalorder %v2620, %v2648
        %vm2650 = vcmp.lt.s32.totalorder %v2621, %v2648
        %vm2651 = vcmp.lt.s32.totalorder %v2622, %v2648
        %vm2652 = vcmp.lt.s32.totalorder %v2623, %v2648
        %vm2653 = vcmp.lt.s32.totalorder %v2624, %v2648
        %vm2654 = vcmp.lt.s32.totalorder %v2625, %v2648
        %vm2655 = vcmp.lt.s32.totalorder %v2626, %v2648
        %vm2656 = vcmp.lt.s32.totalorder %v2627, %v2648
        %vm2657 = vcmp.lt.s32.totalorder %v2628, %v2648
        %vm2658 = vcmp.lt.s32.totalorder %v2629, %v2648
        %vm2659 = vcmp.lt.s32.totalorder %v2630, %v2648
        %vm2660 = vcmp.lt.s32.totalorder %v2631, %v2648
        %vm2661 = vcmp.lt.s32.totalorder %v2632, %v2648
        %vm2662 = vcmp.lt.s32.totalorder %v2633, %v2648
        %vm2663 = vcmp.lt.s32.totalorder %v2634, %v2648
        %vm2664 = vcmp.lt.s32.totalorder %v2635, %v2648
        %vm2665 = vcmp.lt.s32.totalorder %v2636, %v2648
        %vm2666 = vcmp.lt.s32.totalorder %v2637, %v2648
        %vm2667 = vcmp.lt.s32.totalorder %v2638, %v2648
        %vm2668 = vcmp.lt.s32.totalorder %v2639, %v2648
        %vm2669 = vcmp.lt.s32.totalorder %v2640, %v2648
        %vm2670 = vcmp.lt.s32.totalorder %v2641, %v2648
        %vm2671 = vcmp.lt.s32.totalorder %v2642, %v2648
        %vm2672 = vcmp.lt.s32.totalorder %v2643, %v2648
        %vm2673 = vcmp.lt.s32.totalorder %v2644, %v2648
        %vm2674 = vcmp.lt.s32.totalorder %v2645, %v2648
        %vm2675 = vcmp.lt.s32.totalorder %v2646, %v2648
        %vm2676 = vcmp.lt.s32.totalorder %v2647, %v2648
        %v2677 = vsel %vm2649, %v2564, 0.0
        %v2678 = vsel %vm2650, %v2566, 0.0
        %v2679 = vsel %vm2651, %v2568, 0.0
        %v2680 = vsel %vm2652, %v2570, 0.0
        %v2681 = vsel %vm2653, %v2572, 0.0
        %v2682 = vsel %vm2654, %v2574, 0.0
        %v2683 = vsel %vm2655, %v2576, 0.0
        %v2684 = vsel %vm2656, %v2578, 0.0
        %v2685 = vsel %vm2657, %v2580, 0.0
        %v2686 = vsel %vm2658, %v2582, 0.0
        %v2687 = vsel %vm2659, %v2584, 0.0
        %v2688 = vsel %vm2660, %v2586, 0.0
        %v2689 = vsel %vm2661, %v2588, 0.0
        %v2690 = vsel %vm2662, %v2590, 0.0
        %v2691 = vsel %vm2663, %v2592, 0.0
        %v2692 = vsel %vm2664, %v2594, 0.0
        %v2693 = vsel %vm2665, %v2596, 0.0
        %v2694 = vsel %vm2666, %v2598, 0.0
        %v2695 = vsel %vm2667, %v2600, 0.0
        %v2696 = vsel %vm2668, %v2602, 0.0
        %v2697 = vsel %vm2669, %v2604, 0.0
        %v2698 = vsel %vm2670, %v2606, 0.0
        %v2699 = vsel %vm2671, %v2608, 0.0
        %v2700 = vsel %vm2672, %v2610, 0.0
        %v2701 = vsel %vm2673, %v2612, 0.0
        %v2702 = vsel %vm2674, %v2614, 0.0
        %v2703 = vsel %vm2675, %v2616, 0.0
        %v2704 = vsel %vm2676, %v2618, 0.0
        %vm2705 = vcmask 7168
        %v2706 = vsel %vm2705, %v2677, 0.0
        %v2707 = vsel %vm2705, %v2678, 0.0
        %v2708 = vadd.f32 %v2706, %v2707
        %v2709 = vsel %vm2705, %v2679, 0.0
        %v2710 = vadd.f32 %v2708, %v2709
        %v2711 = vsel %vm2705, %v2680, 0.0
        %v2712 = vadd.f32 %v2710, %v2711
        %v2713 = vsel %vm2705, %v2681, 0.0
        %v2714 = vadd.f32 %v2712, %v2713
        %v2715 = vsel %vm2705, %v2682, 0.0
        %v2716 = vadd.f32 %v2714, %v2715
        %v2717 = vsel %vm2705, %v2683, 0.0
        %v2718 = vadd.f32 %v2716, %v2717
        %v2719 = vsel %vm2705, %v2684, 0.0
        %v2720 = vadd.f32 %v2718, %v2719
        %v2721 = vsel %vm2705, %v2685, 0.0
        %v2722 = vadd.f32 %v2720, %v2721
        %v2723 = vsel %vm2705, %v2686, 0.0
        %v2724 = vadd.f32 %v2722, %v2723
        %v2725 = vsel %vm2705, %v2687, 0.0
        %v2726 = vadd.f32 %v2724, %v2725
        %v2727 = vsel %vm2705, %v2688, 0.0
        %v2728 = vadd.f32 %v2726, %v2727
        %v2729 = vsel %vm2705, %v2689, 0.0
        %v2730 = vadd.f32 %v2728, %v2729
        %v2731 = vsel %vm2705, %v2690, 0.0
        %v2732 = vadd.f32 %v2730, %v2731
        %v2733 = vsel %vm2705, %v2691, 0.0
        %v2734 = vadd.f32 %v2732, %v2733
        %v2735 = vsel %vm2705, %v2692, 0.0
        %v2736 = vadd.f32 %v2734, %v2735
        %v2737 = vsel %vm2705, %v2693, 0.0
        %v2738 = vadd.f32 %v2736, %v2737
        %v2739 = vsel %vm2705, %v2694, 0.0
        %v2740 = vadd.f32 %v2738, %v2739
        %v2741 = vsel %vm2705, %v2695, 0.0
        %v2742 = vadd.f32 %v2740, %v2741
        %v2743 = vsel %vm2705, %v2696, 0.0
        %v2744 = vadd.f32 %v2742, %v2743
        %v2745 = vsel %vm2705, %v2697, 0.0
        %v2746 = vadd.f32 %v2744, %v2745
        %v2747 = vsel %vm2705, %v2698, 0.0
        %v2748 = vadd.f32 %v2746, %v2747
        %v2749 = vsel %vm2705, %v2699, 0.0
        %v2750 = vadd.f32 %v2748, %v2749
        %v2751 = vsel %vm2705, %v2700, 0.0
        %v2752 = vadd.f32 %v2750, %v2751
        %v2753 = vsel %vm2705, %v2701, 0.0
        %v2754 = vadd.f32 %v2752, %v2753
        %v2755 = vsel %vm2705, %v2702, 0.0
        %v2756 = vadd.f32 %v2754, %v2755
        %v2757 = vsel %vm2705, %v2703, 0.0
        %v2758 = vadd.f32 %v2756, %v2757
        %v2759 = vsel %vm2705, %v2704, 0.0
        %v2760 = vadd.f32 %v2758, %v2759
        %2761 = vadd.xlane.f32.xlu0 %v2760
        %v2762 = vpop.xlane.xlu0 %2761
        %v2763 = vrot.slane %v2762, 4
        %v2764 = vadd.f32 %v2762, %v2763
        %v2765 = vrot.slane %v2764, 2
        %v2766 = vadd.f32 %v2764, %v2765
        %v2767 = vrot.slane %v2766, 1
        %v2768 = vadd.f32 %v2766, %v2767
        %s2769 = vtos %v2768
        %s2770 = smul.u32 %s826, 2
        %s2771 = scvt.s32.f32 %s2770
        %v2772 = vld [vmem:[%s806] sm:$0xff]
        %s2773 = ssub.f32 0.0, %s2769
        %v2774 = vstv %s2771
        %v2775 = vrcp.pop %v2774
        %s2776 = vtos %v2775
        %s2777 = smul.f32 %s2773, %s2776
        %v2778 = vstv %s2777
        %v2779 = vadd.f32 %v2772, %v2778
        %2780 = vst [vmem:[%s806] sm:$0xff] %v2779
        %s2781 = sand.u32 %s117, 1
        %s2782 = scalar_lea.sflag [#allocation4], %s2781
        %s2783 = sand.u32 %s117, 1
        %s2784 = smul.addr %s2783, 8
        %s2785 = scalar_lea.vmem [#allocation3], %s2784
        // Predicated region
        $region75: #{tpu_custom_call.1} parent=65 // pred_check
          %p2786 = pneg %p127
        $region76: #{tpu_custom_call.1} parent=65 // pred_check_branch
          %2788 = sbr.rel (%p2786) target = $region78
        $region77: #{tpu_custom_call.1} parent=65 // pred_region
          %s2790 = ssub.s32 128, 128
          %2791 = vsyncadd %s2782, %s2790
          %s2792 = smul.addr %s21, 128
          %s2793 = scalar_lea.hbm %s3, %s2792
          %s2795 = sshll.u32 %s2785, 4
          %s2796 = int_to_ptr.vmem [resolvable:$true] %s2795
          %2798 = dma.vmem_to_hbm [thread:$0]  %s2796, 128, %s2793, %s2782
        $region78: #{tpu_custom_call.1} parent=65 // pred_fallthru
          _
      $region66: #{tpu_custom_call.1} parent=5 // pred_fallthru
        _
      %p2799 = scmp.le.s32.totalorder 2, %s12
      // Predicated region
      $region79: #{tpu_custom_call.1} parent=5 // pred_check
        %p2800 = pneg %p2799
      $region80: #{tpu_custom_call.1} parent=5 // pred_check_branch
        %2802 = sbr.rel (%p2800) target = $region82
      $region81: #{tpu_custom_call.1} parent=5 // pred_region
        %s2803 = ssub.s32 %s12, 2
        // Predicated region
        $region83: #{tpu_custom_call.1} parent=81 // pred_check
          %p2804 = pneg %p133
        $region84: #{tpu_custom_call.1} parent=81 // pred_check_branch
          %2806 = sbr.rel (%p2804) target = $region86
        $region85: #{tpu_custom_call.1} parent=81 // pred_region
          %s2807 = sand.u32 %s118, 1
          %s2808 = scalar_lea.sflag [#allocation4], %s2807
          %s2809 = sand.u32 %s118, 1
          %s2810 = smul.addr %s2809, 8
          %s2811 = scalar_lea.vmem [#allocation3], %s2810
          %2812 = dma.done %s2808, 128
        $region86: #{tpu_custom_call.1} parent=81 // pred_fallthru
          _
      $region82: #{tpu_custom_call.1} parent=5 // pred_fallthru
        _
    $region6: #{tpu_custom_call.1} parent=1 // loop_footer
      %s16 = sadd.s32 1, %s12
    $region7: #{tpu_custom_call.1} parent=1 // loop_footer_branch
      %11 = sbr.rel target = $region3
    $region8: #{tpu_custom_call.1} parent=1 // loop_exit
      _
    %2813 = vsyncpa [#allocation4], 1
    %s2814 = scalar_lea.sflag [#allocation4], 1
    %2815 = vsyncpa %s2814, 1

</llo_original>
